<compile_context>
chip_gen: v7x
topology: tpu7x:2x2x1
jax: 0.10.0
libtpu: 0.0.40
codegen_flags: <defaults>
</compile_context>

<pallas_src>
import functools

import jax
import jax.numpy as jnp
from jax.experimental import pallas as pl
from jax.experimental.pallas import tpu as pltpu

EPS = 1e-5


def _tap_offsets(k, dil):
    """Map (dy, dx) image-space offset -> flat KxK weight column for a dilated dwconv."""
    return {((i - k // 2) * dil, (j - k // 2) * dil): i * k + j
            for i in range(k) for j in range(k)}


def _mixed_op_kernel(C, N, H, W,
                     w_ref, x_ref, yy_ref, xx_ref, invc_ref,
                     s3_dw1, s3_pw1, s3_dw2, s3_pw2,
                     s5_dw1, s5_pw1, s5_dw2, s5_pw2,
                     d3_dw, d3_pw,
                     d5_dw, d5_pw,
                     o_ref):
    P = H * W                 # lanes: one flattened (image, channel) plane
    R = N * C                 # rows:  r = n*C + c  (fills all 8 sublanes at N=2, C=4)
    inv_np = 1.0 / float(N * P)

    x = x_ref[...]            # (R, P) float32
    yy = yy_ref[...]          # (1, P) int32: row-within-image of each lane
    xx = xx_ref[...]          # (1, P) int32: col-within-image of each lane

    # ---- per-offset edge masks, memoized (don't re-derive them at every tap) ----
    mask_cache = {}

    def edge_mask(dy, dx):
        if (dy, dx) in mask_cache:
            return mask_cache[(dy, dx)]
        conds = []
        if dy > 0:
            conds.append(yy < H - dy)
        elif dy < 0:
            conds.append(yy >= -dy)
        if dx > 0:
            conds.append(xx < W - dx)
        elif dx < 0:
            conds.append(xx >= -dx)
        ok = None
        for c in conds:
            ok = c if ok is None else (ok & c)
        mask_cache[(dy, dx)] = ok
        return ok

    def shifted(t, dy, dx, fill):
        """t translated by (dy, dx) inside each HxW plane; out-of-image lanes = fill.

        Each row holds one flattened image plane, so a circular lane roll by
        d = dy*W + dx realizes the translation; wrapped lanes are exactly the
        out-of-image taps and get `fill`.  pltpu.roll uses the numpy convention
        (result[p] == t[(p - shift) % P]), hence shift = (-d) % P reads t[p + d].
        """
        d = dy * W + dx
        r = t if d == 0 else pltpu.roll(t, (-d) % P, axis=1)
        ok = edge_mask(dy, dx)
        return r if ok is None else jnp.where(ok, r, fill)

    def pwconv(t, pw_ref):
        # 1x1 conv over the channels of each image.  pw_ref is the (R, R)
        # block-diagonal expansion kron(I_N, W_1x1); row-broadcast FMAs keep this
        # on the VPU (C=4 is far too small to feed the MXU).
        # TODO(synk): for realistic C (>=16) switch to jnp.dot on the (idle) MXU.
        wp = pw_ref[...]
        acc0 = acc1 = None
        for ri in range(R):
            contrib = t[ri:ri + 1, :] * wp[:, ri:ri + 1]
            if ri % 2 == 0:
                acc0 = contrib if acc0 is None else acc0 + contrib
            else:
                acc1 = contrib if acc1 is None else acc1 + contrib
        return acc0 + acc1

    def bn(t):
        # BatchNorm2d(affine=False), training mode: per-channel batch mean / biased
        # variance over (N, H, W).  Rows r and (r + C) mod R hold the same channel,
        # so folding the N images together is a sublane rotation; one lane reduction
        # then yields the stats already broadcast to every row of that channel.
        # One-pass variance E[x^2] - m^2, clamped at 0.
        tsq = t * t
        tsum, qsum = t, tsq
        for n in range(1, N):
            tsum = tsum + pltpu.roll(t, n * C, axis=0)
            qsum = qsum + pltpu.roll(tsq, n * C, axis=0)
        m = jnp.sum(tsum, axis=1, keepdims=True) * inv_np      # (R, 1)
        e2 = jnp.sum(qsum, axis=1, keepdims=True) * inv_np     # (R, 1)
        var = jnp.maximum(e2 - m * m, 0.0)
        return (t - m) * jax.lax.rsqrt(var + EPS)

    def dwconv(t, dw_ref, k, dil):
        # Depthwise KxK conv (groups=C), stride 1, 'same' zero padding.
        # dw_ref layout: (R, K*K); row r holds the taps of channel r % C.
        wk = dw_ref[...]
        acc = [None, None]     # two accumulators break the k*k-long serial add chain
        for idx, ((dy, dx), col) in enumerate(sorted(_tap_offsets(k, dil).items())):
            contrib = shifted(t, dy, dx, 0.0) * wk[:, col:col + 1]
            s = idx & 1
            acc[s] = contrib if acc[s] is None else acc[s] + contrib
        return acc[0] + acc[1]

    # ---- ops 1 / 2: max_pool_3x3 and avg_pool_3x3 (stride 1, pad 1) + BN -------
    # Both pools share one lane roll of x per offset (fills differ: -inf vs 0).
    mp = x
    ap = x
    for dy in (-1, 0, 1):
        for dx in (-1, 0, 1):
            if dy == 0 and dx == 0:
                continue
            d = dy * W + dx
            r = pltpu.roll(x, (-d) % P, axis=1)
            ok = edge_mask(dy, dx)
            mp = jnp.maximum(mp, jnp.where(ok, r, -jnp.inf))
            ap = ap + jnp.where(ok, r, 0.0)

    # Weighted MixedOp sum kept in registers; single store to o_ref at the end.
    # op 0 'none' (Zero) contributes exactly 0 and is skipped -- differs from
    # PyTorch's x*0 only for non-finite inputs.
    acc_out = w_ref[1] * bn(mp)
    acc_out = acc_out + w_ref[2] * bn(ap * invc_ref[...])
    acc_out = acc_out + w_ref[3] * x                  # op 3: skip_connect (Identity)

    # ---- first depthwise stage of all four conv ops, sharing taps --------------
    # sep3.dw1 / sep5.dw1 / dil3.dw / dil5.dw all act on relu(x); the 3x3 taps are
    # a subset of the 5x5 taps and dil3's offsets a subset of dil5's, so each of
    # the 41 distinct (dy, dx) offsets (vs 68 call sites) is rolled + masked once
    # and feeds every accumulator that needs it.
    relu_x = jnp.maximum(x, 0.0)

    stage1 = [
        (s3_dw1[...], _tap_offsets(3, 1)),   # sep_conv_3x3 dwconv #1
        (s5_dw1[...], _tap_offsets(5, 1)),   # sep_conv_5x5 dwconv #1
        (d3_dw[...], _tap_offsets(3, 2)),    # dil_conv_3x3 (dilation 2)
        (d5_dw[...], _tap_offsets(5, 2)),    # dil_conv_5x5 (dilation 2)
    ]
    all_offsets = sorted(set().union(*(set(tm) for _, tm in stage1)))
    accs = [[None, None] for _ in stage1]
    for idx, (dy, dx) in enumerate(all_offsets):
        tap = shifted(relu_x, dy, dx, 0.0)
        s = idx & 1
        for op_i, (wk, tm) in enumerate(stage1):
            if (dy, dx) in tm:
                col = tm[(dy, dx)]
                contrib = tap * wk[:, col:col + 1]
                a = accs[op_i]
                a[s] = contrib if a[s] is None else a[s] + contrib

    def _merge(a):
        if a[0] is None:
            return a[1]
        if a[1] is None:
            return a[0]
        return a[0] + a[1]

    s3_t, s5_t, d3_t, d5_t = (_merge(a) for a in accs)

    # Drop stage-1 masks so they do not stay live across the branch tails
    # (the second-stage dwconvs recompute the few they need -- trivially cheap).
    mask_cache.clear()

    # ---- ops 4 / 5: sep_conv_3x3 / sep_conv_5x5 --------------------------------
    # ReLU -> dwconv -> 1x1 -> BN -> ReLU -> dwconv -> 1x1 -> BN
    t3 = jnp.maximum(bn(pwconv(s3_t, s3_pw1)), 0.0)
    acc_out = acc_out + w_ref[4] * bn(pwconv(dwconv(t3, s3_dw2, 3, 1), s3_pw2))

    t5 = jnp.maximum(bn(pwconv(s5_t, s5_pw1)), 0.0)
    acc_out = acc_out + w_ref[5] * bn(pwconv(dwconv(t5, s5_dw2, 5, 1), s5_pw2))

    # ---- ops 6 / 7: dil_conv_3x3 / dil_conv_5x5 --------------------------------
    # ReLU -> dilated dwconv (dilation 2) -> 1x1 -> BN
    acc_out = acc_out + w_ref[6] * bn(pwconv(d3_t, d3_pw))
    acc_out = acc_out + w_ref[7] * bn(pwconv(d5_t, d5_pw))

    o_ref[...] = acc_out


def mixed_op(x_nchw, weights, params, stride=1):
    """MixedOp forward.  x_nchw: (N, C, H, W) f32; weights: (8,) f32 (softmaxed alphas)."""
    assert stride == 1, "only stride=1 implemented"
    N, C, H, W = x_nchw.shape
    P = H * W
    R = N * C

    # (N, C, H, W) -> (N*C, H*W): rows r = n*C + c fill the 8 sublanes (N=2, C=4);
    # the lane axis is one flattened image plane (P = 256, a multiple of 128).
    x2d = x_nchw.astype(jnp.float32).reshape(R, P)

    # Per-lane image coordinates for the roll edge masks.
    pidx = jnp.arange(P, dtype=jnp.int32)
    yy = (pidx // W).reshape(1, P)
    xx = (pidx % W).reshape(1, P)

    # Reciprocal valid-neighbour count for avg_pool_3x3 (count_include_pad=False):
    # multiply in-kernel instead of dividing.
    hh = jnp.arange(H)
    ww = jnp.arange(W)
    ch = jnp.minimum(hh + 1, H - 1) - jnp.maximum(hh - 1, 0) + 1
    cw = jnp.minimum(ww + 1, W - 1) - jnp.maximum(ww - 1, 0) + 1
    inv_cnt = (1.0 / (ch[:, None] * cw[None, :]).astype(jnp.float32)).reshape(1, P)

    # Expand the PyTorch-layout weights for the (N*C, P) row layout:
    #   depthwise (C, K*K) -> (N*C, K*K)   (tiled over the N images)
    #   pointwise (C, C)   -> (N*C, N*C)   (block-diagonal kron(I_N, W))
    eye_n = jnp.eye(N, dtype=jnp.float32)
    exp_params = []
    for i, prm in enumerate(params):
        prm = prm.astype(jnp.float32)
        if i % 2 == 1:                       # pointwise 1x1 weights
            exp_params.append(jnp.kron(eye_n, prm))
        else:                                # depthwise KxK weights
            exp_params.append(jnp.tile(prm, (N, 1)))

    kernel = functools.partial(_mixed_op_kernel, C, N, H, W)
    vmem = pl.BlockSpec(memory_space=pltpu.MemorySpace.VMEM)
    smem = pl.BlockSpec(memory_space=pltpu.MemorySpace.SMEM)

    # Single block: at this size the whole problem is a handful of vregs.
    # TODO(synk): for realistic DARTS sizes add a grid over N (whole images per
    #             block, dimension_semantics=("parallel",) to use v7x's 2nd core),
    #             a two-pass BN across blocks, bf16 intermediates on v6e/v7x once
    #             C fills 16 sublanes, and an explicit vmem_limit_bytes sized for
    #             the 64 MiB v7x VMEM; keep f32 + minimal stores on v5e.
    out2d = pl.pallas_call(
        kernel,
        out_shape=jax.ShapeDtypeStruct((R, P), jnp.float32),
        in_specs=[smem] + [vmem] * (4 + len(exp_params)),
        out_specs=vmem,
    )(weights.astype(jnp.float32), x2d, yy, xx, inv_cnt, *exp_params)

    return out2d.reshape(N, C, H, W)


def init_params(key, C):
    """Deterministic synthetic parameters (shapes map to the PyTorch module).

    Depthwise weights: (C, K*K) -- PyTorch (C, 1, K, K) with the KxK taps flattened.
    Pointwise weights: (C_out, C_in) -- PyTorch (C_out, C_in, 1, 1) squeezed.
    """
    keys = jax.random.split(key, 12)

    def dw(k, ksize):
        bound = 1.0 / float(ksize * ksize) ** 0.5
        return jax.random.uniform(k, (C, ksize * ksize), jnp.float32, -bound, bound)

    def pw(k):
        bound = 1.0 / float(C) ** 0.5
        return jax.random.uniform(k, (C, C), jnp.float32, -bound, bound)

    return [
        dw(keys[0], 3), pw(keys[1]), dw(keys[2], 3), pw(keys[3]),    # sep_conv_3x3
        dw(keys[4], 5), pw(keys[5]), dw(keys[6], 5), pw(keys[7]),    # sep_conv_5x5
        dw(keys[8], 3), pw(keys[9]),                                 # dil_conv_3x3
        dw(keys[10], 5), pw(keys[11]),                               # dil_conv_5x5
    ]


if __name__ == "__main__":
    N, C, H, W = 2, 4, 16, 16
    key = jax.random.PRNGKey(0)
    k_x, k_a, k_p = jax.random.split(key, 3)

    x = jax.random.normal(k_x, (N, C, H, W), jnp.float32)
    alphas = jax.random.normal(k_a, (8,), jnp.float32)
    weights = jax.nn.softmax(alphas)  # architecture weights, shape (8,)
    params = init_params(k_p, C)

    out = mixed_op(x, weights, params, stride=1)
    out = jax.block_until_ready(out)
    assert out.shape == (N, C, H, W)
    assert bool(jnp.all(jnp.isfinite(out)))
    print("KERNEL_OK")
</pallas_src>

<mosaic_0001>
module attributes {stable_mosaic.version = 11 : i64} {
  func.func @_mixed_op_kernel(%arg0: memref<8xf32, #tpu.memory_space<smem>>, %arg1: memref<8x256xf32, #tpu.memory_space<vmem>>, %arg2: memref<1x256xi32, #tpu.memory_space<vmem>>, %arg3: memref<1x256xi32, #tpu.memory_space<vmem>>, %arg4: memref<1x256xf32, #tpu.memory_space<vmem>>, %arg5: memref<8x9xf32, #tpu.memory_space<vmem>>, %arg6: memref<8x8xf32, #tpu.memory_space<vmem>>, %arg7: memref<8x9xf32, #tpu.memory_space<vmem>>, %arg8: memref<8x8xf32, #tpu.memory_space<vmem>>, %arg9: memref<8x25xf32, #tpu.memory_space<vmem>>, %arg10: memref<8x8xf32, #tpu.memory_space<vmem>>, %arg11: memref<8x25xf32, #tpu.memory_space<vmem>>, %arg12: memref<8x8xf32, #tpu.memory_space<vmem>>, %arg13: memref<8x9xf32, #tpu.memory_space<vmem>>, %arg14: memref<8x8xf32, #tpu.memory_space<vmem>>, %arg15: memref<8x25xf32, #tpu.memory_space<vmem>>, %arg16: memref<8x8xf32, #tpu.memory_space<vmem>>, %arg17: memref<8x256xf32, #tpu.memory_space<vmem>>) attributes {dimension_semantics = [], scalar_prefetch = 0 : i64, scratch_operands = 0 : i64, tpu.core_type = #tpu.core_type<tc>} {
    %c0 = arith.constant 0 : index
    %c0_0 = arith.constant 0 : index
    %0 = vector.load %arg1[%c0, %c0_0] : memref<8x256xf32, #tpu.memory_space<vmem>>, vector<8x256xf32>
    %c0_1 = arith.constant 0 : index
    %c0_2 = arith.constant 0 : index
    %1 = vector.load %arg2[%c0_1, %c0_2] : memref<1x256xi32, #tpu.memory_space<vmem>>, vector<1x256xi32>
    %c0_3 = arith.constant 0 : index
    %c0_4 = arith.constant 0 : index
    %2 = vector.load %arg3[%c0_3, %c0_4] : memref<1x256xi32, #tpu.memory_space<vmem>>, vector<1x256xi32>
    %c17_i32 = arith.constant 17 : i32
    %3 = tpu.dynamic_rotate %0 by %c17_i32 dim 1 : vector<8x256xf32>, i32 -> vector<8x256xf32>
    %c1_i32 = arith.constant 1 : i32
    %4 = vector.broadcast %c1_i32 : i32 to vector<1x256xi32>
    %5 = arith.cmpi sge, %1, %4 : vector<1x256xi32>
    %c1_i32_5 = arith.constant 1 : i32
    %6 = vector.broadcast %c1_i32_5 : i32 to vector<1x256xi32>
    %7 = arith.cmpi sge, %2, %6 : vector<1x256xi32>
    %8 = arith.andi %5, %7 : vector<1x256xi1>
    %cst = arith.constant 0xFF800000 : f32
    %9 = vector.shape_cast %8 : vector<1x256xi1> to vector<1x256xi1>
    %10 = vector.broadcast %9 : vector<1x256xi1> to vector<8x256xi1>
    %11 = vector.broadcast %cst : f32 to vector<8x256xf32>
    %12 = arith.select %10, %3, %11 : vector<8x256xi1>, vector<8x256xf32>
    %13 = arith.maximumf %0, %12 : vector<8x256xf32>
    %cst_6 = arith.constant 0.000000e+00 : f32
    %14 = vector.shape_cast %8 : vector<1x256xi1> to vector<1x256xi1>
    %15 = vector.broadcast %14 : vector<1x256xi1> to vector<8x256xi1>
    %16 = vector.broadcast %cst_6 : f32 to vector<8x256xf32>
    %17 = arith.select %15, %3, %16 : vector<8x256xi1>, vector<8x256xf32>
    %18 = arith.addf %0, %17 : vector<8x256xf32>
    %c16_i32 = arith.constant 16 : i32
    %19 = tpu.dynamic_rotate %0 by %c16_i32 dim 1 : vector<8x256xf32>, i32 -> vector<8x256xf32>
    %c1_i32_7 = arith.constant 1 : i32
    %20 = vector.broadcast %c1_i32_7 : i32 to vector<1x256xi32>
    %21 = arith.cmpi sge, %1, %20 : vector<1x256xi32>
    %cst_8 = arith.constant 0xFF800000 : f32
    %22 = vector.shape_cast %21 : vector<1x256xi1> to vector<1x256xi1>
    %23 = vector.broadcast %22 : vector<1x256xi1> to vector<8x256xi1>
    %24 = vector.broadcast %cst_8 : f32 to vector<8x256xf32>
    %25 = arith.select %23, %19, %24 : vector<8x256xi1>, vector<8x256xf32>
    %26 = arith.maximumf %13, %25 : vector<8x256xf32>
    %cst_9 = arith.constant 0.000000e+00 : f32
    %27 = vector.shape_cast %21 : vector<1x256xi1> to vector<1x256xi1>
    %28 = vector.broadcast %27 : vector<1x256xi1> to vector<8x256xi1>
    %29 = vector.broadcast %cst_9 : f32 to vector<8x256xf32>
    %30 = arith.select %28, %19, %29 : vector<8x256xi1>, vector<8x256xf32>
    %31 = arith.addf %18, %30 : vector<8x256xf32>
    %c15_i32 = arith.constant 15 : i32
    %32 = tpu.dynamic_rotate %0 by %c15_i32 dim 1 : vector<8x256xf32>, i32 -> vector<8x256xf32>
    %c1_i32_10 = arith.constant 1 : i32
    %33 = vector.broadcast %c1_i32_10 : i32 to vector<1x256xi32>
    %34 = arith.cmpi sge, %1, %33 : vector<1x256xi32>
    %c15_i32_11 = arith.constant 15 : i32
    %35 = vector.broadcast %c15_i32_11 : i32 to vector<1x256xi32>
    %36 = arith.cmpi slt, %2, %35 : vector<1x256xi32>
    %37 = arith.andi %34, %36 : vector<1x256xi1>
    %cst_12 = arith.constant 0xFF800000 : f32
    %38 = vector.shape_cast %37 : vector<1x256xi1> to vector<1x256xi1>
    %39 = vector.broadcast %38 : vector<1x256xi1> to vector<8x256xi1>
    %40 = vector.broadcast %cst_12 : f32 to vector<8x256xf32>
    %41 = arith.select %39, %32, %40 : vector<8x256xi1>, vector<8x256xf32>
    %42 = arith.maximumf %26, %41 : vector<8x256xf32>
    %cst_13 = arith.constant 0.000000e+00 : f32
    %43 = vector.shape_cast %37 : vector<1x256xi1> to vector<1x256xi1>
    %44 = vector.broadcast %43 : vector<1x256xi1> to vector<8x256xi1>
    %45 = vector.broadcast %cst_13 : f32 to vector<8x256xf32>
    %46 = arith.select %44, %32, %45 : vector<8x256xi1>, vector<8x256xf32>
    %47 = arith.addf %31, %46 : vector<8x256xf32>
    %c1_i32_14 = arith.constant 1 : i32
    %48 = tpu.dynamic_rotate %0 by %c1_i32_14 dim 1 : vector<8x256xf32>, i32 -> vector<8x256xf32>
    %c1_i32_15 = arith.constant 1 : i32
    %49 = vector.broadcast %c1_i32_15 : i32 to vector<1x256xi32>
    %50 = arith.cmpi sge, %2, %49 : vector<1x256xi32>
    %cst_16 = arith.constant 0xFF800000 : f32
    %51 = vector.shape_cast %50 : vector<1x256xi1> to vector<1x256xi1>
    %52 = vector.broadcast %51 : vector<1x256xi1> to vector<8x256xi1>
    %53 = vector.broadcast %cst_16 : f32 to vector<8x256xf32>
    %54 = arith.select %52, %48, %53 : vector<8x256xi1>, vector<8x256xf32>
    %55 = arith.maximumf %42, %54 : vector<8x256xf32>
    %cst_17 = arith.constant 0.000000e+00 : f32
    %56 = vector.shape_cast %50 : vector<1x256xi1> to vector<1x256xi1>
    %57 = vector.broadcast %56 : vector<1x256xi1> to vector<8x256xi1>
    %58 = vector.broadcast %cst_17 : f32 to vector<8x256xf32>
    %59 = arith.select %57, %48, %58 : vector<8x256xi1>, vector<8x256xf32>
    %60 = arith.addf %47, %59 : vector<8x256xf32>
    %c255_i32 = arith.constant 255 : i32
    %61 = tpu.dynamic_rotate %0 by %c255_i32 dim 1 : vector<8x256xf32>, i32 -> vector<8x256xf32>
    %c15_i32_18 = arith.constant 15 : i32
    %62 = vector.broadcast %c15_i32_18 : i32 to vector<1x256xi32>
    %63 = arith.cmpi slt, %2, %62 : vector<1x256xi32>
    %cst_19 = arith.constant 0xFF800000 : f32
    %64 = vector.shape_cast %63 : vector<1x256xi1> to vector<1x256xi1>
    %65 = vector.broadcast %64 : vector<1x256xi1> to vector<8x256xi1>
    %66 = vector.broadcast %cst_19 : f32 to vector<8x256xf32>
    %67 = arith.select %65, %61, %66 : vector<8x256xi1>, vector<8x256xf32>
    %68 = arith.maximumf %55, %67 : vector<8x256xf32>
    %cst_20 = arith.constant 0.000000e+00 : f32
    %69 = vector.shape_cast %63 : vector<1x256xi1> to vector<1x256xi1>
    %70 = vector.broadcast %69 : vector<1x256xi1> to vector<8x256xi1>
    %71 = vector.broadcast %cst_20 : f32 to vector<8x256xf32>
    %72 = arith.select %70, %61, %71 : vector<8x256xi1>, vector<8x256xf32>
    %73 = arith.addf %60, %72 : vector<8x256xf32>
    %c241_i32 = arith.constant 241 : i32
    %74 = tpu.dynamic_rotate %0 by %c241_i32 dim 1 : vector<8x256xf32>, i32 -> vector<8x256xf32>
    %c15_i32_21 = arith.constant 15 : i32
    %75 = vector.broadcast %c15_i32_21 : i32 to vector<1x256xi32>
    %76 = arith.cmpi slt, %1, %75 : vector<1x256xi32>
    %c1_i32_22 = arith.constant 1 : i32
    %77 = vector.broadcast %c1_i32_22 : i32 to vector<1x256xi32>
    %78 = arith.cmpi sge, %2, %77 : vector<1x256xi32>
    %79 = arith.andi %76, %78 : vector<1x256xi1>
    %cst_23 = arith.constant 0xFF800000 : f32
    %80 = vector.shape_cast %79 : vector<1x256xi1> to vector<1x256xi1>
    %81 = vector.broadcast %80 : vector<1x256xi1> to vector<8x256xi1>
    %82 = vector.broadcast %cst_23 : f32 to vector<8x256xf32>
    %83 = arith.select %81, %74, %82 : vector<8x256xi1>, vector<8x256xf32>
    %84 = arith.maximumf %68, %83 : vector<8x256xf32>
    %cst_24 = arith.constant 0.000000e+00 : f32
    %85 = vector.shape_cast %79 : vector<1x256xi1> to vector<1x256xi1>
    %86 = vector.broadcast %85 : vector<1x256xi1> to vector<8x256xi1>
    %87 = vector.broadcast %cst_24 : f32 to vector<8x256xf32>
    %88 = arith.select %86, %74, %87 : vector<8x256xi1>, vector<8x256xf32>
    %89 = arith.addf %73, %88 : vector<8x256xf32>
    %c240_i32 = arith.constant 240 : i32
    %90 = tpu.dynamic_rotate %0 by %c240_i32 dim 1 : vector<8x256xf32>, i32 -> vector<8x256xf32>
    %c15_i32_25 = arith.constant 15 : i32
    %91 = vector.broadcast %c15_i32_25 : i32 to vector<1x256xi32>
    %92 = arith.cmpi slt, %1, %91 : vector<1x256xi32>
    %cst_26 = arith.constant 0xFF800000 : f32
    %93 = vector.shape_cast %92 : vector<1x256xi1> to vector<1x256xi1>
    %94 = vector.broadcast %93 : vector<1x256xi1> to vector<8x256xi1>
    %95 = vector.broadcast %cst_26 : f32 to vector<8x256xf32>
    %96 = arith.select %94, %90, %95 : vector<8x256xi1>, vector<8x256xf32>
    %97 = arith.maximumf %84, %96 : vector<8x256xf32>
    %cst_27 = arith.constant 0.000000e+00 : f32
    %98 = vector.shape_cast %92 : vector<1x256xi1> to vector<1x256xi1>
    %99 = vector.broadcast %98 : vector<1x256xi1> to vector<8x256xi1>
    %100 = vector.broadcast %cst_27 : f32 to vector<8x256xf32>
    %101 = arith.select %99, %90, %100 : vector<8x256xi1>, vector<8x256xf32>
    %102 = arith.addf %89, %101 : vector<8x256xf32>
    %c239_i32 = arith.constant 239 : i32
    %103 = tpu.dynamic_rotate %0 by %c239_i32 dim 1 : vector<8x256xf32>, i32 -> vector<8x256xf32>
    %c15_i32_28 = arith.constant 15 : i32
    %104 = vector.broadcast %c15_i32_28 : i32 to vector<1x256xi32>
    %105 = arith.cmpi slt, %1, %104 : vector<1x256xi32>
    %c15_i32_29 = arith.constant 15 : i32
    %106 = vector.broadcast %c15_i32_29 : i32 to vector<1x256xi32>
    %107 = arith.cmpi slt, %2, %106 : vector<1x256xi32>
    %108 = arith.andi %105, %107 : vector<1x256xi1>
    %cst_30 = arith.constant 0xFF800000 : f32
    %109 = vector.shape_cast %108 : vector<1x256xi1> to vector<1x256xi1>
    %110 = vector.broadcast %109 : vector<1x256xi1> to vector<8x256xi1>
    %111 = vector.broadcast %cst_30 : f32 to vector<8x256xf32>
    %112 = arith.select %110, %103, %111 : vector<8x256xi1>, vector<8x256xf32>
    %113 = arith.maximumf %97, %112 : vector<8x256xf32>
    %cst_31 = arith.constant 0.000000e+00 : f32
    %114 = vector.shape_cast %108 : vector<1x256xi1> to vector<1x256xi1>
    %115 = vector.broadcast %114 : vector<1x256xi1> to vector<8x256xi1>
    %116 = vector.broadcast %cst_31 : f32 to vector<8x256xf32>
    %117 = arith.select %115, %103, %116 : vector<8x256xi1>, vector<8x256xf32>
    %118 = arith.addf %102, %117 : vector<8x256xf32>
    %c1 = arith.constant 1 : index
    %119 = memref.load %arg0[%c1] : memref<8xf32, #tpu.memory_space<smem>>
    %120 = arith.mulf %113, %113 : vector<8x256xf32>
    %c4_i32 = arith.constant 4 : i32
    %121 = tpu.dynamic_rotate %113 by %c4_i32 dim 0 : vector<8x256xf32>, i32 -> vector<8x256xf32>
    %122 = arith.addf %113, %121 : vector<8x256xf32>
    %c4_i32_32 = arith.constant 4 : i32
    %123 = tpu.dynamic_rotate %120 by %c4_i32_32 dim 0 : vector<8x256xf32>, i32 -> vector<8x256xf32>
    %124 = arith.addf %120, %123 : vector<8x256xf32>
    %cst_33 = arith.constant dense<0.000000e+00> : vector<8xf32>
    %125 = vector.multi_reduction <add>, %122, %cst_33 [1] : vector<8x256xf32> to vector<8xf32>
    %126 = vector.shape_cast %125 : vector<8xf32> to vector<8x1xf32>
    %cst_34 = arith.constant 0.001953125 : f32
    %127 = vector.broadcast %cst_34 : f32 to vector<8x1xf32>
    %128 = arith.mulf %126, %127 : vector<8x1xf32>
    %cst_35 = arith.constant dense<0.000000e+00> : vector<8xf32>
    %129 = vector.multi_reduction <add>, %124, %cst_35 [1] : vector<8x256xf32> to vector<8xf32>
    %130 = vector.shape_cast %129 : vector<8xf32> to vector<8x1xf32>
    %cst_36 = arith.constant 0.001953125 : f32
    %131 = vector.broadcast %cst_36 : f32 to vector<8x1xf32>
    %132 = arith.mulf %130, %131 : vector<8x1xf32>
    %133 = arith.mulf %128, %128 : vector<8x1xf32>
    %134 = arith.subf %132, %133 : vector<8x1xf32>
    %cst_37 = arith.constant 0.000000e+00 : f32
    %135 = vector.broadcast %cst_37 : f32 to vector<8x1xf32>
    %136 = arith.maximumf %134, %135 : vector<8x1xf32>
    %137 = vector.broadcast %128 : vector<8x1xf32> to vector<8x256xf32>
    %138 = arith.subf %113, %137 : vector<8x256xf32>
    %cst_38 = arith.constant 9.99999974E-6 : f32
    %139 = vector.broadcast %cst_38 : f32 to vector<8x1xf32>
    %140 = arith.addf %136, %139 : vector<8x1xf32>
    %141 = math.rsqrt %140 : vector<8x1xf32>
    %142 = vector.broadcast %141 : vector<8x1xf32> to vector<8x256xf32>
    %143 = arith.mulf %138, %142 : vector<8x256xf32>
    %144 = vector.broadcast %119 : f32 to vector<8x256xf32>
    %145 = arith.mulf %144, %143 : vector<8x256xf32>
    %c2 = arith.constant 2 : index
    %146 = memref.load %arg0[%c2] : memref<8xf32, #tpu.memory_space<smem>>
    %c0_39 = arith.constant 0 : index
    %c0_40 = arith.constant 0 : index
    %147 = vector.load %arg4[%c0_39, %c0_40] : memref<1x256xf32, #tpu.memory_space<vmem>>, vector<1x256xf32>
    %148 = vector.broadcast %147 : vector<1x256xf32> to vector<8x256xf32>
    %149 = arith.mulf %118, %148 : vector<8x256xf32>
    %150 = arith.mulf %149, %149 : vector<8x256xf32>
    %c4_i32_41 = arith.constant 4 : i32
    %151 = tpu.dynamic_rotate %149 by %c4_i32_41 dim 0 : vector<8x256xf32>, i32 -> vector<8x256xf32>
    %152 = arith.addf %149, %151 : vector<8x256xf32>
    %c4_i32_42 = arith.constant 4 : i32
    %153 = tpu.dynamic_rotate %150 by %c4_i32_42 dim 0 : vector<8x256xf32>, i32 -> vector<8x256xf32>
    %154 = arith.addf %150, %153 : vector<8x256xf32>
    %cst_43 = arith.constant dense<0.000000e+00> : vector<8xf32>
    %155 = vector.multi_reduction <add>, %152, %cst_43 [1] : vector<8x256xf32> to vector<8xf32>
    %156 = vector.shape_cast %155 : vector<8xf32> to vector<8x1xf32>
    %cst_44 = arith.constant 0.001953125 : f32
    %157 = vector.broadcast %cst_44 : f32 to vector<8x1xf32>
    %158 = arith.mulf %156, %157 : vector<8x1xf32>
    %cst_45 = arith.constant dense<0.000000e+00> : vector<8xf32>
    %159 = vector.multi_reduction <add>, %154, %cst_45 [1] : vector<8x256xf32> to vector<8xf32>
    %160 = vector.shape_cast %159 : vector<8xf32> to vector<8x1xf32>
    %cst_46 = arith.constant 0.001953125 : f32
    %161 = vector.broadcast %cst_46 : f32 to vector<8x1xf32>
    %162 = arith.mulf %160, %161 : vector<8x1xf32>
    %163 = arith.mulf %158, %158 : vector<8x1xf32>
    %164 = arith.subf %162, %163 : vector<8x1xf32>
    %cst_47 = arith.constant 0.000000e+00 : f32
    %165 = vector.broadcast %cst_47 : f32 to vector<8x1xf32>
    %166 = arith.maximumf %164, %165 : vector<8x1xf32>
    %167 = vector.broadcast %158 : vector<8x1xf32> to vector<8x256xf32>
    %168 = arith.subf %149, %167 : vector<8x256xf32>
    %cst_48 = arith.constant 9.99999974E-6 : f32
    %169 = vector.broadcast %cst_48 : f32 to vector<8x1xf32>
    %170 = arith.addf %166, %169 : vector<8x1xf32>
    %171 = math.rsqrt %170 : vector<8x1xf32>
    %172 = vector.broadcast %171 : vector<8x1xf32> to vector<8x256xf32>
    %173 = arith.mulf %168, %172 : vector<8x256xf32>
    %174 = vector.broadcast %146 : f32 to vector<8x256xf32>
    %175 = arith.mulf %174, %173 : vector<8x256xf32>
    %176 = arith.addf %145, %175 : vector<8x256xf32>
    %c3 = arith.constant 3 : index
    %177 = memref.load %arg0[%c3] : memref<8xf32, #tpu.memory_space<smem>>
    %178 = vector.broadcast %177 : f32 to vector<8x256xf32>
    %179 = arith.mulf %178, %0 : vector<8x256xf32>
    %180 = arith.addf %176, %179 : vector<8x256xf32>
    %cst_49 = arith.constant 0.000000e+00 : f32
    %181 = vector.broadcast %cst_49 : f32 to vector<8x256xf32>
    %182 = arith.maximumf %0, %181 : vector<8x256xf32>
    %c0_50 = arith.constant 0 : index
    %c0_51 = arith.constant 0 : index
    %183 = vector.load %arg5[%c0_50, %c0_51] : memref<8x9xf32, #tpu.memory_space<vmem>>, vector<8x9xf32>
    %c0_52 = arith.constant 0 : index
    %c0_53 = arith.constant 0 : index
    %184 = vector.load %arg9[%c0_52, %c0_53] : memref<8x25xf32, #tpu.memory_space<vmem>>, vector<8x25xf32>
    %c0_54 = arith.constant 0 : index
    %c0_55 = arith.constant 0 : index
    %185 = vector.load %arg13[%c0_54, %c0_55] : memref<8x9xf32, #tpu.memory_space<vmem>>, vector<8x9xf32>
    %c0_56 = arith.constant 0 : index
    %c0_57 = arith.constant 0 : index
    %186 = vector.load %arg15[%c0_56, %c0_57] : memref<8x25xf32, #tpu.memory_space<vmem>>, vector<8x25xf32>
    %c68_i32 = arith.constant 68 : i32
    %187 = tpu.dynamic_rotate %182 by %c68_i32 dim 1 : vector<8x256xf32>, i32 -> vector<8x256xf32>
    %c4_i32_58 = arith.constant 4 : i32
    %188 = vector.broadcast %c4_i32_58 : i32 to vector<1x256xi32>
    %189 = arith.cmpi sge, %1, %188 : vector<1x256xi32>
    %c4_i32_59 = arith.constant 4 : i32
    %190 = vector.broadcast %c4_i32_59 : i32 to vector<1x256xi32>
    %191 = arith.cmpi sge, %2, %190 : vector<1x256xi32>
    %192 = arith.andi %189, %191 : vector<1x256xi1>
    %cst_60 = arith.constant 0.000000e+00 : f32
    %193 = vector.shape_cast %192 : vector<1x256xi1> to vector<1x256xi1>
    %194 = vector.broadcast %193 : vector<1x256xi1> to vector<8x256xi1>
    %195 = vector.broadcast %cst_60 : f32 to vector<8x256xf32>
    %196 = arith.select %194, %187, %195 : vector<8x256xi1>, vector<8x256xf32>
    %197 = vector.extract_strided_slice %186 {offsets = [0, 0], sizes = [8, 1], strides = [1, 1]} : vector<8x25xf32> to vector<8x1xf32>
    %198 = vector.broadcast %197 : vector<8x1xf32> to vector<8x256xf32>
    %199 = arith.mulf %196, %198 : vector<8x256xf32>
    %c66_i32 = arith.constant 66 : i32
    %200 = tpu.dynamic_rotate %182 by %c66_i32 dim 1 : vector<8x256xf32>, i32 -> vector<8x256xf32>
    %c4_i32_61 = arith.constant 4 : i32
    %201 = vector.broadcast %c4_i32_61 : i32 to vector<1x256xi32>
    %202 = arith.cmpi sge, %1, %201 : vector<1x256xi32>
    %c2_i32 = arith.constant 2 : i32
    %203 = vector.broadcast %c2_i32 : i32 to vector<1x256xi32>
    %204 = arith.cmpi sge, %2, %203 : vector<1x256xi32>
    %205 = arith.andi %202, %204 : vector<1x256xi1>
    %cst_62 = arith.constant 0.000000e+00 : f32
    %206 = vector.shape_cast %205 : vector<1x256xi1> to vector<1x256xi1>
    %207 = vector.broadcast %206 : vector<1x256xi1> to vector<8x256xi1>
    %208 = vector.broadcast %cst_62 : f32 to vector<8x256xf32>
    %209 = arith.select %207, %200, %208 : vector<8x256xi1>, vector<8x256xf32>
    %210 = vector.extract_strided_slice %186 {offsets = [0, 1], sizes = [8, 1], strides = [1, 1]} : vector<8x25xf32> to vector<8x1xf32>
    %211 = vector.broadcast %210 : vector<8x1xf32> to vector<8x256xf32>
    %212 = arith.mulf %209, %211 : vector<8x256xf32>
    %c64_i32 = arith.constant 64 : i32
    %213 = tpu.dynamic_rotate %182 by %c64_i32 dim 1 : vector<8x256xf32>, i32 -> vector<8x256xf32>
    %c4_i32_63 = arith.constant 4 : i32
    %214 = vector.broadcast %c4_i32_63 : i32 to vector<1x256xi32>
    %215 = arith.cmpi sge, %1, %214 : vector<1x256xi32>
    %cst_64 = arith.constant 0.000000e+00 : f32
    %216 = vector.shape_cast %215 : vector<1x256xi1> to vector<1x256xi1>
    %217 = vector.broadcast %216 : vector<1x256xi1> to vector<8x256xi1>
    %218 = vector.broadcast %cst_64 : f32 to vector<8x256xf32>
    %219 = arith.select %217, %213, %218 : vector<8x256xi1>, vector<8x256xf32>
    %220 = vector.extract_strided_slice %186 {offsets = [0, 2], sizes = [8, 1], strides = [1, 1]} : vector<8x25xf32> to vector<8x1xf32>
    %221 = vector.broadcast %220 : vector<8x1xf32> to vector<8x256xf32>
    %222 = arith.mulf %219, %221 : vector<8x256xf32>
    %223 = arith.addf %199, %222 : vector<8x256xf32>
    %c62_i32 = arith.constant 62 : i32
    %224 = tpu.dynamic_rotate %182 by %c62_i32 dim 1 : vector<8x256xf32>, i32 -> vector<8x256xf32>
    %c4_i32_65 = arith.constant 4 : i32
    %225 = vector.broadcast %c4_i32_65 : i32 to vector<1x256xi32>
    %226 = arith.cmpi sge, %1, %225 : vector<1x256xi32>
    %c14_i32 = arith.constant 14 : i32
    %227 = vector.broadcast %c14_i32 : i32 to vector<1x256xi32>
    %228 = arith.cmpi slt, %2, %227 : vector<1x256xi32>
    %229 = arith.andi %226, %228 : vector<1x256xi1>
    %cst_66 = arith.constant 0.000000e+00 : f32
    %230 = vector.shape_cast %229 : vector<1x256xi1> to vector<1x256xi1>
    %231 = vector.broadcast %230 : vector<1x256xi1> to vector<8x256xi1>
    %232 = vector.broadcast %cst_66 : f32 to vector<8x256xf32>
    %233 = arith.select %231, %224, %232 : vector<8x256xi1>, vector<8x256xf32>
    %234 = vector.extract_strided_slice %186 {offsets = [0, 3], sizes = [8, 1], strides = [1, 1]} : vector<8x25xf32> to vector<8x1xf32>
    %235 = vector.broadcast %234 : vector<8x1xf32> to vector<8x256xf32>
    %236 = arith.mulf %233, %235 : vector<8x256xf32>
    %237 = arith.addf %212, %236 : vector<8x256xf32>
    %c60_i32 = arith.constant 60 : i32
    %238 = tpu.dynamic_rotate %182 by %c60_i32 dim 1 : vector<8x256xf32>, i32 -> vector<8x256xf32>
    %c4_i32_67 = arith.constant 4 : i32
    %239 = vector.broadcast %c4_i32_67 : i32 to vector<1x256xi32>
    %240 = arith.cmpi sge, %1, %239 : vector<1x256xi32>
    %c12_i32 = arith.constant 12 : i32
    %241 = vector.broadcast %c12_i32 : i32 to vector<1x256xi32>
    %242 = arith.cmpi slt, %2, %241 : vector<1x256xi32>
    %243 = arith.andi %240, %242 : vector<1x256xi1>
    %cst_68 = arith.constant 0.000000e+00 : f32
    %244 = vector.shape_cast %243 : vector<1x256xi1> to vector<1x256xi1>
    %245 = vector.broadcast %244 : vector<1x256xi1> to vector<8x256xi1>
    %246 = vector.broadcast %cst_68 : f32 to vector<8x256xf32>
    %247 = arith.select %245, %238, %246 : vector<8x256xi1>, vector<8x256xf32>
    %248 = vector.extract_strided_slice %186 {offsets = [0, 4], sizes = [8, 1], strides = [1, 1]} : vector<8x25xf32> to vector<8x1xf32>
    %249 = vector.broadcast %248 : vector<8x1xf32> to vector<8x256xf32>
    %250 = arith.mulf %247, %249 : vector<8x256xf32>
    %251 = arith.addf %223, %250 : vector<8x256xf32>
    %c36_i32 = arith.constant 36 : i32
    %252 = tpu.dynamic_rotate %182 by %c36_i32 dim 1 : vector<8x256xf32>, i32 -> vector<8x256xf32>
    %c2_i32_69 = arith.constant 2 : i32
    %253 = vector.broadcast %c2_i32_69 : i32 to vector<1x256xi32>
    %254 = arith.cmpi sge, %1, %253 : vector<1x256xi32>
    %c4_i32_70 = arith.constant 4 : i32
    %255 = vector.broadcast %c4_i32_70 : i32 to vector<1x256xi32>
    %256 = arith.cmpi sge, %2, %255 : vector<1x256xi32>
    %257 = arith.andi %254, %256 : vector<1x256xi1>
    %cst_71 = arith.constant 0.000000e+00 : f32
    %258 = vector.shape_cast %257 : vector<1x256xi1> to vector<1x256xi1>
    %259 = vector.broadcast %258 : vector<1x256xi1> to vector<8x256xi1>
    %260 = vector.broadcast %cst_71 : f32 to vector<8x256xf32>
    %261 = arith.select %259, %252, %260 : vector<8x256xi1>, vector<8x256xf32>
    %262 = vector.extract_strided_slice %186 {offsets = [0, 5], sizes = [8, 1], strides = [1, 1]} : vector<8x25xf32> to vector<8x1xf32>
    %263 = vector.broadcast %262 : vector<8x1xf32> to vector<8x256xf32>
    %264 = arith.mulf %261, %263 : vector<8x256xf32>
    %265 = arith.addf %237, %264 : vector<8x256xf32>
    %c34_i32 = arith.constant 34 : i32
    %266 = tpu.dynamic_rotate %182 by %c34_i32 dim 1 : vector<8x256xf32>, i32 -> vector<8x256xf32>
    %c2_i32_72 = arith.constant 2 : i32
    %267 = vector.broadcast %c2_i32_72 : i32 to vector<1x256xi32>
    %268 = arith.cmpi sge, %1, %267 : vector<1x256xi32>
    %c2_i32_73 = arith.constant 2 : i32
    %269 = vector.broadcast %c2_i32_73 : i32 to vector<1x256xi32>
    %270 = arith.cmpi sge, %2, %269 : vector<1x256xi32>
    %271 = arith.andi %268, %270 : vector<1x256xi1>
    %cst_74 = arith.constant 0.000000e+00 : f32
    %272 = vector.shape_cast %271 : vector<1x256xi1> to vector<1x256xi1>
    %273 = vector.broadcast %272 : vector<1x256xi1> to vector<8x256xi1>
    %274 = vector.broadcast %cst_74 : f32 to vector<8x256xf32>
    %275 = arith.select %273, %266, %274 : vector<8x256xi1>, vector<8x256xf32>
    %276 = vector.extract_strided_slice %184 {offsets = [0, 0], sizes = [8, 1], strides = [1, 1]} : vector<8x25xf32> to vector<8x1xf32>
    %277 = vector.broadcast %276 : vector<8x1xf32> to vector<8x256xf32>
    %278 = arith.mulf %275, %277 : vector<8x256xf32>
    %279 = vector.extract_strided_slice %185 {offsets = [0, 0], sizes = [8, 1], strides = [1, 1]} : vector<8x9xf32> to vector<8x1xf32>
    %280 = vector.broadcast %279 : vector<8x1xf32> to vector<8x256xf32>
    %281 = arith.mulf %275, %280 : vector<8x256xf32>
    %282 = vector.extract_strided_slice %186 {offsets = [0, 6], sizes = [8, 1], strides = [1, 1]} : vector<8x25xf32> to vector<8x1xf32>
    %283 = vector.broadcast %282 : vector<8x1xf32> to vector<8x256xf32>
    %284 = arith.mulf %275, %283 : vector<8x256xf32>
    %285 = arith.addf %251, %284 : vector<8x256xf32>
    %c33_i32 = arith.constant 33 : i32
    %286 = tpu.dynamic_rotate %182 by %c33_i32 dim 1 : vector<8x256xf32>, i32 -> vector<8x256xf32>
    %c2_i32_75 = arith.constant 2 : i32
    %287 = vector.broadcast %c2_i32_75 : i32 to vector<1x256xi32>
    %288 = arith.cmpi sge, %1, %287 : vector<1x256xi32>
    %c1_i32_76 = arith.constant 1 : i32
    %289 = vector.broadcast %c1_i32_76 : i32 to vector<1x256xi32>
    %290 = arith.cmpi sge, %2, %289 : vector<1x256xi32>
    %291 = arith.andi %288, %290 : vector<1x256xi1>
    %cst_77 = arith.constant 0.000000e+00 : f32
    %292 = vector.shape_cast %291 : vector<1x256xi1> to vector<1x256xi1>
    %293 = vector.broadcast %292 : vector<1x256xi1> to vector<8x256xi1>
    %294 = vector.broadcast %cst_77 : f32 to vector<8x256xf32>
    %295 = arith.select %293, %286, %294 : vector<8x256xi1>, vector<8x256xf32>
    %296 = vector.extract_strided_slice %184 {offsets = [0, 1], sizes = [8, 1], strides = [1, 1]} : vector<8x25xf32> to vector<8x1xf32>
    %297 = vector.broadcast %296 : vector<8x1xf32> to vector<8x256xf32>
    %298 = arith.mulf %295, %297 : vector<8x256xf32>
    %c32_i32 = arith.constant 32 : i32
    %299 = tpu.dynamic_rotate %182 by %c32_i32 dim 1 : vector<8x256xf32>, i32 -> vector<8x256xf32>
    %c2_i32_78 = arith.constant 2 : i32
    %300 = vector.broadcast %c2_i32_78 : i32 to vector<1x256xi32>
    %301 = arith.cmpi sge, %1, %300 : vector<1x256xi32>
    %cst_79 = arith.constant 0.000000e+00 : f32
    %302 = vector.shape_cast %301 : vector<1x256xi1> to vector<1x256xi1>
    %303 = vector.broadcast %302 : vector<1x256xi1> to vector<8x256xi1>
    %304 = vector.broadcast %cst_79 : f32 to vector<8x256xf32>
    %305 = arith.select %303, %299, %304 : vector<8x256xi1>, vector<8x256xf32>
    %306 = vector.extract_strided_slice %184 {offsets = [0, 2], sizes = [8, 1], strides = [1, 1]} : vector<8x25xf32> to vector<8x1xf32>
    %307 = vector.broadcast %306 : vector<8x1xf32> to vector<8x256xf32>
    %308 = arith.mulf %305, %307 : vector<8x256xf32>
    %309 = arith.addf %278, %308 : vector<8x256xf32>
    %310 = vector.extract_strided_slice %185 {offsets = [0, 1], sizes = [8, 1], strides = [1, 1]} : vector<8x9xf32> to vector<8x1xf32>
    %311 = vector.broadcast %310 : vector<8x1xf32> to vector<8x256xf32>
    %312 = arith.mulf %305, %311 : vector<8x256xf32>
    %313 = arith.addf %281, %312 : vector<8x256xf32>
    %314 = vector.extract_strided_slice %186 {offsets = [0, 7], sizes = [8, 1], strides = [1, 1]} : vector<8x25xf32> to vector<8x1xf32>
    %315 = vector.broadcast %314 : vector<8x1xf32> to vector<8x256xf32>
    %316 = arith.mulf %305, %315 : vector<8x256xf32>
    %317 = arith.addf %285, %316 : vector<8x256xf32>
    %c31_i32 = arith.constant 31 : i32
    %318 = tpu.dynamic_rotate %182 by %c31_i32 dim 1 : vector<8x256xf32>, i32 -> vector<8x256xf32>
    %c2_i32_80 = arith.constant 2 : i32
    %319 = vector.broadcast %c2_i32_80 : i32 to vector<1x256xi32>
    %320 = arith.cmpi sge, %1, %319 : vector<1x256xi32>
    %c15_i32_81 = arith.constant 15 : i32
    %321 = vector.broadcast %c15_i32_81 : i32 to vector<1x256xi32>
    %322 = arith.cmpi slt, %2, %321 : vector<1x256xi32>
    %323 = arith.andi %320, %322 : vector<1x256xi1>
    %cst_82 = arith.constant 0.000000e+00 : f32
    %324 = vector.shape_cast %323 : vector<1x256xi1> to vector<1x256xi1>
    %325 = vector.broadcast %324 : vector<1x256xi1> to vector<8x256xi1>
    %326 = vector.broadcast %cst_82 : f32 to vector<8x256xf32>
    %327 = arith.select %325, %318, %326 : vector<8x256xi1>, vector<8x256xf32>
    %328 = vector.extract_strided_slice %184 {offsets = [0, 3], sizes = [8, 1], strides = [1, 1]} : vector<8x25xf32> to vector<8x1xf32>
    %329 = vector.broadcast %328 : vector<8x1xf32> to vector<8x256xf32>
    %330 = arith.mulf %327, %329 : vector<8x256xf32>
    %331 = arith.addf %298, %330 : vector<8x256xf32>
    %c30_i32 = arith.constant 30 : i32
    %332 = tpu.dynamic_rotate %182 by %c30_i32 dim 1 : vector<8x256xf32>, i32 -> vector<8x256xf32>
    %c2_i32_83 = arith.constant 2 : i32
    %333 = vector.broadcast %c2_i32_83 : i32 to vector<1x256xi32>
    %334 = arith.cmpi sge, %1, %333 : vector<1x256xi32>
    %c14_i32_84 = arith.constant 14 : i32
    %335 = vector.broadcast %c14_i32_84 : i32 to vector<1x256xi32>
    %336 = arith.cmpi slt, %2, %335 : vector<1x256xi32>
    %337 = arith.andi %334, %336 : vector<1x256xi1>
    %cst_85 = arith.constant 0.000000e+00 : f32
    %338 = vector.shape_cast %337 : vector<1x256xi1> to vector<1x256xi1>
    %339 = vector.broadcast %338 : vector<1x256xi1> to vector<8x256xi1>
    %340 = vector.broadcast %cst_85 : f32 to vector<8x256xf32>
    %341 = arith.select %339, %332, %340 : vector<8x256xi1>, vector<8x256xf32>
    %342 = vector.extract_strided_slice %184 {offsets = [0, 4], sizes = [8, 1], strides = [1, 1]} : vector<8x25xf32> to vector<8x1xf32>
    %343 = vector.broadcast %342 : vector<8x1xf32> to vector<8x256xf32>
    %344 = arith.mulf %341, %343 : vector<8x256xf32>
    %345 = arith.addf %309, %344 : vector<8x256xf32>
    %346 = vector.extract_strided_slice %185 {offsets = [0, 2], sizes = [8, 1], strides = [1, 1]} : vector<8x9xf32> to vector<8x1xf32>
    %347 = vector.broadcast %346 : vector<8x1xf32> to vector<8x256xf32>
    %348 = arith.mulf %341, %347 : vector<8x256xf32>
    %349 = arith.addf %313, %348 : vector<8x256xf32>
    %350 = vector.extract_strided_slice %186 {offsets = [0, 8], sizes = [8, 1], strides = [1, 1]} : vector<8x25xf32> to vector<8x1xf32>
    %351 = vector.broadcast %350 : vector<8x1xf32> to vector<8x256xf32>
    %352 = arith.mulf %341, %351 : vector<8x256xf32>
    %353 = arith.addf %317, %352 : vector<8x256xf32>
    %c28_i32 = arith.constant 28 : i32
    %354 = tpu.dynamic_rotate %182 by %c28_i32 dim 1 : vector<8x256xf32>, i32 -> vector<8x256xf32>
    %c2_i32_86 = arith.constant 2 : i32
    %355 = vector.broadcast %c2_i32_86 : i32 to vector<1x256xi32>
    %356 = arith.cmpi sge, %1, %355 : vector<1x256xi32>
    %c12_i32_87 = arith.constant 12 : i32
    %357 = vector.broadcast %c12_i32_87 : i32 to vector<1x256xi32>
    %358 = arith.cmpi slt, %2, %357 : vector<1x256xi32>
    %359 = arith.andi %356, %358 : vector<1x256xi1>
    %cst_88 = arith.constant 0.000000e+00 : f32
    %360 = vector.shape_cast %359 : vector<1x256xi1> to vector<1x256xi1>
    %361 = vector.broadcast %360 : vector<1x256xi1> to vector<8x256xi1>
    %362 = vector.broadcast %cst_88 : f32 to vector<8x256xf32>
    %363 = arith.select %361, %354, %362 : vector<8x256xi1>, vector<8x256xf32>
    %364 = vector.extract_strided_slice %186 {offsets = [0, 9], sizes = [8, 1], strides = [1, 1]} : vector<8x25xf32> to vector<8x1xf32>
    %365 = vector.broadcast %364 : vector<8x1xf32> to vector<8x256xf32>
    %366 = arith.mulf %363, %365 : vector<8x256xf32>
    %367 = arith.addf %265, %366 : vector<8x256xf32>
    %c18_i32 = arith.constant 18 : i32
    %368 = tpu.dynamic_rotate %182 by %c18_i32 dim 1 : vector<8x256xf32>, i32 -> vector<8x256xf32>
    %c1_i32_89 = arith.constant 1 : i32
    %369 = vector.broadcast %c1_i32_89 : i32 to vector<1x256xi32>
    %370 = arith.cmpi sge, %1, %369 : vector<1x256xi32>
    %c2_i32_90 = arith.constant 2 : i32
    %371 = vector.broadcast %c2_i32_90 : i32 to vector<1x256xi32>
    %372 = arith.cmpi sge, %2, %371 : vector<1x256xi32>
    %373 = arith.andi %370, %372 : vector<1x256xi1>
    %cst_91 = arith.constant 0.000000e+00 : f32
    %374 = vector.shape_cast %373 : vector<1x256xi1> to vector<1x256xi1>
    %375 = vector.broadcast %374 : vector<1x256xi1> to vector<8x256xi1>
    %376 = vector.broadcast %cst_91 : f32 to vector<8x256xf32>
    %377 = arith.select %375, %368, %376 : vector<8x256xi1>, vector<8x256xf32>
    %378 = vector.extract_strided_slice %184 {offsets = [0, 5], sizes = [8, 1], strides = [1, 1]} : vector<8x25xf32> to vector<8x1xf32>
    %379 = vector.broadcast %378 : vector<8x1xf32> to vector<8x256xf32>
    %380 = arith.mulf %377, %379 : vector<8x256xf32>
    %381 = arith.addf %345, %380 : vector<8x256xf32>
    %c17_i32_92 = arith.constant 17 : i32
    %382 = tpu.dynamic_rotate %182 by %c17_i32_92 dim 1 : vector<8x256xf32>, i32 -> vector<8x256xf32>
    %cst_93 = arith.constant 0.000000e+00 : f32
    %383 = vector.shape_cast %8 : vector<1x256xi1> to vector<1x256xi1>
    %384 = vector.broadcast %383 : vector<1x256xi1> to vector<8x256xi1>
    %385 = vector.broadcast %cst_93 : f32 to vector<8x256xf32>
    %386 = arith.select %384, %382, %385 : vector<8x256xi1>, vector<8x256xf32>
    %387 = vector.extract_strided_slice %183 {offsets = [0, 0], sizes = [8, 1], strides = [1, 1]} : vector<8x9xf32> to vector<8x1xf32>
    %388 = vector.broadcast %387 : vector<8x1xf32> to vector<8x256xf32>
    %389 = arith.mulf %386, %388 : vector<8x256xf32>
    %390 = vector.extract_strided_slice %184 {offsets = [0, 6], sizes = [8, 1], strides = [1, 1]} : vector<8x25xf32> to vector<8x1xf32>
    %391 = vector.broadcast %390 : vector<8x1xf32> to vector<8x256xf32>
    %392 = arith.mulf %386, %391 : vector<8x256xf32>
    %393 = arith.addf %331, %392 : vector<8x256xf32>
    %c16_i32_94 = arith.constant 16 : i32
    %394 = tpu.dynamic_rotate %182 by %c16_i32_94 dim 1 : vector<8x256xf32>, i32 -> vector<8x256xf32>
    %cst_95 = arith.constant 0.000000e+00 : f32
    %395 = vector.shape_cast %21 : vector<1x256xi1> to vector<1x256xi1>
    %396 = vector.broadcast %395 : vector<1x256xi1> to vector<8x256xi1>
    %397 = vector.broadcast %cst_95 : f32 to vector<8x256xf32>
    %398 = arith.select %396, %394, %397 : vector<8x256xi1>, vector<8x256xf32>
    %399 = vector.extract_strided_slice %183 {offsets = [0, 1], sizes = [8, 1], strides = [1, 1]} : vector<8x9xf32> to vector<8x1xf32>
    %400 = vector.broadcast %399 : vector<8x1xf32> to vector<8x256xf32>
    %401 = arith.mulf %398, %400 : vector<8x256xf32>
    %402 = vector.extract_strided_slice %184 {offsets = [0, 7], sizes = [8, 1], strides = [1, 1]} : vector<8x25xf32> to vector<8x1xf32>
    %403 = vector.broadcast %402 : vector<8x1xf32> to vector<8x256xf32>
    %404 = arith.mulf %398, %403 : vector<8x256xf32>
    %405 = arith.addf %381, %404 : vector<8x256xf32>
    %c15_i32_96 = arith.constant 15 : i32
    %406 = tpu.dynamic_rotate %182 by %c15_i32_96 dim 1 : vector<8x256xf32>, i32 -> vector<8x256xf32>
    %cst_97 = arith.constant 0.000000e+00 : f32
    %407 = vector.shape_cast %37 : vector<1x256xi1> to vector<1x256xi1>
    %408 = vector.broadcast %407 : vector<1x256xi1> to vector<8x256xi1>
    %409 = vector.broadcast %cst_97 : f32 to vector<8x256xf32>
    %410 = arith.select %408, %406, %409 : vector<8x256xi1>, vector<8x256xf32>
    %411 = vector.extract_strided_slice %183 {offsets = [0, 2], sizes = [8, 1], strides = [1, 1]} : vector<8x9xf32> to vector<8x1xf32>
    %412 = vector.broadcast %411 : vector<8x1xf32> to vector<8x256xf32>
    %413 = arith.mulf %410, %412 : vector<8x256xf32>
    %414 = arith.addf %389, %413 : vector<8x256xf32>
    %415 = vector.extract_strided_slice %184 {offsets = [0, 8], sizes = [8, 1], strides = [1, 1]} : vector<8x25xf32> to vector<8x1xf32>
    %416 = vector.broadcast %415 : vector<8x1xf32> to vector<8x256xf32>
    %417 = arith.mulf %410, %416 : vector<8x256xf32>
    %418 = arith.addf %393, %417 : vector<8x256xf32>
    %c14_i32_98 = arith.constant 14 : i32
    %419 = tpu.dynamic_rotate %182 by %c14_i32_98 dim 1 : vector<8x256xf32>, i32 -> vector<8x256xf32>
    %c1_i32_99 = arith.constant 1 : i32
    %420 = vector.broadcast %c1_i32_99 : i32 to vector<1x256xi32>
    %421 = arith.cmpi sge, %1, %420 : vector<1x256xi32>
    %c14_i32_100 = arith.constant 14 : i32
    %422 = vector.broadcast %c14_i32_100 : i32 to vector<1x256xi32>
    %423 = arith.cmpi slt, %2, %422 : vector<1x256xi32>
    %424 = arith.andi %421, %423 : vector<1x256xi1>
    %cst_101 = arith.constant 0.000000e+00 : f32
    %425 = vector.shape_cast %424 : vector<1x256xi1> to vector<1x256xi1>
    %426 = vector.broadcast %425 : vector<1x256xi1> to vector<8x256xi1>
    %427 = vector.broadcast %cst_101 : f32 to vector<8x256xf32>
    %428 = arith.select %426, %419, %427 : vector<8x256xi1>, vector<8x256xf32>
    %429 = vector.extract_strided_slice %184 {offsets = [0, 9], sizes = [8, 1], strides = [1, 1]} : vector<8x25xf32> to vector<8x1xf32>
    %430 = vector.broadcast %429 : vector<8x1xf32> to vector<8x256xf32>
    %431 = arith.mulf %428, %430 : vector<8x256xf32>
    %432 = arith.addf %405, %431 : vector<8x256xf32>
    %c4_i32_102 = arith.constant 4 : i32
    %433 = tpu.dynamic_rotate %182 by %c4_i32_102 dim 1 : vector<8x256xf32>, i32 -> vector<8x256xf32>
    %c4_i32_103 = arith.constant 4 : i32
    %434 = vector.broadcast %c4_i32_103 : i32 to vector<1x256xi32>
    %435 = arith.cmpi sge, %2, %434 : vector<1x256xi32>
    %cst_104 = arith.constant 0.000000e+00 : f32
    %436 = vector.shape_cast %435 : vector<1x256xi1> to vector<1x256xi1>
    %437 = vector.broadcast %436 : vector<1x256xi1> to vector<8x256xi1>
    %438 = vector.broadcast %cst_104 : f32 to vector<8x256xf32>
    %439 = arith.select %437, %433, %438 : vector<8x256xi1>, vector<8x256xf32>
    %440 = vector.extract_strided_slice %186 {offsets = [0, 10], sizes = [8, 1], strides = [1, 1]} : vector<8x25xf32> to vector<8x1xf32>
    %441 = vector.broadcast %440 : vector<8x1xf32> to vector<8x256xf32>
    %442 = arith.mulf %439, %441 : vector<8x256xf32>
    %443 = arith.addf %367, %442 : vector<8x256xf32>
    %c2_i32_105 = arith.constant 2 : i32
    %444 = tpu.dynamic_rotate %182 by %c2_i32_105 dim 1 : vector<8x256xf32>, i32 -> vector<8x256xf32>
    %c2_i32_106 = arith.constant 2 : i32
    %445 = vector.broadcast %c2_i32_106 : i32 to vector<1x256xi32>
    %446 = arith.cmpi sge, %2, %445 : vector<1x256xi32>
    %cst_107 = arith.constant 0.000000e+00 : f32
    %447 = vector.shape_cast %446 : vector<1x256xi1> to vector<1x256xi1>
    %448 = vector.broadcast %447 : vector<1x256xi1> to vector<8x256xi1>
    %449 = vector.broadcast %cst_107 : f32 to vector<8x256xf32>
    %450 = arith.select %448, %444, %449 : vector<8x256xi1>, vector<8x256xf32>
    %451 = vector.extract_strided_slice %184 {offsets = [0, 10], sizes = [8, 1], strides = [1, 1]} : vector<8x25xf32> to vector<8x1xf32>
    %452 = vector.broadcast %451 : vector<8x1xf32> to vector<8x256xf32>
    %453 = arith.mulf %450, %452 : vector<8x256xf32>
    %454 = arith.addf %432, %453 : vector<8x256xf32>
    %455 = vector.extract_strided_slice %185 {offsets = [0, 3], sizes = [8, 1], strides = [1, 1]} : vector<8x9xf32> to vector<8x1xf32>
    %456 = vector.broadcast %455 : vector<8x1xf32> to vector<8x256xf32>
    %457 = arith.mulf %450, %456 : vector<8x256xf32>
    %458 = arith.addf %349, %457 : vector<8x256xf32>
    %459 = vector.extract_strided_slice %186 {offsets = [0, 11], sizes = [8, 1], strides = [1, 1]} : vector<8x25xf32> to vector<8x1xf32>
    %460 = vector.broadcast %459 : vector<8x1xf32> to vector<8x256xf32>
    %461 = arith.mulf %450, %460 : vector<8x256xf32>
    %462 = arith.addf %353, %461 : vector<8x256xf32>
    %c1_i32_108 = arith.constant 1 : i32
    %463 = tpu.dynamic_rotate %182 by %c1_i32_108 dim 1 : vector<8x256xf32>, i32 -> vector<8x256xf32>
    %cst_109 = arith.constant 0.000000e+00 : f32
    %464 = vector.shape_cast %50 : vector<1x256xi1> to vector<1x256xi1>
    %465 = vector.broadcast %464 : vector<1x256xi1> to vector<8x256xi1>
    %466 = vector.broadcast %cst_109 : f32 to vector<8x256xf32>
    %467 = arith.select %465, %463, %466 : vector<8x256xi1>, vector<8x256xf32>
    %468 = vector.extract_strided_slice %183 {offsets = [0, 3], sizes = [8, 1], strides = [1, 1]} : vector<8x9xf32> to vector<8x1xf32>
    %469 = vector.broadcast %468 : vector<8x1xf32> to vector<8x256xf32>
    %470 = arith.mulf %467, %469 : vector<8x256xf32>
    %471 = arith.addf %414, %470 : vector<8x256xf32>
    %472 = vector.extract_strided_slice %184 {offsets = [0, 11], sizes = [8, 1], strides = [1, 1]} : vector<8x25xf32> to vector<8x1xf32>
    %473 = vector.broadcast %472 : vector<8x1xf32> to vector<8x256xf32>
    %474 = arith.mulf %467, %473 : vector<8x256xf32>
    %475 = arith.addf %418, %474 : vector<8x256xf32>
    %476 = vector.extract_strided_slice %183 {offsets = [0, 4], sizes = [8, 1], strides = [1, 1]} : vector<8x9xf32> to vector<8x1xf32>
    %477 = vector.broadcast %476 : vector<8x1xf32> to vector<8x256xf32>
    %478 = arith.mulf %182, %477 : vector<8x256xf32>
    %479 = arith.addf %401, %478 : vector<8x256xf32>
    %480 = vector.extract_strided_slice %184 {offsets = [0, 12], sizes = [8, 1], strides = [1, 1]} : vector<8x25xf32> to vector<8x1xf32>
    %481 = vector.broadcast %480 : vector<8x1xf32> to vector<8x256xf32>
    %482 = arith.mulf %182, %481 : vector<8x256xf32>
    %483 = arith.addf %454, %482 : vector<8x256xf32>
    %484 = vector.extract_strided_slice %185 {offsets = [0, 4], sizes = [8, 1], strides = [1, 1]} : vector<8x9xf32> to vector<8x1xf32>
    %485 = vector.broadcast %484 : vector<8x1xf32> to vector<8x256xf32>
    %486 = arith.mulf %182, %485 : vector<8x256xf32>
    %487 = arith.addf %458, %486 : vector<8x256xf32>
    %488 = vector.extract_strided_slice %186 {offsets = [0, 12], sizes = [8, 1], strides = [1, 1]} : vector<8x25xf32> to vector<8x1xf32>
    %489 = vector.broadcast %488 : vector<8x1xf32> to vector<8x256xf32>
    %490 = arith.mulf %182, %489 : vector<8x256xf32>
    %491 = arith.addf %462, %490 : vector<8x256xf32>
    %c255_i32_110 = arith.constant 255 : i32
    %492 = tpu.dynamic_rotate %182 by %c255_i32_110 dim 1 : vector<8x256xf32>, i32 -> vector<8x256xf32>
    %cst_111 = arith.constant 0.000000e+00 : f32
    %493 = vector.shape_cast %63 : vector<1x256xi1> to vector<1x256xi1>
    %494 = vector.broadcast %493 : vector<1x256xi1> to vector<8x256xi1>
    %495 = vector.broadcast %cst_111 : f32 to vector<8x256xf32>
    %496 = arith.select %494, %492, %495 : vector<8x256xi1>, vector<8x256xf32>
    %497 = vector.extract_strided_slice %183 {offsets = [0, 5], sizes = [8, 1], strides = [1, 1]} : vector<8x9xf32> to vector<8x1xf32>
    %498 = vector.broadcast %497 : vector<8x1xf32> to vector<8x256xf32>
    %499 = arith.mulf %496, %498 : vector<8x256xf32>
    %500 = arith.addf %471, %499 : vector<8x256xf32>
    %501 = vector.extract_strided_slice %184 {offsets = [0, 13], sizes = [8, 1], strides = [1, 1]} : vector<8x25xf32> to vector<8x1xf32>
    %502 = vector.broadcast %501 : vector<8x1xf32> to vector<8x256xf32>
    %503 = arith.mulf %496, %502 : vector<8x256xf32>
    %504 = arith.addf %475, %503 : vector<8x256xf32>
    %c254_i32 = arith.constant 254 : i32
    %505 = tpu.dynamic_rotate %182 by %c254_i32 dim 1 : vector<8x256xf32>, i32 -> vector<8x256xf32>
    %c14_i32_112 = arith.constant 14 : i32
    %506 = vector.broadcast %c14_i32_112 : i32 to vector<1x256xi32>
    %507 = arith.cmpi slt, %2, %506 : vector<1x256xi32>
    %cst_113 = arith.constant 0.000000e+00 : f32
    %508 = vector.shape_cast %507 : vector<1x256xi1> to vector<1x256xi1>
    %509 = vector.broadcast %508 : vector<1x256xi1> to vector<8x256xi1>
    %510 = vector.broadcast %cst_113 : f32 to vector<8x256xf32>
    %511 = arith.select %509, %505, %510 : vector<8x256xi1>, vector<8x256xf32>
    %512 = vector.extract_strided_slice %184 {offsets = [0, 14], sizes = [8, 1], strides = [1, 1]} : vector<8x25xf32> to vector<8x1xf32>
    %513 = vector.broadcast %512 : vector<8x1xf32> to vector<8x256xf32>
    %514 = arith.mulf %511, %513 : vector<8x256xf32>
    %515 = arith.addf %483, %514 : vector<8x256xf32>
    %516 = vector.extract_strided_slice %185 {offsets = [0, 5], sizes = [8, 1], strides = [1, 1]} : vector<8x9xf32> to vector<8x1xf32>
    %517 = vector.broadcast %516 : vector<8x1xf32> to vector<8x256xf32>
    %518 = arith.mulf %511, %517 : vector<8x256xf32>
    %519 = arith.addf %487, %518 : vector<8x256xf32>
    %520 = vector.extract_strided_slice %186 {offsets = [0, 13], sizes = [8, 1], strides = [1, 1]} : vector<8x25xf32> to vector<8x1xf32>
    %521 = vector.broadcast %520 : vector<8x1xf32> to vector<8x256xf32>
    %522 = arith.mulf %511, %521 : vector<8x256xf32>
    %523 = arith.addf %491, %522 : vector<8x256xf32>
    %c252_i32 = arith.constant 252 : i32
    %524 = tpu.dynamic_rotate %182 by %c252_i32 dim 1 : vector<8x256xf32>, i32 -> vector<8x256xf32>
    %c12_i32_114 = arith.constant 12 : i32
    %525 = vector.broadcast %c12_i32_114 : i32 to vector<1x256xi32>
    %526 = arith.cmpi slt, %2, %525 : vector<1x256xi32>
    %cst_115 = arith.constant 0.000000e+00 : f32
    %527 = vector.shape_cast %526 : vector<1x256xi1> to vector<1x256xi1>
    %528 = vector.broadcast %527 : vector<1x256xi1> to vector<8x256xi1>
    %529 = vector.broadcast %cst_115 : f32 to vector<8x256xf32>
    %530 = arith.select %528, %524, %529 : vector<8x256xi1>, vector<8x256xf32>
    %531 = vector.extract_strided_slice %186 {offsets = [0, 14], sizes = [8, 1], strides = [1, 1]} : vector<8x25xf32> to vector<8x1xf32>
    %532 = vector.broadcast %531 : vector<8x1xf32> to vector<8x256xf32>
    %533 = arith.mulf %530, %532 : vector<8x256xf32>
    %534 = arith.addf %443, %533 : vector<8x256xf32>
    %c242_i32 = arith.constant 242 : i32
    %535 = tpu.dynamic_rotate %182 by %c242_i32 dim 1 : vector<8x256xf32>, i32 -> vector<8x256xf32>
    %c15_i32_116 = arith.constant 15 : i32
    %536 = vector.broadcast %c15_i32_116 : i32 to vector<1x256xi32>
    %537 = arith.cmpi slt, %1, %536 : vector<1x256xi32>
    %c2_i32_117 = arith.constant 2 : i32
    %538 = vector.broadcast %c2_i32_117 : i32 to vector<1x256xi32>
    %539 = arith.cmpi sge, %2, %538 : vector<1x256xi32>
    %540 = arith.andi %537, %539 : vector<1x256xi1>
    %cst_118 = arith.constant 0.000000e+00 : f32
    %541 = vector.shape_cast %540 : vector<1x256xi1> to vector<1x256xi1>
    %542 = vector.broadcast %541 : vector<1x256xi1> to vector<8x256xi1>
    %543 = vector.broadcast %cst_118 : f32 to vector<8x256xf32>
    %544 = arith.select %542, %535, %543 : vector<8x256xi1>, vector<8x256xf32>
    %545 = vector.extract_strided_slice %184 {offsets = [0, 15], sizes = [8, 1], strides = [1, 1]} : vector<8x25xf32> to vector<8x1xf32>
    %546 = vector.broadcast %545 : vector<8x1xf32> to vector<8x256xf32>
    %547 = arith.mulf %544, %546 : vector<8x256xf32>
    %548 = arith.addf %515, %547 : vector<8x256xf32>
    %c241_i32_119 = arith.constant 241 : i32
    %549 = tpu.dynamic_rotate %182 by %c241_i32_119 dim 1 : vector<8x256xf32>, i32 -> vector<8x256xf32>
    %cst_120 = arith.constant 0.000000e+00 : f32
    %550 = vector.shape_cast %79 : vector<1x256xi1> to vector<1x256xi1>
    %551 = vector.broadcast %550 : vector<1x256xi1> to vector<8x256xi1>
    %552 = vector.broadcast %cst_120 : f32 to vector<8x256xf32>
    %553 = arith.select %551, %549, %552 : vector<8x256xi1>, vector<8x256xf32>
    %554 = vector.extract_strided_slice %183 {offsets = [0, 6], sizes = [8, 1], strides = [1, 1]} : vector<8x9xf32> to vector<8x1xf32>
    %555 = vector.broadcast %554 : vector<8x1xf32> to vector<8x256xf32>
    %556 = arith.mulf %553, %555 : vector<8x256xf32>
    %557 = arith.addf %500, %556 : vector<8x256xf32>
    %558 = vector.extract_strided_slice %184 {offsets = [0, 16], sizes = [8, 1], strides = [1, 1]} : vector<8x25xf32> to vector<8x1xf32>
    %559 = vector.broadcast %558 : vector<8x1xf32> to vector<8x256xf32>
    %560 = arith.mulf %553, %559 : vector<8x256xf32>
    %561 = arith.addf %504, %560 : vector<8x256xf32>
    %c240_i32_121 = arith.constant 240 : i32
    %562 = tpu.dynamic_rotate %182 by %c240_i32_121 dim 1 : vector<8x256xf32>, i32 -> vector<8x256xf32>
    %cst_122 = arith.constant 0.000000e+00 : f32
    %563 = vector.shape_cast %92 : vector<1x256xi1> to vector<1x256xi1>
    %564 = vector.broadcast %563 : vector<1x256xi1> to vector<8x256xi1>
    %565 = vector.broadcast %cst_122 : f32 to vector<8x256xf32>
    %566 = arith.select %564, %562, %565 : vector<8x256xi1>, vector<8x256xf32>
    %567 = vector.extract_strided_slice %183 {offsets = [0, 7], sizes = [8, 1], strides = [1, 1]} : vector<8x9xf32> to vector<8x1xf32>
    %568 = vector.broadcast %567 : vector<8x1xf32> to vector<8x256xf32>
    %569 = arith.mulf %566, %568 : vector<8x256xf32>
    %570 = arith.addf %479, %569 : vector<8x256xf32>
    %571 = vector.extract_strided_slice %184 {offsets = [0, 17], sizes = [8, 1], strides = [1, 1]} : vector<8x25xf32> to vector<8x1xf32>
    %572 = vector.broadcast %571 : vector<8x1xf32> to vector<8x256xf32>
    %573 = arith.mulf %566, %572 : vector<8x256xf32>
    %574 = arith.addf %548, %573 : vector<8x256xf32>
    %c239_i32_123 = arith.constant 239 : i32
    %575 = tpu.dynamic_rotate %182 by %c239_i32_123 dim 1 : vector<8x256xf32>, i32 -> vector<8x256xf32>
    %cst_124 = arith.constant 0.000000e+00 : f32
    %576 = vector.shape_cast %108 : vector<1x256xi1> to vector<1x256xi1>
    %577 = vector.broadcast %576 : vector<1x256xi1> to vector<8x256xi1>
    %578 = vector.broadcast %cst_124 : f32 to vector<8x256xf32>
    %579 = arith.select %577, %575, %578 : vector<8x256xi1>, vector<8x256xf32>
    %580 = vector.extract_strided_slice %183 {offsets = [0, 8], sizes = [8, 1], strides = [1, 1]} : vector<8x9xf32> to vector<8x1xf32>
    %581 = vector.broadcast %580 : vector<8x1xf32> to vector<8x256xf32>
    %582 = arith.mulf %579, %581 : vector<8x256xf32>
    %583 = arith.addf %557, %582 : vector<8x256xf32>
    %584 = vector.extract_strided_slice %184 {offsets = [0, 18], sizes = [8, 1], strides = [1, 1]} : vector<8x25xf32> to vector<8x1xf32>
    %585 = vector.broadcast %584 : vector<8x1xf32> to vector<8x256xf32>
    %586 = arith.mulf %579, %585 : vector<8x256xf32>
    %587 = arith.addf %561, %586 : vector<8x256xf32>
    %c238_i32 = arith.constant 238 : i32
    %588 = tpu.dynamic_rotate %182 by %c238_i32 dim 1 : vector<8x256xf32>, i32 -> vector<8x256xf32>
    %c15_i32_125 = arith.constant 15 : i32
    %589 = vector.broadcast %c15_i32_125 : i32 to vector<1x256xi32>
    %590 = arith.cmpi slt, %1, %589 : vector<1x256xi32>
    %c14_i32_126 = arith.constant 14 : i32
    %591 = vector.broadcast %c14_i32_126 : i32 to vector<1x256xi32>
    %592 = arith.cmpi slt, %2, %591 : vector<1x256xi32>
    %593 = arith.andi %590, %592 : vector<1x256xi1>
    %cst_127 = arith.constant 0.000000e+00 : f32
    %594 = vector.shape_cast %593 : vector<1x256xi1> to vector<1x256xi1>
    %595 = vector.broadcast %594 : vector<1x256xi1> to vector<8x256xi1>
    %596 = vector.broadcast %cst_127 : f32 to vector<8x256xf32>
    %597 = arith.select %595, %588, %596 : vector<8x256xi1>, vector<8x256xf32>
    %598 = vector.extract_strided_slice %184 {offsets = [0, 19], sizes = [8, 1], strides = [1, 1]} : vector<8x25xf32> to vector<8x1xf32>
    %599 = vector.broadcast %598 : vector<8x1xf32> to vector<8x256xf32>
    %600 = arith.mulf %597, %599 : vector<8x256xf32>
    %601 = arith.addf %574, %600 : vector<8x256xf32>
    %c228_i32 = arith.constant 228 : i32
    %602 = tpu.dynamic_rotate %182 by %c228_i32 dim 1 : vector<8x256xf32>, i32 -> vector<8x256xf32>
    %c14_i32_128 = arith.constant 14 : i32
    %603 = vector.broadcast %c14_i32_128 : i32 to vector<1x256xi32>
    %604 = arith.cmpi slt, %1, %603 : vector<1x256xi32>
    %c4_i32_129 = arith.constant 4 : i32
    %605 = vector.broadcast %c4_i32_129 : i32 to vector<1x256xi32>
    %606 = arith.cmpi sge, %2, %605 : vector<1x256xi32>
    %607 = arith.andi %604, %606 : vector<1x256xi1>
    %cst_130 = arith.constant 0.000000e+00 : f32
    %608 = vector.shape_cast %607 : vector<1x256xi1> to vector<1x256xi1>
    %609 = vector.broadcast %608 : vector<1x256xi1> to vector<8x256xi1>
    %610 = vector.broadcast %cst_130 : f32 to vector<8x256xf32>
    %611 = arith.select %609, %602, %610 : vector<8x256xi1>, vector<8x256xf32>
    %612 = vector.extract_strided_slice %186 {offsets = [0, 15], sizes = [8, 1], strides = [1, 1]} : vector<8x25xf32> to vector<8x1xf32>
    %613 = vector.broadcast %612 : vector<8x1xf32> to vector<8x256xf32>
    %614 = arith.mulf %611, %613 : vector<8x256xf32>
    %615 = arith.addf %534, %614 : vector<8x256xf32>
    %c226_i32 = arith.constant 226 : i32
    %616 = tpu.dynamic_rotate %182 by %c226_i32 dim 1 : vector<8x256xf32>, i32 -> vector<8x256xf32>
    %c14_i32_131 = arith.constant 14 : i32
    %617 = vector.broadcast %c14_i32_131 : i32 to vector<1x256xi32>
    %618 = arith.cmpi slt, %1, %617 : vector<1x256xi32>
    %c2_i32_132 = arith.constant 2 : i32
    %619 = vector.broadcast %c2_i32_132 : i32 to vector<1x256xi32>
    %620 = arith.cmpi sge, %2, %619 : vector<1x256xi32>
    %621 = arith.andi %618, %620 : vector<1x256xi1>
    %cst_133 = arith.constant 0.000000e+00 : f32
    %622 = vector.shape_cast %621 : vector<1x256xi1> to vector<1x256xi1>
    %623 = vector.broadcast %622 : vector<1x256xi1> to vector<8x256xi1>
    %624 = vector.broadcast %cst_133 : f32 to vector<8x256xf32>
    %625 = arith.select %623, %616, %624 : vector<8x256xi1>, vector<8x256xf32>
    %626 = vector.extract_strided_slice %184 {offsets = [0, 20], sizes = [8, 1], strides = [1, 1]} : vector<8x25xf32> to vector<8x1xf32>
    %627 = vector.broadcast %626 : vector<8x1xf32> to vector<8x256xf32>
    %628 = arith.mulf %625, %627 : vector<8x256xf32>
    %629 = arith.addf %601, %628 : vector<8x256xf32>
    %630 = vector.extract_strided_slice %185 {offsets = [0, 6], sizes = [8, 1], strides = [1, 1]} : vector<8x9xf32> to vector<8x1xf32>
    %631 = vector.broadcast %630 : vector<8x1xf32> to vector<8x256xf32>
    %632 = arith.mulf %625, %631 : vector<8x256xf32>
    %633 = arith.addf %519, %632 : vector<8x256xf32>
    %634 = vector.extract_strided_slice %186 {offsets = [0, 16], sizes = [8, 1], strides = [1, 1]} : vector<8x25xf32> to vector<8x1xf32>
    %635 = vector.broadcast %634 : vector<8x1xf32> to vector<8x256xf32>
    %636 = arith.mulf %625, %635 : vector<8x256xf32>
    %637 = arith.addf %523, %636 : vector<8x256xf32>
    %c225_i32 = arith.constant 225 : i32
    %638 = tpu.dynamic_rotate %182 by %c225_i32 dim 1 : vector<8x256xf32>, i32 -> vector<8x256xf32>
    %c14_i32_134 = arith.constant 14 : i32
    %639 = vector.broadcast %c14_i32_134 : i32 to vector<1x256xi32>
    %640 = arith.cmpi slt, %1, %639 : vector<1x256xi32>
    %c1_i32_135 = arith.constant 1 : i32
    %641 = vector.broadcast %c1_i32_135 : i32 to vector<1x256xi32>
    %642 = arith.cmpi sge, %2, %641 : vector<1x256xi32>
    %643 = arith.andi %640, %642 : vector<1x256xi1>
    %cst_136 = arith.constant 0.000000e+00 : f32
    %644 = vector.shape_cast %643 : vector<1x256xi1> to vector<1x256xi1>
    %645 = vector.broadcast %644 : vector<1x256xi1> to vector<8x256xi1>
    %646 = vector.broadcast %cst_136 : f32 to vector<8x256xf32>
    %647 = arith.select %645, %638, %646 : vector<8x256xi1>, vector<8x256xf32>
    %648 = vector.extract_strided_slice %184 {offsets = [0, 21], sizes = [8, 1], strides = [1, 1]} : vector<8x25xf32> to vector<8x1xf32>
    %649 = vector.broadcast %648 : vector<8x1xf32> to vector<8x256xf32>
    %650 = arith.mulf %647, %649 : vector<8x256xf32>
    %651 = arith.addf %587, %650 : vector<8x256xf32>
    %c224_i32 = arith.constant 224 : i32
    %652 = tpu.dynamic_rotate %182 by %c224_i32 dim 1 : vector<8x256xf32>, i32 -> vector<8x256xf32>
    %c14_i32_137 = arith.constant 14 : i32
    %653 = vector.broadcast %c14_i32_137 : i32 to vector<1x256xi32>
    %654 = arith.cmpi slt, %1, %653 : vector<1x256xi32>
    %cst_138 = arith.constant 0.000000e+00 : f32
    %655 = vector.shape_cast %654 : vector<1x256xi1> to vector<1x256xi1>
    %656 = vector.broadcast %655 : vector<1x256xi1> to vector<8x256xi1>
    %657 = vector.broadcast %cst_138 : f32 to vector<8x256xf32>
    %658 = arith.select %656, %652, %657 : vector<8x256xi1>, vector<8x256xf32>
    %659 = vector.extract_strided_slice %184 {offsets = [0, 22], sizes = [8, 1], strides = [1, 1]} : vector<8x25xf32> to vector<8x1xf32>
    %660 = vector.broadcast %659 : vector<8x1xf32> to vector<8x256xf32>
    %661 = arith.mulf %658, %660 : vector<8x256xf32>
    %662 = arith.addf %629, %661 : vector<8x256xf32>
    %663 = vector.extract_strided_slice %185 {offsets = [0, 7], sizes = [8, 1], strides = [1, 1]} : vector<8x9xf32> to vector<8x1xf32>
    %664 = vector.broadcast %663 : vector<8x1xf32> to vector<8x256xf32>
    %665 = arith.mulf %658, %664 : vector<8x256xf32>
    %666 = arith.addf %633, %665 : vector<8x256xf32>
    %667 = vector.extract_strided_slice %186 {offsets = [0, 17], sizes = [8, 1], strides = [1, 1]} : vector<8x25xf32> to vector<8x1xf32>
    %668 = vector.broadcast %667 : vector<8x1xf32> to vector<8x256xf32>
    %669 = arith.mulf %658, %668 : vector<8x256xf32>
    %670 = arith.addf %637, %669 : vector<8x256xf32>
    %c223_i32 = arith.constant 223 : i32
    %671 = tpu.dynamic_rotate %182 by %c223_i32 dim 1 : vector<8x256xf32>, i32 -> vector<8x256xf32>
    %c14_i32_139 = arith.constant 14 : i32
    %672 = vector.broadcast %c14_i32_139 : i32 to vector<1x256xi32>
    %673 = arith.cmpi slt, %1, %672 : vector<1x256xi32>
    %c15_i32_140 = arith.constant 15 : i32
    %674 = vector.broadcast %c15_i32_140 : i32 to vector<1x256xi32>
    %675 = arith.cmpi slt, %2, %674 : vector<1x256xi32>
    %676 = arith.andi %673, %675 : vector<1x256xi1>
    %cst_141 = arith.constant 0.000000e+00 : f32
    %677 = vector.shape_cast %676 : vector<1x256xi1> to vector<1x256xi1>
    %678 = vector.broadcast %677 : vector<1x256xi1> to vector<8x256xi1>
    %679 = vector.broadcast %cst_141 : f32 to vector<8x256xf32>
    %680 = arith.select %678, %671, %679 : vector<8x256xi1>, vector<8x256xf32>
    %681 = vector.extract_strided_slice %184 {offsets = [0, 23], sizes = [8, 1], strides = [1, 1]} : vector<8x25xf32> to vector<8x1xf32>
    %682 = vector.broadcast %681 : vector<8x1xf32> to vector<8x256xf32>
    %683 = arith.mulf %680, %682 : vector<8x256xf32>
    %684 = arith.addf %651, %683 : vector<8x256xf32>
    %c222_i32 = arith.constant 222 : i32
    %685 = tpu.dynamic_rotate %182 by %c222_i32 dim 1 : vector<8x256xf32>, i32 -> vector<8x256xf32>
    %c14_i32_142 = arith.constant 14 : i32
    %686 = vector.broadcast %c14_i32_142 : i32 to vector<1x256xi32>
    %687 = arith.cmpi slt, %1, %686 : vector<1x256xi32>
    %c14_i32_143 = arith.constant 14 : i32
    %688 = vector.broadcast %c14_i32_143 : i32 to vector<1x256xi32>
    %689 = arith.cmpi slt, %2, %688 : vector<1x256xi32>
    %690 = arith.andi %687, %689 : vector<1x256xi1>
    %cst_144 = arith.constant 0.000000e+00 : f32
    %691 = vector.shape_cast %690 : vector<1x256xi1> to vector<1x256xi1>
    %692 = vector.broadcast %691 : vector<1x256xi1> to vector<8x256xi1>
    %693 = vector.broadcast %cst_144 : f32 to vector<8x256xf32>
    %694 = arith.select %692, %685, %693 : vector<8x256xi1>, vector<8x256xf32>
    %695 = vector.extract_strided_slice %184 {offsets = [0, 24], sizes = [8, 1], strides = [1, 1]} : vector<8x25xf32> to vector<8x1xf32>
    %696 = vector.broadcast %695 : vector<8x1xf32> to vector<8x256xf32>
    %697 = arith.mulf %694, %696 : vector<8x256xf32>
    %698 = arith.addf %662, %697 : vector<8x256xf32>
    %699 = vector.extract_strided_slice %185 {offsets = [0, 8], sizes = [8, 1], strides = [1, 1]} : vector<8x9xf32> to vector<8x1xf32>
    %700 = vector.broadcast %699 : vector<8x1xf32> to vector<8x256xf32>
    %701 = arith.mulf %694, %700 : vector<8x256xf32>
    %702 = arith.addf %666, %701 : vector<8x256xf32>
    %703 = vector.extract_strided_slice %186 {offsets = [0, 18], sizes = [8, 1], strides = [1, 1]} : vector<8x25xf32> to vector<8x1xf32>
    %704 = vector.broadcast %703 : vector<8x1xf32> to vector<8x256xf32>
    %705 = arith.mulf %694, %704 : vector<8x256xf32>
    %706 = arith.addf %670, %705 : vector<8x256xf32>
    %c220_i32 = arith.constant 220 : i32
    %707 = tpu.dynamic_rotate %182 by %c220_i32 dim 1 : vector<8x256xf32>, i32 -> vector<8x256xf32>
    %c14_i32_145 = arith.constant 14 : i32
    %708 = vector.broadcast %c14_i32_145 : i32 to vector<1x256xi32>
    %709 = arith.cmpi slt, %1, %708 : vector<1x256xi32>
    %c12_i32_146 = arith.constant 12 : i32
    %710 = vector.broadcast %c12_i32_146 : i32 to vector<1x256xi32>
    %711 = arith.cmpi slt, %2, %710 : vector<1x256xi32>
    %712 = arith.andi %709, %711 : vector<1x256xi1>
    %cst_147 = arith.constant 0.000000e+00 : f32
    %713 = vector.shape_cast %712 : vector<1x256xi1> to vector<1x256xi1>
    %714 = vector.broadcast %713 : vector<1x256xi1> to vector<8x256xi1>
    %715 = vector.broadcast %cst_147 : f32 to vector<8x256xf32>
    %716 = arith.select %714, %707, %715 : vector<8x256xi1>, vector<8x256xf32>
    %717 = vector.extract_strided_slice %186 {offsets = [0, 19], sizes = [8, 1], strides = [1, 1]} : vector<8x25xf32> to vector<8x1xf32>
    %718 = vector.broadcast %717 : vector<8x1xf32> to vector<8x256xf32>
    %719 = arith.mulf %716, %718 : vector<8x256xf32>
    %720 = arith.addf %615, %719 : vector<8x256xf32>
    %c196_i32 = arith.constant 196 : i32
    %721 = tpu.dynamic_rotate %182 by %c196_i32 dim 1 : vector<8x256xf32>, i32 -> vector<8x256xf32>
    %c12_i32_148 = arith.constant 12 : i32
    %722 = vector.broadcast %c12_i32_148 : i32 to vector<1x256xi32>
    %723 = arith.cmpi slt, %1, %722 : vector<1x256xi32>
    %c4_i32_149 = arith.constant 4 : i32
    %724 = vector.broadcast %c4_i32_149 : i32 to vector<1x256xi32>
    %725 = arith.cmpi sge, %2, %724 : vector<1x256xi32>
    %726 = arith.andi %723, %725 : vector<1x256xi1>
    %cst_150 = arith.constant 0.000000e+00 : f32
    %727 = vector.shape_cast %726 : vector<1x256xi1> to vector<1x256xi1>
    %728 = vector.broadcast %727 : vector<1x256xi1> to vector<8x256xi1>
    %729 = vector.broadcast %cst_150 : f32 to vector<8x256xf32>
    %730 = arith.select %728, %721, %729 : vector<8x256xi1>, vector<8x256xf32>
    %731 = vector.extract_strided_slice %186 {offsets = [0, 20], sizes = [8, 1], strides = [1, 1]} : vector<8x25xf32> to vector<8x1xf32>
    %732 = vector.broadcast %731 : vector<8x1xf32> to vector<8x256xf32>
    %733 = arith.mulf %730, %732 : vector<8x256xf32>
    %734 = arith.addf %706, %733 : vector<8x256xf32>
    %c194_i32 = arith.constant 194 : i32
    %735 = tpu.dynamic_rotate %182 by %c194_i32 dim 1 : vector<8x256xf32>, i32 -> vector<8x256xf32>
    %c12_i32_151 = arith.constant 12 : i32
    %736 = vector.broadcast %c12_i32_151 : i32 to vector<1x256xi32>
    %737 = arith.cmpi slt, %1, %736 : vector<1x256xi32>
    %c2_i32_152 = arith.constant 2 : i32
    %738 = vector.broadcast %c2_i32_152 : i32 to vector<1x256xi32>
    %739 = arith.cmpi sge, %2, %738 : vector<1x256xi32>
    %740 = arith.andi %737, %739 : vector<1x256xi1>
    %cst_153 = arith.constant 0.000000e+00 : f32
    %741 = vector.shape_cast %740 : vector<1x256xi1> to vector<1x256xi1>
    %742 = vector.broadcast %741 : vector<1x256xi1> to vector<8x256xi1>
    %743 = vector.broadcast %cst_153 : f32 to vector<8x256xf32>
    %744 = arith.select %742, %735, %743 : vector<8x256xi1>, vector<8x256xf32>
    %745 = vector.extract_strided_slice %186 {offsets = [0, 21], sizes = [8, 1], strides = [1, 1]} : vector<8x25xf32> to vector<8x1xf32>
    %746 = vector.broadcast %745 : vector<8x1xf32> to vector<8x256xf32>
    %747 = arith.mulf %744, %746 : vector<8x256xf32>
    %748 = arith.addf %720, %747 : vector<8x256xf32>
    %c192_i32 = arith.constant 192 : i32
    %749 = tpu.dynamic_rotate %182 by %c192_i32 dim 1 : vector<8x256xf32>, i32 -> vector<8x256xf32>
    %c12_i32_154 = arith.constant 12 : i32
    %750 = vector.broadcast %c12_i32_154 : i32 to vector<1x256xi32>
    %751 = arith.cmpi slt, %1, %750 : vector<1x256xi32>
    %cst_155 = arith.constant 0.000000e+00 : f32
    %752 = vector.shape_cast %751 : vector<1x256xi1> to vector<1x256xi1>
    %753 = vector.broadcast %752 : vector<1x256xi1> to vector<8x256xi1>
    %754 = vector.broadcast %cst_155 : f32 to vector<8x256xf32>
    %755 = arith.select %753, %749, %754 : vector<8x256xi1>, vector<8x256xf32>
    %756 = vector.extract_strided_slice %186 {offsets = [0, 22], sizes = [8, 1], strides = [1, 1]} : vector<8x25xf32> to vector<8x1xf32>
    %757 = vector.broadcast %756 : vector<8x1xf32> to vector<8x256xf32>
    %758 = arith.mulf %755, %757 : vector<8x256xf32>
    %759 = arith.addf %734, %758 : vector<8x256xf32>
    %c190_i32 = arith.constant 190 : i32
    %760 = tpu.dynamic_rotate %182 by %c190_i32 dim 1 : vector<8x256xf32>, i32 -> vector<8x256xf32>
    %c12_i32_156 = arith.constant 12 : i32
    %761 = vector.broadcast %c12_i32_156 : i32 to vector<1x256xi32>
    %762 = arith.cmpi slt, %1, %761 : vector<1x256xi32>
    %c14_i32_157 = arith.constant 14 : i32
    %763 = vector.broadcast %c14_i32_157 : i32 to vector<1x256xi32>
    %764 = arith.cmpi slt, %2, %763 : vector<1x256xi32>
    %765 = arith.andi %762, %764 : vector<1x256xi1>
    %cst_158 = arith.constant 0.000000e+00 : f32
    %766 = vector.shape_cast %765 : vector<1x256xi1> to vector<1x256xi1>
    %767 = vector.broadcast %766 : vector<1x256xi1> to vector<8x256xi1>
    %768 = vector.broadcast %cst_158 : f32 to vector<8x256xf32>
    %769 = arith.select %767, %760, %768 : vector<8x256xi1>, vector<8x256xf32>
    %770 = vector.extract_strided_slice %186 {offsets = [0, 23], sizes = [8, 1], strides = [1, 1]} : vector<8x25xf32> to vector<8x1xf32>
    %771 = vector.broadcast %770 : vector<8x1xf32> to vector<8x256xf32>
    %772 = arith.mulf %769, %771 : vector<8x256xf32>
    %773 = arith.addf %748, %772 : vector<8x256xf32>
    %c188_i32 = arith.constant 188 : i32
    %774 = tpu.dynamic_rotate %182 by %c188_i32 dim 1 : vector<8x256xf32>, i32 -> vector<8x256xf32>
    %c12_i32_159 = arith.constant 12 : i32
    %775 = vector.broadcast %c12_i32_159 : i32 to vector<1x256xi32>
    %776 = arith.cmpi slt, %1, %775 : vector<1x256xi32>
    %c12_i32_160 = arith.constant 12 : i32
    %777 = vector.broadcast %c12_i32_160 : i32 to vector<1x256xi32>
    %778 = arith.cmpi slt, %2, %777 : vector<1x256xi32>
    %779 = arith.andi %776, %778 : vector<1x256xi1>
    %cst_161 = arith.constant 0.000000e+00 : f32
    %780 = vector.shape_cast %779 : vector<1x256xi1> to vector<1x256xi1>
    %781 = vector.broadcast %780 : vector<1x256xi1> to vector<8x256xi1>
    %782 = vector.broadcast %cst_161 : f32 to vector<8x256xf32>
    %783 = arith.select %781, %774, %782 : vector<8x256xi1>, vector<8x256xf32>
    %784 = vector.extract_strided_slice %186 {offsets = [0, 24], sizes = [8, 1], strides = [1, 1]} : vector<8x25xf32> to vector<8x1xf32>
    %785 = vector.broadcast %784 : vector<8x1xf32> to vector<8x256xf32>
    %786 = arith.mulf %783, %785 : vector<8x256xf32>
    %787 = arith.addf %759, %786 : vector<8x256xf32>
    %788 = arith.addf %570, %583 : vector<8x256xf32>
    %789 = arith.addf %698, %684 : vector<8x256xf32>
    %790 = arith.addf %787, %773 : vector<8x256xf32>
    %c0_162 = arith.constant 0 : index
    %c0_163 = arith.constant 0 : index
    %791 = vector.load %arg6[%c0_162, %c0_163] : memref<8x8xf32, #tpu.memory_space<vmem>>, vector<8x8xf32>
    %792 = vector.extract_strided_slice %788 {offsets = [0, 0], sizes = [1, 256], strides = [1, 1]} : vector<8x256xf32> to vector<1x256xf32>
    %793 = vector.extract_strided_slice %791 {offsets = [0, 0], sizes = [8, 1], strides = [1, 1]} : vector<8x8xf32> to vector<8x1xf32>
    %794 = vector.broadcast %792 : vector<1x256xf32> to vector<8x256xf32>
    %795 = vector.broadcast %793 : vector<8x1xf32> to vector<8x256xf32>
    %796 = arith.mulf %794, %795 : vector<8x256xf32>
    %797 = vector.extract_strided_slice %788 {offsets = [1, 0], sizes = [1, 256], strides = [1, 1]} : vector<8x256xf32> to vector<1x256xf32>
    %798 = vector.extract_strided_slice %791 {offsets = [0, 1], sizes = [8, 1], strides = [1, 1]} : vector<8x8xf32> to vector<8x1xf32>
    %799 = vector.broadcast %797 : vector<1x256xf32> to vector<8x256xf32>
    %800 = vector.broadcast %798 : vector<8x1xf32> to vector<8x256xf32>
    %801 = arith.mulf %799, %800 : vector<8x256xf32>
    %802 = vector.extract_strided_slice %788 {offsets = [2, 0], sizes = [1, 256], strides = [1, 1]} : vector<8x256xf32> to vector<1x256xf32>
    %803 = vector.extract_strided_slice %791 {offsets = [0, 2], sizes = [8, 1], strides = [1, 1]} : vector<8x8xf32> to vector<8x1xf32>
    %804 = vector.broadcast %802 : vector<1x256xf32> to vector<8x256xf32>
    %805 = vector.broadcast %803 : vector<8x1xf32> to vector<8x256xf32>
    %806 = arith.mulf %804, %805 : vector<8x256xf32>
    %807 = arith.addf %796, %806 : vector<8x256xf32>
    %808 = vector.extract_strided_slice %788 {offsets = [3, 0], sizes = [1, 256], strides = [1, 1]} : vector<8x256xf32> to vector<1x256xf32>
    %809 = vector.extract_strided_slice %791 {offsets = [0, 3], sizes = [8, 1], strides = [1, 1]} : vector<8x8xf32> to vector<8x1xf32>
    %810 = vector.broadcast %808 : vector<1x256xf32> to vector<8x256xf32>
    %811 = vector.broadcast %809 : vector<8x1xf32> to vector<8x256xf32>
    %812 = arith.mulf %810, %811 : vector<8x256xf32>
    %813 = arith.addf %801, %812 : vector<8x256xf32>
    %814 = vector.extract_strided_slice %788 {offsets = [4, 0], sizes = [1, 256], strides = [1, 1]} : vector<8x256xf32> to vector<1x256xf32>
    %815 = vector.extract_strided_slice %791 {offsets = [0, 4], sizes = [8, 1], strides = [1, 1]} : vector<8x8xf32> to vector<8x1xf32>
    %816 = vector.broadcast %814 : vector<1x256xf32> to vector<8x256xf32>
    %817 = vector.broadcast %815 : vector<8x1xf32> to vector<8x256xf32>
    %818 = arith.mulf %816, %817 : vector<8x256xf32>
    %819 = arith.addf %807, %818 : vector<8x256xf32>
    %820 = vector.extract_strided_slice %788 {offsets = [5, 0], sizes = [1, 256], strides = [1, 1]} : vector<8x256xf32> to vector<1x256xf32>
    %821 = vector.extract_strided_slice %791 {offsets = [0, 5], sizes = [8, 1], strides = [1, 1]} : vector<8x8xf32> to vector<8x1xf32>
    %822 = vector.broadcast %820 : vector<1x256xf32> to vector<8x256xf32>
    %823 = vector.broadcast %821 : vector<8x1xf32> to vector<8x256xf32>
    %824 = arith.mulf %822, %823 : vector<8x256xf32>
    %825 = arith.addf %813, %824 : vector<8x256xf32>
    %826 = vector.extract_strided_slice %788 {offsets = [6, 0], sizes = [1, 256], strides = [1, 1]} : vector<8x256xf32> to vector<1x256xf32>
    %827 = vector.extract_strided_slice %791 {offsets = [0, 6], sizes = [8, 1], strides = [1, 1]} : vector<8x8xf32> to vector<8x1xf32>
    %828 = vector.broadcast %826 : vector<1x256xf32> to vector<8x256xf32>
    %829 = vector.broadcast %827 : vector<8x1xf32> to vector<8x256xf32>
    %830 = arith.mulf %828, %829 : vector<8x256xf32>
    %831 = arith.addf %819, %830 : vector<8x256xf32>
    %832 = vector.extract_strided_slice %788 {offsets = [7, 0], sizes = [1, 256], strides = [1, 1]} : vector<8x256xf32> to vector<1x256xf32>
    %833 = vector.extract_strided_slice %791 {offsets = [0, 7], sizes = [8, 1], strides = [1, 1]} : vector<8x8xf32> to vector<8x1xf32>
    %834 = vector.broadcast %832 : vector<1x256xf32> to vector<8x256xf32>
    %835 = vector.broadcast %833 : vector<8x1xf32> to vector<8x256xf32>
    %836 = arith.mulf %834, %835 : vector<8x256xf32>
    %837 = arith.addf %825, %836 : vector<8x256xf32>
    %838 = arith.addf %831, %837 : vector<8x256xf32>
    %839 = arith.mulf %838, %838 : vector<8x256xf32>
    %c4_i32_164 = arith.constant 4 : i32
    %840 = tpu.dynamic_rotate %838 by %c4_i32_164 dim 0 : vector<8x256xf32>, i32 -> vector<8x256xf32>
    %841 = arith.addf %838, %840 : vector<8x256xf32>
    %c4_i32_165 = arith.constant 4 : i32
    %842 = tpu.dynamic_rotate %839 by %c4_i32_165 dim 0 : vector<8x256xf32>, i32 -> vector<8x256xf32>
    %843 = arith.addf %839, %842 : vector<8x256xf32>
    %cst_166 = arith.constant dense<0.000000e+00> : vector<8xf32>
    %844 = vector.multi_reduction <add>, %841, %cst_166 [1] : vector<8x256xf32> to vector<8xf32>
    %845 = vector.shape_cast %844 : vector<8xf32> to vector<8x1xf32>
    %cst_167 = arith.constant 0.001953125 : f32
    %846 = vector.broadcast %cst_167 : f32 to vector<8x1xf32>
    %847 = arith.mulf %845, %846 : vector<8x1xf32>
    %cst_168 = arith.constant dense<0.000000e+00> : vector<8xf32>
    %848 = vector.multi_reduction <add>, %843, %cst_168 [1] : vector<8x256xf32> to vector<8xf32>
    %849 = vector.shape_cast %848 : vector<8xf32> to vector<8x1xf32>
    %cst_169 = arith.constant 0.001953125 : f32
    %850 = vector.broadcast %cst_169 : f32 to vector<8x1xf32>
    %851 = arith.mulf %849, %850 : vector<8x1xf32>
    %852 = arith.mulf %847, %847 : vector<8x1xf32>
    %853 = arith.subf %851, %852 : vector<8x1xf32>
    %cst_170 = arith.constant 0.000000e+00 : f32
    %854 = vector.broadcast %cst_170 : f32 to vector<8x1xf32>
    %855 = arith.maximumf %853, %854 : vector<8x1xf32>
    %856 = vector.broadcast %847 : vector<8x1xf32> to vector<8x256xf32>
    %857 = arith.subf %838, %856 : vector<8x256xf32>
    %cst_171 = arith.constant 9.99999974E-6 : f32
    %858 = vector.broadcast %cst_171 : f32 to vector<8x1xf32>
    %859 = arith.addf %855, %858 : vector<8x1xf32>
    %860 = math.rsqrt %859 : vector<8x1xf32>
    %861 = vector.broadcast %860 : vector<8x1xf32> to vector<8x256xf32>
    %862 = arith.mulf %857, %861 : vector<8x256xf32>
    %cst_172 = arith.constant 0.000000e+00 : f32
    %863 = vector.broadcast %cst_172 : f32 to vector<8x256xf32>
    %864 = arith.maximumf %862, %863 : vector<8x256xf32>
    %c4 = arith.constant 4 : index
    %865 = memref.load %arg0[%c4] : memref<8xf32, #tpu.memory_space<smem>>
    %c0_173 = arith.constant 0 : index
    %c0_174 = arith.constant 0 : index
    %866 = vector.load %arg7[%c0_173, %c0_174] : memref<8x9xf32, #tpu.memory_space<vmem>>, vector<8x9xf32>
    %c17_i32_175 = arith.constant 17 : i32
    %867 = tpu.dynamic_rotate %864 by %c17_i32_175 dim 1 : vector<8x256xf32>, i32 -> vector<8x256xf32>
    %c1_i32_176 = arith.constant 1 : i32
    %868 = vector.broadcast %c1_i32_176 : i32 to vector<1x256xi32>
    %869 = arith.cmpi sge, %1, %868 : vector<1x256xi32>
    %c1_i32_177 = arith.constant 1 : i32
    %870 = vector.broadcast %c1_i32_177 : i32 to vector<1x256xi32>
    %871 = arith.cmpi sge, %2, %870 : vector<1x256xi32>
    %872 = arith.andi %869, %871 : vector<1x256xi1>
    %cst_178 = arith.constant 0.000000e+00 : f32
    %873 = vector.shape_cast %872 : vector<1x256xi1> to vector<1x256xi1>
    %874 = vector.broadcast %873 : vector<1x256xi1> to vector<8x256xi1>
    %875 = vector.broadcast %cst_178 : f32 to vector<8x256xf32>
    %876 = arith.select %874, %867, %875 : vector<8x256xi1>, vector<8x256xf32>
    %877 = vector.extract_strided_slice %866 {offsets = [0, 0], sizes = [8, 1], strides = [1, 1]} : vector<8x9xf32> to vector<8x1xf32>
    %878 = vector.broadcast %877 : vector<8x1xf32> to vector<8x256xf32>
    %879 = arith.mulf %876, %878 : vector<8x256xf32>
    %c16_i32_179 = arith.constant 16 : i32
    %880 = tpu.dynamic_rotate %864 by %c16_i32_179 dim 1 : vector<8x256xf32>, i32 -> vector<8x256xf32>
    %c1_i32_180 = arith.constant 1 : i32
    %881 = vector.broadcast %c1_i32_180 : i32 to vector<1x256xi32>
    %882 = arith.cmpi sge, %1, %881 : vector<1x256xi32>
    %cst_181 = arith.constant 0.000000e+00 : f32
    %883 = vector.shape_cast %882 : vector<1x256xi1> to vector<1x256xi1>
    %884 = vector.broadcast %883 : vector<1x256xi1> to vector<8x256xi1>
    %885 = vector.broadcast %cst_181 : f32 to vector<8x256xf32>
    %886 = arith.select %884, %880, %885 : vector<8x256xi1>, vector<8x256xf32>
    %887 = vector.extract_strided_slice %866 {offsets = [0, 1], sizes = [8, 1], strides = [1, 1]} : vector<8x9xf32> to vector<8x1xf32>
    %888 = vector.broadcast %887 : vector<8x1xf32> to vector<8x256xf32>
    %889 = arith.mulf %886, %888 : vector<8x256xf32>
    %c15_i32_182 = arith.constant 15 : i32
    %890 = tpu.dynamic_rotate %864 by %c15_i32_182 dim 1 : vector<8x256xf32>, i32 -> vector<8x256xf32>
    %c1_i32_183 = arith.constant 1 : i32
    %891 = vector.broadcast %c1_i32_183 : i32 to vector<1x256xi32>
    %892 = arith.cmpi sge, %1, %891 : vector<1x256xi32>
    %c15_i32_184 = arith.constant 15 : i32
    %893 = vector.broadcast %c15_i32_184 : i32 to vector<1x256xi32>
    %894 = arith.cmpi slt, %2, %893 : vector<1x256xi32>
    %895 = arith.andi %892, %894 : vector<1x256xi1>
    %cst_185 = arith.constant 0.000000e+00 : f32
    %896 = vector.shape_cast %895 : vector<1x256xi1> to vector<1x256xi1>
    %897 = vector.broadcast %896 : vector<1x256xi1> to vector<8x256xi1>
    %898 = vector.broadcast %cst_185 : f32 to vector<8x256xf32>
    %899 = arith.select %897, %890, %898 : vector<8x256xi1>, vector<8x256xf32>
    %900 = vector.extract_strided_slice %866 {offsets = [0, 2], sizes = [8, 1], strides = [1, 1]} : vector<8x9xf32> to vector<8x1xf32>
    %901 = vector.broadcast %900 : vector<8x1xf32> to vector<8x256xf32>
    %902 = arith.mulf %899, %901 : vector<8x256xf32>
    %903 = arith.addf %879, %902 : vector<8x256xf32>
    %c1_i32_186 = arith.constant 1 : i32
    %904 = tpu.dynamic_rotate %864 by %c1_i32_186 dim 1 : vector<8x256xf32>, i32 -> vector<8x256xf32>
    %c1_i32_187 = arith.constant 1 : i32
    %905 = vector.broadcast %c1_i32_187 : i32 to vector<1x256xi32>
    %906 = arith.cmpi sge, %2, %905 : vector<1x256xi32>
    %cst_188 = arith.constant 0.000000e+00 : f32
    %907 = vector.shape_cast %906 : vector<1x256xi1> to vector<1x256xi1>
    %908 = vector.broadcast %907 : vector<1x256xi1> to vector<8x256xi1>
    %909 = vector.broadcast %cst_188 : f32 to vector<8x256xf32>
    %910 = arith.select %908, %904, %909 : vector<8x256xi1>, vector<8x256xf32>
    %911 = vector.extract_strided_slice %866 {offsets = [0, 3], sizes = [8, 1], strides = [1, 1]} : vector<8x9xf32> to vector<8x1xf32>
    %912 = vector.broadcast %911 : vector<8x1xf32> to vector<8x256xf32>
    %913 = arith.mulf %910, %912 : vector<8x256xf32>
    %914 = arith.addf %889, %913 : vector<8x256xf32>
    %915 = vector.extract_strided_slice %866 {offsets = [0, 4], sizes = [8, 1], strides = [1, 1]} : vector<8x9xf32> to vector<8x1xf32>
    %916 = vector.broadcast %915 : vector<8x1xf32> to vector<8x256xf32>
    %917 = arith.mulf %864, %916 : vector<8x256xf32>
    %918 = arith.addf %903, %917 : vector<8x256xf32>
    %c255_i32_189 = arith.constant 255 : i32
    %919 = tpu.dynamic_rotate %864 by %c255_i32_189 dim 1 : vector<8x256xf32>, i32 -> vector<8x256xf32>
    %c15_i32_190 = arith.constant 15 : i32
    %920 = vector.broadcast %c15_i32_190 : i32 to vector<1x256xi32>
    %921 = arith.cmpi slt, %2, %920 : vector<1x256xi32>
    %cst_191 = arith.constant 0.000000e+00 : f32
    %922 = vector.shape_cast %921 : vector<1x256xi1> to vector<1x256xi1>
    %923 = vector.broadcast %922 : vector<1x256xi1> to vector<8x256xi1>
    %924 = vector.broadcast %cst_191 : f32 to vector<8x256xf32>
    %925 = arith.select %923, %919, %924 : vector<8x256xi1>, vector<8x256xf32>
    %926 = vector.extract_strided_slice %866 {offsets = [0, 5], sizes = [8, 1], strides = [1, 1]} : vector<8x9xf32> to vector<8x1xf32>
    %927 = vector.broadcast %926 : vector<8x1xf32> to vector<8x256xf32>
    %928 = arith.mulf %925, %927 : vector<8x256xf32>
    %929 = arith.addf %914, %928 : vector<8x256xf32>
    %c241_i32_192 = arith.constant 241 : i32
    %930 = tpu.dynamic_rotate %864 by %c241_i32_192 dim 1 : vector<8x256xf32>, i32 -> vector<8x256xf32>
    %c15_i32_193 = arith.constant 15 : i32
    %931 = vector.broadcast %c15_i32_193 : i32 to vector<1x256xi32>
    %932 = arith.cmpi slt, %1, %931 : vector<1x256xi32>
    %c1_i32_194 = arith.constant 1 : i32
    %933 = vector.broadcast %c1_i32_194 : i32 to vector<1x256xi32>
    %934 = arith.cmpi sge, %2, %933 : vector<1x256xi32>
    %935 = arith.andi %932, %934 : vector<1x256xi1>
    %cst_195 = arith.constant 0.000000e+00 : f32
    %936 = vector.shape_cast %935 : vector<1x256xi1> to vector<1x256xi1>
    %937 = vector.broadcast %936 : vector<1x256xi1> to vector<8x256xi1>
    %938 = vector.broadcast %cst_195 : f32 to vector<8x256xf32>
    %939 = arith.select %937, %930, %938 : vector<8x256xi1>, vector<8x256xf32>
    %940 = vector.extract_strided_slice %866 {offsets = [0, 6], sizes = [8, 1], strides = [1, 1]} : vector<8x9xf32> to vector<8x1xf32>
    %941 = vector.broadcast %940 : vector<8x1xf32> to vector<8x256xf32>
    %942 = arith.mulf %939, %941 : vector<8x256xf32>
    %943 = arith.addf %918, %942 : vector<8x256xf32>
    %c240_i32_196 = arith.constant 240 : i32
    %944 = tpu.dynamic_rotate %864 by %c240_i32_196 dim 1 : vector<8x256xf32>, i32 -> vector<8x256xf32>
    %c15_i32_197 = arith.constant 15 : i32
    %945 = vector.broadcast %c15_i32_197 : i32 to vector<1x256xi32>
    %946 = arith.cmpi slt, %1, %945 : vector<1x256xi32>
    %cst_198 = arith.constant 0.000000e+00 : f32
    %947 = vector.shape_cast %946 : vector<1x256xi1> to vector<1x256xi1>
    %948 = vector.broadcast %947 : vector<1x256xi1> to vector<8x256xi1>
    %949 = vector.broadcast %cst_198 : f32 to vector<8x256xf32>
    %950 = arith.select %948, %944, %949 : vector<8x256xi1>, vector<8x256xf32>
    %951 = vector.extract_strided_slice %866 {offsets = [0, 7], sizes = [8, 1], strides = [1, 1]} : vector<8x9xf32> to vector<8x1xf32>
    %952 = vector.broadcast %951 : vector<8x1xf32> to vector<8x256xf32>
    %953 = arith.mulf %950, %952 : vector<8x256xf32>
    %954 = arith.addf %929, %953 : vector<8x256xf32>
    %c239_i32_199 = arith.constant 239 : i32
    %955 = tpu.dynamic_rotate %864 by %c239_i32_199 dim 1 : vector<8x256xf32>, i32 -> vector<8x256xf32>
    %c15_i32_200 = arith.constant 15 : i32
    %956 = vector.broadcast %c15_i32_200 : i32 to vector<1x256xi32>
    %957 = arith.cmpi slt, %1, %956 : vector<1x256xi32>
    %c15_i32_201 = arith.constant 15 : i32
    %958 = vector.broadcast %c15_i32_201 : i32 to vector<1x256xi32>
    %959 = arith.cmpi slt, %2, %958 : vector<1x256xi32>
    %960 = arith.andi %957, %959 : vector<1x256xi1>
    %cst_202 = arith.constant 0.000000e+00 : f32
    %961 = vector.shape_cast %960 : vector<1x256xi1> to vector<1x256xi1>
    %962 = vector.broadcast %961 : vector<1x256xi1> to vector<8x256xi1>
    %963 = vector.broadcast %cst_202 : f32 to vector<8x256xf32>
    %964 = arith.select %962, %955, %963 : vector<8x256xi1>, vector<8x256xf32>
    %965 = vector.extract_strided_slice %866 {offsets = [0, 8], sizes = [8, 1], strides = [1, 1]} : vector<8x9xf32> to vector<8x1xf32>
    %966 = vector.broadcast %965 : vector<8x1xf32> to vector<8x256xf32>
    %967 = arith.mulf %964, %966 : vector<8x256xf32>
    %968 = arith.addf %943, %967 : vector<8x256xf32>
    %969 = arith.addf %968, %954 : vector<8x256xf32>
    %c0_203 = arith.constant 0 : index
    %c0_204 = arith.constant 0 : index
    %970 = vector.load %arg8[%c0_203, %c0_204] : memref<8x8xf32, #tpu.memory_space<vmem>>, vector<8x8xf32>
    %971 = vector.extract_strided_slice %969 {offsets = [0, 0], sizes = [1, 256], strides = [1, 1]} : vector<8x256xf32> to vector<1x256xf32>
    %972 = vector.extract_strided_slice %970 {offsets = [0, 0], sizes = [8, 1], strides = [1, 1]} : vector<8x8xf32> to vector<8x1xf32>
    %973 = vector.broadcast %971 : vector<1x256xf32> to vector<8x256xf32>
    %974 = vector.broadcast %972 : vector<8x1xf32> to vector<8x256xf32>
    %975 = arith.mulf %973, %974 : vector<8x256xf32>
    %976 = vector.extract_strided_slice %969 {offsets = [1, 0], sizes = [1, 256], strides = [1, 1]} : vector<8x256xf32> to vector<1x256xf32>
    %977 = vector.extract_strided_slice %970 {offsets = [0, 1], sizes = [8, 1], strides = [1, 1]} : vector<8x8xf32> to vector<8x1xf32>
    %978 = vector.broadcast %976 : vector<1x256xf32> to vector<8x256xf32>
    %979 = vector.broadcast %977 : vector<8x1xf32> to vector<8x256xf32>
    %980 = arith.mulf %978, %979 : vector<8x256xf32>
    %981 = vector.extract_strided_slice %969 {offsets = [2, 0], sizes = [1, 256], strides = [1, 1]} : vector<8x256xf32> to vector<1x256xf32>
    %982 = vector.extract_strided_slice %970 {offsets = [0, 2], sizes = [8, 1], strides = [1, 1]} : vector<8x8xf32> to vector<8x1xf32>
    %983 = vector.broadcast %981 : vector<1x256xf32> to vector<8x256xf32>
    %984 = vector.broadcast %982 : vector<8x1xf32> to vector<8x256xf32>
    %985 = arith.mulf %983, %984 : vector<8x256xf32>
    %986 = arith.addf %975, %985 : vector<8x256xf32>
    %987 = vector.extract_strided_slice %969 {offsets = [3, 0], sizes = [1, 256], strides = [1, 1]} : vector<8x256xf32> to vector<1x256xf32>
    %988 = vector.extract_strided_slice %970 {offsets = [0, 3], sizes = [8, 1], strides = [1, 1]} : vector<8x8xf32> to vector<8x1xf32>
    %989 = vector.broadcast %987 : vector<1x256xf32> to vector<8x256xf32>
    %990 = vector.broadcast %988 : vector<8x1xf32> to vector<8x256xf32>
    %991 = arith.mulf %989, %990 : vector<8x256xf32>
    %992 = arith.addf %980, %991 : vector<8x256xf32>
    %993 = vector.extract_strided_slice %969 {offsets = [4, 0], sizes = [1, 256], strides = [1, 1]} : vector<8x256xf32> to vector<1x256xf32>
    %994 = vector.extract_strided_slice %970 {offsets = [0, 4], sizes = [8, 1], strides = [1, 1]} : vector<8x8xf32> to vector<8x1xf32>
    %995 = vector.broadcast %993 : vector<1x256xf32> to vector<8x256xf32>
    %996 = vector.broadcast %994 : vector<8x1xf32> to vector<8x256xf32>
    %997 = arith.mulf %995, %996 : vector<8x256xf32>
    %998 = arith.addf %986, %997 : vector<8x256xf32>
    %999 = vector.extract_strided_slice %969 {offsets = [5, 0], sizes = [1, 256], strides = [1, 1]} : vector<8x256xf32> to vector<1x256xf32>
    %1000 = vector.extract_strided_slice %970 {offsets = [0, 5], sizes = [8, 1], strides = [1, 1]} : vector<8x8xf32> to vector<8x1xf32>
    %1001 = vector.broadcast %999 : vector<1x256xf32> to vector<8x256xf32>
    %1002 = vector.broadcast %1000 : vector<8x1xf32> to vector<8x256xf32>
    %1003 = arith.mulf %1001, %1002 : vector<8x256xf32>
    %1004 = arith.addf %992, %1003 : vector<8x256xf32>
    %1005 = vector.extract_strided_slice %969 {offsets = [6, 0], sizes = [1, 256], strides = [1, 1]} : vector<8x256xf32> to vector<1x256xf32>
    %1006 = vector.extract_strided_slice %970 {offsets = [0, 6], sizes = [8, 1], strides = [1, 1]} : vector<8x8xf32> to vector<8x1xf32>
    %1007 = vector.broadcast %1005 : vector<1x256xf32> to vector<8x256xf32>
    %1008 = vector.broadcast %1006 : vector<8x1xf32> to vector<8x256xf32>
    %1009 = arith.mulf %1007, %1008 : vector<8x256xf32>
    %1010 = arith.addf %998, %1009 : vector<8x256xf32>
    %1011 = vector.extract_strided_slice %969 {offsets = [7, 0], sizes = [1, 256], strides = [1, 1]} : vector<8x256xf32> to vector<1x256xf32>
    %1012 = vector.extract_strided_slice %970 {offsets = [0, 7], sizes = [8, 1], strides = [1, 1]} : vector<8x8xf32> to vector<8x1xf32>
    %1013 = vector.broadcast %1011 : vector<1x256xf32> to vector<8x256xf32>
    %1014 = vector.broadcast %1012 : vector<8x1xf32> to vector<8x256xf32>
    %1015 = arith.mulf %1013, %1014 : vector<8x256xf32>
    %1016 = arith.addf %1004, %1015 : vector<8x256xf32>
    %1017 = arith.addf %1010, %1016 : vector<8x256xf32>
    %1018 = arith.mulf %1017, %1017 : vector<8x256xf32>
    %c4_i32_205 = arith.constant 4 : i32
    %1019 = tpu.dynamic_rotate %1017 by %c4_i32_205 dim 0 : vector<8x256xf32>, i32 -> vector<8x256xf32>
    %1020 = arith.addf %1017, %1019 : vector<8x256xf32>
    %c4_i32_206 = arith.constant 4 : i32
    %1021 = tpu.dynamic_rotate %1018 by %c4_i32_206 dim 0 : vector<8x256xf32>, i32 -> vector<8x256xf32>
    %1022 = arith.addf %1018, %1021 : vector<8x256xf32>
    %cst_207 = arith.constant dense<0.000000e+00> : vector<8xf32>
    %1023 = vector.multi_reduction <add>, %1020, %cst_207 [1] : vector<8x256xf32> to vector<8xf32>
    %1024 = vector.shape_cast %1023 : vector<8xf32> to vector<8x1xf32>
    %cst_208 = arith.constant 0.001953125 : f32
    %1025 = vector.broadcast %cst_208 : f32 to vector<8x1xf32>
    %1026 = arith.mulf %1024, %1025 : vector<8x1xf32>
    %cst_209 = arith.constant dense<0.000000e+00> : vector<8xf32>
    %1027 = vector.multi_reduction <add>, %1022, %cst_209 [1] : vector<8x256xf32> to vector<8xf32>
    %1028 = vector.shape_cast %1027 : vector<8xf32> to vector<8x1xf32>
    %cst_210 = arith.constant 0.001953125 : f32
    %1029 = vector.broadcast %cst_210 : f32 to vector<8x1xf32>
    %1030 = arith.mulf %1028, %1029 : vector<8x1xf32>
    %1031 = arith.mulf %1026, %1026 : vector<8x1xf32>
    %1032 = arith.subf %1030, %1031 : vector<8x1xf32>
    %cst_211 = arith.constant 0.000000e+00 : f32
    %1033 = vector.broadcast %cst_211 : f32 to vector<8x1xf32>
    %1034 = arith.maximumf %1032, %1033 : vector<8x1xf32>
    %1035 = vector.broadcast %1026 : vector<8x1xf32> to vector<8x256xf32>
    %1036 = arith.subf %1017, %1035 : vector<8x256xf32>
    %cst_212 = arith.constant 9.99999974E-6 : f32
    %1037 = vector.broadcast %cst_212 : f32 to vector<8x1xf32>
    %1038 = arith.addf %1034, %1037 : vector<8x1xf32>
    %1039 = math.rsqrt %1038 : vector<8x1xf32>
    %1040 = vector.broadcast %1039 : vector<8x1xf32> to vector<8x256xf32>
    %1041 = arith.mulf %1036, %1040 : vector<8x256xf32>
    %1042 = vector.broadcast %865 : f32 to vector<8x256xf32>
    %1043 = arith.mulf %1042, %1041 : vector<8x256xf32>
    %1044 = arith.addf %180, %1043 : vector<8x256xf32>
    %c0_213 = arith.constant 0 : index
    %c0_214 = arith.constant 0 : index
    %1045 = vector.load %arg10[%c0_213, %c0_214] : memref<8x8xf32, #tpu.memory_space<vmem>>, vector<8x8xf32>
    %1046 = vector.extract_strided_slice %789 {offsets = [0, 0], sizes = [1, 256], strides = [1, 1]} : vector<8x256xf32> to vector<1x256xf32>
    %1047 = vector.extract_strided_slice %1045 {offsets = [0, 0], sizes = [8, 1], strides = [1, 1]} : vector<8x8xf32> to vector<8x1xf32>
    %1048 = vector.broadcast %1046 : vector<1x256xf32> to vector<8x256xf32>
    %1049 = vector.broadcast %1047 : vector<8x1xf32> to vector<8x256xf32>
    %1050 = arith.mulf %1048, %1049 : vector<8x256xf32>
    %1051 = vector.extract_strided_slice %789 {offsets = [1, 0], sizes = [1, 256], strides = [1, 1]} : vector<8x256xf32> to vector<1x256xf32>
    %1052 = vector.extract_strided_slice %1045 {offsets = [0, 1], sizes = [8, 1], strides = [1, 1]} : vector<8x8xf32> to vector<8x1xf32>
    %1053 = vector.broadcast %1051 : vector<1x256xf32> to vector<8x256xf32>
    %1054 = vector.broadcast %1052 : vector<8x1xf32> to vector<8x256xf32>
    %1055 = arith.mulf %1053, %1054 : vector<8x256xf32>
    %1056 = vector.extract_strided_slice %789 {offsets = [2, 0], sizes = [1, 256], strides = [1, 1]} : vector<8x256xf32> to vector<1x256xf32>
    %1057 = vector.extract_strided_slice %1045 {offsets = [0, 2], sizes = [8, 1], strides = [1, 1]} : vector<8x8xf32> to vector<8x1xf32>
    %1058 = vector.broadcast %1056 : vector<1x256xf32> to vector<8x256xf32>
    %1059 = vector.broadcast %1057 : vector<8x1xf32> to vector<8x256xf32>
    %1060 = arith.mulf %1058, %1059 : vector<8x256xf32>
    %1061 = arith.addf %1050, %1060 : vector<8x256xf32>
    %1062 = vector.extract_strided_slice %789 {offsets = [3, 0], sizes = [1, 256], strides = [1, 1]} : vector<8x256xf32> to vector<1x256xf32>
    %1063 = vector.extract_strided_slice %1045 {offsets = [0, 3], sizes = [8, 1], strides = [1, 1]} : vector<8x8xf32> to vector<8x1xf32>
    %1064 = vector.broadcast %1062 : vector<1x256xf32> to vector<8x256xf32>
    %1065 = vector.broadcast %1063 : vector<8x1xf32> to vector<8x256xf32>
    %1066 = arith.mulf %1064, %1065 : vector<8x256xf32>
    %1067 = arith.addf %1055, %1066 : vector<8x256xf32>
    %1068 = vector.extract_strided_slice %789 {offsets = [4, 0], sizes = [1, 256], strides = [1, 1]} : vector<8x256xf32> to vector<1x256xf32>
    %1069 = vector.extract_strided_slice %1045 {offsets = [0, 4], sizes = [8, 1], strides = [1, 1]} : vector<8x8xf32> to vector<8x1xf32>
    %1070 = vector.broadcast %1068 : vector<1x256xf32> to vector<8x256xf32>
    %1071 = vector.broadcast %1069 : vector<8x1xf32> to vector<8x256xf32>
    %1072 = arith.mulf %1070, %1071 : vector<8x256xf32>
    %1073 = arith.addf %1061, %1072 : vector<8x256xf32>
    %1074 = vector.extract_strided_slice %789 {offsets = [5, 0], sizes = [1, 256], strides = [1, 1]} : vector<8x256xf32> to vector<1x256xf32>
    %1075 = vector.extract_strided_slice %1045 {offsets = [0, 5], sizes = [8, 1], strides = [1, 1]} : vector<8x8xf32> to vector<8x1xf32>
    %1076 = vector.broadcast %1074 : vector<1x256xf32> to vector<8x256xf32>
    %1077 = vector.broadcast %1075 : vector<8x1xf32> to vector<8x256xf32>
    %1078 = arith.mulf %1076, %1077 : vector<8x256xf32>
    %1079 = arith.addf %1067, %1078 : vector<8x256xf32>
    %1080 = vector.extract_strided_slice %789 {offsets = [6, 0], sizes = [1, 256], strides = [1, 1]} : vector<8x256xf32> to vector<1x256xf32>
    %1081 = vector.extract_strided_slice %1045 {offsets = [0, 6], sizes = [8, 1], strides = [1, 1]} : vector<8x8xf32> to vector<8x1xf32>
    %1082 = vector.broadcast %1080 : vector<1x256xf32> to vector<8x256xf32>
    %1083 = vector.broadcast %1081 : vector<8x1xf32> to vector<8x256xf32>
    %1084 = arith.mulf %1082, %1083 : vector<8x256xf32>
    %1085 = arith.addf %1073, %1084 : vector<8x256xf32>
    %1086 = vector.extract_strided_slice %789 {offsets = [7, 0], sizes = [1, 256], strides = [1, 1]} : vector<8x256xf32> to vector<1x256xf32>
    %1087 = vector.extract_strided_slice %1045 {offsets = [0, 7], sizes = [8, 1], strides = [1, 1]} : vector<8x8xf32> to vector<8x1xf32>
    %1088 = vector.broadcast %1086 : vector<1x256xf32> to vector<8x256xf32>
    %1089 = vector.broadcast %1087 : vector<8x1xf32> to vector<8x256xf32>
    %1090 = arith.mulf %1088, %1089 : vector<8x256xf32>
    %1091 = arith.addf %1079, %1090 : vector<8x256xf32>
    %1092 = arith.addf %1085, %1091 : vector<8x256xf32>
    %1093 = arith.mulf %1092, %1092 : vector<8x256xf32>
    %c4_i32_215 = arith.constant 4 : i32
    %1094 = tpu.dynamic_rotate %1092 by %c4_i32_215 dim 0 : vector<8x256xf32>, i32 -> vector<8x256xf32>
    %1095 = arith.addf %1092, %1094 : vector<8x256xf32>
    %c4_i32_216 = arith.constant 4 : i32
    %1096 = tpu.dynamic_rotate %1093 by %c4_i32_216 dim 0 : vector<8x256xf32>, i32 -> vector<8x256xf32>
    %1097 = arith.addf %1093, %1096 : vector<8x256xf32>
    %cst_217 = arith.constant dense<0.000000e+00> : vector<8xf32>
    %1098 = vector.multi_reduction <add>, %1095, %cst_217 [1] : vector<8x256xf32> to vector<8xf32>
    %1099 = vector.shape_cast %1098 : vector<8xf32> to vector<8x1xf32>
    %cst_218 = arith.constant 0.001953125 : f32
    %1100 = vector.broadcast %cst_218 : f32 to vector<8x1xf32>
    %1101 = arith.mulf %1099, %1100 : vector<8x1xf32>
    %cst_219 = arith.constant dense<0.000000e+00> : vector<8xf32>
    %1102 = vector.multi_reduction <add>, %1097, %cst_219 [1] : vector<8x256xf32> to vector<8xf32>
    %1103 = vector.shape_cast %1102 : vector<8xf32> to vector<8x1xf32>
    %cst_220 = arith.constant 0.001953125 : f32
    %1104 = vector.broadcast %cst_220 : f32 to vector<8x1xf32>
    %1105 = arith.mulf %1103, %1104 : vector<8x1xf32>
    %1106 = arith.mulf %1101, %1101 : vector<8x1xf32>
    %1107 = arith.subf %1105, %1106 : vector<8x1xf32>
    %cst_221 = arith.constant 0.000000e+00 : f32
    %1108 = vector.broadcast %cst_221 : f32 to vector<8x1xf32>
    %1109 = arith.maximumf %1107, %1108 : vector<8x1xf32>
    %1110 = vector.broadcast %1101 : vector<8x1xf32> to vector<8x256xf32>
    %1111 = arith.subf %1092, %1110 : vector<8x256xf32>
    %cst_222 = arith.constant 9.99999974E-6 : f32
    %1112 = vector.broadcast %cst_222 : f32 to vector<8x1xf32>
    %1113 = arith.addf %1109, %1112 : vector<8x1xf32>
    %1114 = math.rsqrt %1113 : vector<8x1xf32>
    %1115 = vector.broadcast %1114 : vector<8x1xf32> to vector<8x256xf32>
    %1116 = arith.mulf %1111, %1115 : vector<8x256xf32>
    %cst_223 = arith.constant 0.000000e+00 : f32
    %1117 = vector.broadcast %cst_223 : f32 to vector<8x256xf32>
    %1118 = arith.maximumf %1116, %1117 : vector<8x256xf32>
    %c5 = arith.constant 5 : index
    %1119 = memref.load %arg0[%c5] : memref<8xf32, #tpu.memory_space<smem>>
    %c0_224 = arith.constant 0 : index
    %c0_225 = arith.constant 0 : index
    %1120 = vector.load %arg11[%c0_224, %c0_225] : memref<8x25xf32, #tpu.memory_space<vmem>>, vector<8x25xf32>
    %c34_i32_226 = arith.constant 34 : i32
    %1121 = tpu.dynamic_rotate %1118 by %c34_i32_226 dim 1 : vector<8x256xf32>, i32 -> vector<8x256xf32>
    %c2_i32_227 = arith.constant 2 : i32
    %1122 = vector.broadcast %c2_i32_227 : i32 to vector<1x256xi32>
    %1123 = arith.cmpi sge, %1, %1122 : vector<1x256xi32>
    %c2_i32_228 = arith.constant 2 : i32
    %1124 = vector.broadcast %c2_i32_228 : i32 to vector<1x256xi32>
    %1125 = arith.cmpi sge, %2, %1124 : vector<1x256xi32>
    %1126 = arith.andi %1123, %1125 : vector<1x256xi1>
    %cst_229 = arith.constant 0.000000e+00 : f32
    %1127 = vector.shape_cast %1126 : vector<1x256xi1> to vector<1x256xi1>
    %1128 = vector.broadcast %1127 : vector<1x256xi1> to vector<8x256xi1>
    %1129 = vector.broadcast %cst_229 : f32 to vector<8x256xf32>
    %1130 = arith.select %1128, %1121, %1129 : vector<8x256xi1>, vector<8x256xf32>
    %1131 = vector.extract_strided_slice %1120 {offsets = [0, 0], sizes = [8, 1], strides = [1, 1]} : vector<8x25xf32> to vector<8x1xf32>
    %1132 = vector.broadcast %1131 : vector<8x1xf32> to vector<8x256xf32>
    %1133 = arith.mulf %1130, %1132 : vector<8x256xf32>
    %c33_i32_230 = arith.constant 33 : i32
    %1134 = tpu.dynamic_rotate %1118 by %c33_i32_230 dim 1 : vector<8x256xf32>, i32 -> vector<8x256xf32>
    %c2_i32_231 = arith.constant 2 : i32
    %1135 = vector.broadcast %c2_i32_231 : i32 to vector<1x256xi32>
    %1136 = arith.cmpi sge, %1, %1135 : vector<1x256xi32>
    %c1_i32_232 = arith.constant 1 : i32
    %1137 = vector.broadcast %c1_i32_232 : i32 to vector<1x256xi32>
    %1138 = arith.cmpi sge, %2, %1137 : vector<1x256xi32>
    %1139 = arith.andi %1136, %1138 : vector<1x256xi1>
    %cst_233 = arith.constant 0.000000e+00 : f32
    %1140 = vector.shape_cast %1139 : vector<1x256xi1> to vector<1x256xi1>
    %1141 = vector.broadcast %1140 : vector<1x256xi1> to vector<8x256xi1>
    %1142 = vector.broadcast %cst_233 : f32 to vector<8x256xf32>
    %1143 = arith.select %1141, %1134, %1142 : vector<8x256xi1>, vector<8x256xf32>
    %1144 = vector.extract_strided_slice %1120 {offsets = [0, 1], sizes = [8, 1], strides = [1, 1]} : vector<8x25xf32> to vector<8x1xf32>
    %1145 = vector.broadcast %1144 : vector<8x1xf32> to vector<8x256xf32>
    %1146 = arith.mulf %1143, %1145 : vector<8x256xf32>
    %c32_i32_234 = arith.constant 32 : i32
    %1147 = tpu.dynamic_rotate %1118 by %c32_i32_234 dim 1 : vector<8x256xf32>, i32 -> vector<8x256xf32>
    %c2_i32_235 = arith.constant 2 : i32
    %1148 = vector.broadcast %c2_i32_235 : i32 to vector<1x256xi32>
    %1149 = arith.cmpi sge, %1, %1148 : vector<1x256xi32>
    %cst_236 = arith.constant 0.000000e+00 : f32
    %1150 = vector.shape_cast %1149 : vector<1x256xi1> to vector<1x256xi1>
    %1151 = vector.broadcast %1150 : vector<1x256xi1> to vector<8x256xi1>
    %1152 = vector.broadcast %cst_236 : f32 to vector<8x256xf32>
    %1153 = arith.select %1151, %1147, %1152 : vector<8x256xi1>, vector<8x256xf32>
    %1154 = vector.extract_strided_slice %1120 {offsets = [0, 2], sizes = [8, 1], strides = [1, 1]} : vector<8x25xf32> to vector<8x1xf32>
    %1155 = vector.broadcast %1154 : vector<8x1xf32> to vector<8x256xf32>
    %1156 = arith.mulf %1153, %1155 : vector<8x256xf32>
    %1157 = arith.addf %1133, %1156 : vector<8x256xf32>
    %c31_i32_237 = arith.constant 31 : i32
    %1158 = tpu.dynamic_rotate %1118 by %c31_i32_237 dim 1 : vector<8x256xf32>, i32 -> vector<8x256xf32>
    %c2_i32_238 = arith.constant 2 : i32
    %1159 = vector.broadcast %c2_i32_238 : i32 to vector<1x256xi32>
    %1160 = arith.cmpi sge, %1, %1159 : vector<1x256xi32>
    %c15_i32_239 = arith.constant 15 : i32
    %1161 = vector.broadcast %c15_i32_239 : i32 to vector<1x256xi32>
    %1162 = arith.cmpi slt, %2, %1161 : vector<1x256xi32>
    %1163 = arith.andi %1160, %1162 : vector<1x256xi1>
    %cst_240 = arith.constant 0.000000e+00 : f32
    %1164 = vector.shape_cast %1163 : vector<1x256xi1> to vector<1x256xi1>
    %1165 = vector.broadcast %1164 : vector<1x256xi1> to vector<8x256xi1>
    %1166 = vector.broadcast %cst_240 : f32 to vector<8x256xf32>
    %1167 = arith.select %1165, %1158, %1166 : vector<8x256xi1>, vector<8x256xf32>
    %1168 = vector.extract_strided_slice %1120 {offsets = [0, 3], sizes = [8, 1], strides = [1, 1]} : vector<8x25xf32> to vector<8x1xf32>
    %1169 = vector.broadcast %1168 : vector<8x1xf32> to vector<8x256xf32>
    %1170 = arith.mulf %1167, %1169 : vector<8x256xf32>
    %1171 = arith.addf %1146, %1170 : vector<8x256xf32>
    %c30_i32_241 = arith.constant 30 : i32
    %1172 = tpu.dynamic_rotate %1118 by %c30_i32_241 dim 1 : vector<8x256xf32>, i32 -> vector<8x256xf32>
    %c2_i32_242 = arith.constant 2 : i32
    %1173 = vector.broadcast %c2_i32_242 : i32 to vector<1x256xi32>
    %1174 = arith.cmpi sge, %1, %1173 : vector<1x256xi32>
    %c14_i32_243 = arith.constant 14 : i32
    %1175 = vector.broadcast %c14_i32_243 : i32 to vector<1x256xi32>
    %1176 = arith.cmpi slt, %2, %1175 : vector<1x256xi32>
    %1177 = arith.andi %1174, %1176 : vector<1x256xi1>
    %cst_244 = arith.constant 0.000000e+00 : f32
    %1178 = vector.shape_cast %1177 : vector<1x256xi1> to vector<1x256xi1>
    %1179 = vector.broadcast %1178 : vector<1x256xi1> to vector<8x256xi1>
    %1180 = vector.broadcast %cst_244 : f32 to vector<8x256xf32>
    %1181 = arith.select %1179, %1172, %1180 : vector<8x256xi1>, vector<8x256xf32>
    %1182 = vector.extract_strided_slice %1120 {offsets = [0, 4], sizes = [8, 1], strides = [1, 1]} : vector<8x25xf32> to vector<8x1xf32>
    %1183 = vector.broadcast %1182 : vector<8x1xf32> to vector<8x256xf32>
    %1184 = arith.mulf %1181, %1183 : vector<8x256xf32>
    %1185 = arith.addf %1157, %1184 : vector<8x256xf32>
    %c18_i32_245 = arith.constant 18 : i32
    %1186 = tpu.dynamic_rotate %1118 by %c18_i32_245 dim 1 : vector<8x256xf32>, i32 -> vector<8x256xf32>
    %c1_i32_246 = arith.constant 1 : i32
    %1187 = vector.broadcast %c1_i32_246 : i32 to vector<1x256xi32>
    %1188 = arith.cmpi sge, %1, %1187 : vector<1x256xi32>
    %c2_i32_247 = arith.constant 2 : i32
    %1189 = vector.broadcast %c2_i32_247 : i32 to vector<1x256xi32>
    %1190 = arith.cmpi sge, %2, %1189 : vector<1x256xi32>
    %1191 = arith.andi %1188, %1190 : vector<1x256xi1>
    %cst_248 = arith.constant 0.000000e+00 : f32
    %1192 = vector.shape_cast %1191 : vector<1x256xi1> to vector<1x256xi1>
    %1193 = vector.broadcast %1192 : vector<1x256xi1> to vector<8x256xi1>
    %1194 = vector.broadcast %cst_248 : f32 to vector<8x256xf32>
    %1195 = arith.select %1193, %1186, %1194 : vector<8x256xi1>, vector<8x256xf32>
    %1196 = vector.extract_strided_slice %1120 {offsets = [0, 5], sizes = [8, 1], strides = [1, 1]} : vector<8x25xf32> to vector<8x1xf32>
    %1197 = vector.broadcast %1196 : vector<8x1xf32> to vector<8x256xf32>
    %1198 = arith.mulf %1195, %1197 : vector<8x256xf32>
    %1199 = arith.addf %1171, %1198 : vector<8x256xf32>
    %c17_i32_249 = arith.constant 17 : i32
    %1200 = tpu.dynamic_rotate %1118 by %c17_i32_249 dim 1 : vector<8x256xf32>, i32 -> vector<8x256xf32>
    %cst_250 = arith.constant 0.000000e+00 : f32
    %1201 = vector.shape_cast %872 : vector<1x256xi1> to vector<1x256xi1>
    %1202 = vector.broadcast %1201 : vector<1x256xi1> to vector<8x256xi1>
    %1203 = vector.broadcast %cst_250 : f32 to vector<8x256xf32>
    %1204 = arith.select %1202, %1200, %1203 : vector<8x256xi1>, vector<8x256xf32>
    %1205 = vector.extract_strided_slice %1120 {offsets = [0, 6], sizes = [8, 1], strides = [1, 1]} : vector<8x25xf32> to vector<8x1xf32>
    %1206 = vector.broadcast %1205 : vector<8x1xf32> to vector<8x256xf32>
    %1207 = arith.mulf %1204, %1206 : vector<8x256xf32>
    %1208 = arith.addf %1185, %1207 : vector<8x256xf32>
    %c16_i32_251 = arith.constant 16 : i32
    %1209 = tpu.dynamic_rotate %1118 by %c16_i32_251 dim 1 : vector<8x256xf32>, i32 -> vector<8x256xf32>
    %cst_252 = arith.constant 0.000000e+00 : f32
    %1210 = vector.shape_cast %882 : vector<1x256xi1> to vector<1x256xi1>
    %1211 = vector.broadcast %1210 : vector<1x256xi1> to vector<8x256xi1>
    %1212 = vector.broadcast %cst_252 : f32 to vector<8x256xf32>
    %1213 = arith.select %1211, %1209, %1212 : vector<8x256xi1>, vector<8x256xf32>
    %1214 = vector.extract_strided_slice %1120 {offsets = [0, 7], sizes = [8, 1], strides = [1, 1]} : vector<8x25xf32> to vector<8x1xf32>
    %1215 = vector.broadcast %1214 : vector<8x1xf32> to vector<8x256xf32>
    %1216 = arith.mulf %1213, %1215 : vector<8x256xf32>
    %1217 = arith.addf %1199, %1216 : vector<8x256xf32>
    %c15_i32_253 = arith.constant 15 : i32
    %1218 = tpu.dynamic_rotate %1118 by %c15_i32_253 dim 1 : vector<8x256xf32>, i32 -> vector<8x256xf32>
    %cst_254 = arith.constant 0.000000e+00 : f32
    %1219 = vector.shape_cast %895 : vector<1x256xi1> to vector<1x256xi1>
    %1220 = vector.broadcast %1219 : vector<1x256xi1> to vector<8x256xi1>
    %1221 = vector.broadcast %cst_254 : f32 to vector<8x256xf32>
    %1222 = arith.select %1220, %1218, %1221 : vector<8x256xi1>, vector<8x256xf32>
    %1223 = vector.extract_strided_slice %1120 {offsets = [0, 8], sizes = [8, 1], strides = [1, 1]} : vector<8x25xf32> to vector<8x1xf32>
    %1224 = vector.broadcast %1223 : vector<8x1xf32> to vector<8x256xf32>
    %1225 = arith.mulf %1222, %1224 : vector<8x256xf32>
    %1226 = arith.addf %1208, %1225 : vector<8x256xf32>
    %c14_i32_255 = arith.constant 14 : i32
    %1227 = tpu.dynamic_rotate %1118 by %c14_i32_255 dim 1 : vector<8x256xf32>, i32 -> vector<8x256xf32>
    %c1_i32_256 = arith.constant 1 : i32
    %1228 = vector.broadcast %c1_i32_256 : i32 to vector<1x256xi32>
    %1229 = arith.cmpi sge, %1, %1228 : vector<1x256xi32>
    %c14_i32_257 = arith.constant 14 : i32
    %1230 = vector.broadcast %c14_i32_257 : i32 to vector<1x256xi32>
    %1231 = arith.cmpi slt, %2, %1230 : vector<1x256xi32>
    %1232 = arith.andi %1229, %1231 : vector<1x256xi1>
    %cst_258 = arith.constant 0.000000e+00 : f32
    %1233 = vector.shape_cast %1232 : vector<1x256xi1> to vector<1x256xi1>
    %1234 = vector.broadcast %1233 : vector<1x256xi1> to vector<8x256xi1>
    %1235 = vector.broadcast %cst_258 : f32 to vector<8x256xf32>
    %1236 = arith.select %1234, %1227, %1235 : vector<8x256xi1>, vector<8x256xf32>
    %1237 = vector.extract_strided_slice %1120 {offsets = [0, 9], sizes = [8, 1], strides = [1, 1]} : vector<8x25xf32> to vector<8x1xf32>
    %1238 = vector.broadcast %1237 : vector<8x1xf32> to vector<8x256xf32>
    %1239 = arith.mulf %1236, %1238 : vector<8x256xf32>
    %1240 = arith.addf %1217, %1239 : vector<8x256xf32>
    %c2_i32_259 = arith.constant 2 : i32
    %1241 = tpu.dynamic_rotate %1118 by %c2_i32_259 dim 1 : vector<8x256xf32>, i32 -> vector<8x256xf32>
    %c2_i32_260 = arith.constant 2 : i32
    %1242 = vector.broadcast %c2_i32_260 : i32 to vector<1x256xi32>
    %1243 = arith.cmpi sge, %2, %1242 : vector<1x256xi32>
    %cst_261 = arith.constant 0.000000e+00 : f32
    %1244 = vector.shape_cast %1243 : vector<1x256xi1> to vector<1x256xi1>
    %1245 = vector.broadcast %1244 : vector<1x256xi1> to vector<8x256xi1>
    %1246 = vector.broadcast %cst_261 : f32 to vector<8x256xf32>
    %1247 = arith.select %1245, %1241, %1246 : vector<8x256xi1>, vector<8x256xf32>
    %1248 = vector.extract_strided_slice %1120 {offsets = [0, 10], sizes = [8, 1], strides = [1, 1]} : vector<8x25xf32> to vector<8x1xf32>
    %1249 = vector.broadcast %1248 : vector<8x1xf32> to vector<8x256xf32>
    %1250 = arith.mulf %1247, %1249 : vector<8x256xf32>
    %1251 = arith.addf %1226, %1250 : vector<8x256xf32>
    %c1_i32_262 = arith.constant 1 : i32
    %1252 = tpu.dynamic_rotate %1118 by %c1_i32_262 dim 1 : vector<8x256xf32>, i32 -> vector<8x256xf32>
    %cst_263 = arith.constant 0.000000e+00 : f32
    %1253 = vector.shape_cast %906 : vector<1x256xi1> to vector<1x256xi1>
    %1254 = vector.broadcast %1253 : vector<1x256xi1> to vector<8x256xi1>
    %1255 = vector.broadcast %cst_263 : f32 to vector<8x256xf32>
    %1256 = arith.select %1254, %1252, %1255 : vector<8x256xi1>, vector<8x256xf32>
    %1257 = vector.extract_strided_slice %1120 {offsets = [0, 11], sizes = [8, 1], strides = [1, 1]} : vector<8x25xf32> to vector<8x1xf32>
    %1258 = vector.broadcast %1257 : vector<8x1xf32> to vector<8x256xf32>
    %1259 = arith.mulf %1256, %1258 : vector<8x256xf32>
    %1260 = arith.addf %1240, %1259 : vector<8x256xf32>
    %1261 = vector.extract_strided_slice %1120 {offsets = [0, 12], sizes = [8, 1], strides = [1, 1]} : vector<8x25xf32> to vector<8x1xf32>
    %1262 = vector.broadcast %1261 : vector<8x1xf32> to vector<8x256xf32>
    %1263 = arith.mulf %1118, %1262 : vector<8x256xf32>
    %1264 = arith.addf %1251, %1263 : vector<8x256xf32>
    %c255_i32_264 = arith.constant 255 : i32
    %1265 = tpu.dynamic_rotate %1118 by %c255_i32_264 dim 1 : vector<8x256xf32>, i32 -> vector<8x256xf32>
    %cst_265 = arith.constant 0.000000e+00 : f32
    %1266 = vector.shape_cast %921 : vector<1x256xi1> to vector<1x256xi1>
    %1267 = vector.broadcast %1266 : vector<1x256xi1> to vector<8x256xi1>
    %1268 = vector.broadcast %cst_265 : f32 to vector<8x256xf32>
    %1269 = arith.select %1267, %1265, %1268 : vector<8x256xi1>, vector<8x256xf32>
    %1270 = vector.extract_strided_slice %1120 {offsets = [0, 13], sizes = [8, 1], strides = [1, 1]} : vector<8x25xf32> to vector<8x1xf32>
    %1271 = vector.broadcast %1270 : vector<8x1xf32> to vector<8x256xf32>
    %1272 = arith.mulf %1269, %1271 : vector<8x256xf32>
    %1273 = arith.addf %1260, %1272 : vector<8x256xf32>
    %c254_i32_266 = arith.constant 254 : i32
    %1274 = tpu.dynamic_rotate %1118 by %c254_i32_266 dim 1 : vector<8x256xf32>, i32 -> vector<8x256xf32>
    %c14_i32_267 = arith.constant 14 : i32
    %1275 = vector.broadcast %c14_i32_267 : i32 to vector<1x256xi32>
    %1276 = arith.cmpi slt, %2, %1275 : vector<1x256xi32>
    %cst_268 = arith.constant 0.000000e+00 : f32
    %1277 = vector.shape_cast %1276 : vector<1x256xi1> to vector<1x256xi1>
    %1278 = vector.broadcast %1277 : vector<1x256xi1> to vector<8x256xi1>
    %1279 = vector.broadcast %cst_268 : f32 to vector<8x256xf32>
    %1280 = arith.select %1278, %1274, %1279 : vector<8x256xi1>, vector<8x256xf32>
    %1281 = vector.extract_strided_slice %1120 {offsets = [0, 14], sizes = [8, 1], strides = [1, 1]} : vector<8x25xf32> to vector<8x1xf32>
    %1282 = vector.broadcast %1281 : vector<8x1xf32> to vector<8x256xf32>
    %1283 = arith.mulf %1280, %1282 : vector<8x256xf32>
    %1284 = arith.addf %1264, %1283 : vector<8x256xf32>
    %c242_i32_269 = arith.constant 242 : i32
    %1285 = tpu.dynamic_rotate %1118 by %c242_i32_269 dim 1 : vector<8x256xf32>, i32 -> vector<8x256xf32>
    %c15_i32_270 = arith.constant 15 : i32
    %1286 = vector.broadcast %c15_i32_270 : i32 to vector<1x256xi32>
    %1287 = arith.cmpi slt, %1, %1286 : vector<1x256xi32>
    %c2_i32_271 = arith.constant 2 : i32
    %1288 = vector.broadcast %c2_i32_271 : i32 to vector<1x256xi32>
    %1289 = arith.cmpi sge, %2, %1288 : vector<1x256xi32>
    %1290 = arith.andi %1287, %1289 : vector<1x256xi1>
    %cst_272 = arith.constant 0.000000e+00 : f32
    %1291 = vector.shape_cast %1290 : vector<1x256xi1> to vector<1x256xi1>
    %1292 = vector.broadcast %1291 : vector<1x256xi1> to vector<8x256xi1>
    %1293 = vector.broadcast %cst_272 : f32 to vector<8x256xf32>
    %1294 = arith.select %1292, %1285, %1293 : vector<8x256xi1>, vector<8x256xf32>
    %1295 = vector.extract_strided_slice %1120 {offsets = [0, 15], sizes = [8, 1], strides = [1, 1]} : vector<8x25xf32> to vector<8x1xf32>
    %1296 = vector.broadcast %1295 : vector<8x1xf32> to vector<8x256xf32>
    %1297 = arith.mulf %1294, %1296 : vector<8x256xf32>
    %1298 = arith.addf %1273, %1297 : vector<8x256xf32>
    %c241_i32_273 = arith.constant 241 : i32
    %1299 = tpu.dynamic_rotate %1118 by %c241_i32_273 dim 1 : vector<8x256xf32>, i32 -> vector<8x256xf32>
    %cst_274 = arith.constant 0.000000e+00 : f32
    %1300 = vector.shape_cast %935 : vector<1x256xi1> to vector<1x256xi1>
    %1301 = vector.broadcast %1300 : vector<1x256xi1> to vector<8x256xi1>
    %1302 = vector.broadcast %cst_274 : f32 to vector<8x256xf32>
    %1303 = arith.select %1301, %1299, %1302 : vector<8x256xi1>, vector<8x256xf32>
    %1304 = vector.extract_strided_slice %1120 {offsets = [0, 16], sizes = [8, 1], strides = [1, 1]} : vector<8x25xf32> to vector<8x1xf32>
    %1305 = vector.broadcast %1304 : vector<8x1xf32> to vector<8x256xf32>
    %1306 = arith.mulf %1303, %1305 : vector<8x256xf32>
    %1307 = arith.addf %1284, %1306 : vector<8x256xf32>
    %c240_i32_275 = arith.constant 240 : i32
    %1308 = tpu.dynamic_rotate %1118 by %c240_i32_275 dim 1 : vector<8x256xf32>, i32 -> vector<8x256xf32>
    %cst_276 = arith.constant 0.000000e+00 : f32
    %1309 = vector.shape_cast %946 : vector<1x256xi1> to vector<1x256xi1>
    %1310 = vector.broadcast %1309 : vector<1x256xi1> to vector<8x256xi1>
    %1311 = vector.broadcast %cst_276 : f32 to vector<8x256xf32>
    %1312 = arith.select %1310, %1308, %1311 : vector<8x256xi1>, vector<8x256xf32>
    %1313 = vector.extract_strided_slice %1120 {offsets = [0, 17], sizes = [8, 1], strides = [1, 1]} : vector<8x25xf32> to vector<8x1xf32>
    %1314 = vector.broadcast %1313 : vector<8x1xf32> to vector<8x256xf32>
    %1315 = arith.mulf %1312, %1314 : vector<8x256xf32>
    %1316 = arith.addf %1298, %1315 : vector<8x256xf32>
    %c239_i32_277 = arith.constant 239 : i32
    %1317 = tpu.dynamic_rotate %1118 by %c239_i32_277 dim 1 : vector<8x256xf32>, i32 -> vector<8x256xf32>
    %cst_278 = arith.constant 0.000000e+00 : f32
    %1318 = vector.shape_cast %960 : vector<1x256xi1> to vector<1x256xi1>
    %1319 = vector.broadcast %1318 : vector<1x256xi1> to vector<8x256xi1>
    %1320 = vector.broadcast %cst_278 : f32 to vector<8x256xf32>
    %1321 = arith.select %1319, %1317, %1320 : vector<8x256xi1>, vector<8x256xf32>
    %1322 = vector.extract_strided_slice %1120 {offsets = [0, 18], sizes = [8, 1], strides = [1, 1]} : vector<8x25xf32> to vector<8x1xf32>
    %1323 = vector.broadcast %1322 : vector<8x1xf32> to vector<8x256xf32>
    %1324 = arith.mulf %1321, %1323 : vector<8x256xf32>
    %1325 = arith.addf %1307, %1324 : vector<8x256xf32>
    %c238_i32_279 = arith.constant 238 : i32
    %1326 = tpu.dynamic_rotate %1118 by %c238_i32_279 dim 1 : vector<8x256xf32>, i32 -> vector<8x256xf32>
    %c15_i32_280 = arith.constant 15 : i32
    %1327 = vector.broadcast %c15_i32_280 : i32 to vector<1x256xi32>
    %1328 = arith.cmpi slt, %1, %1327 : vector<1x256xi32>
    %c14_i32_281 = arith.constant 14 : i32
    %1329 = vector.broadcast %c14_i32_281 : i32 to vector<1x256xi32>
    %1330 = arith.cmpi slt, %2, %1329 : vector<1x256xi32>
    %1331 = arith.andi %1328, %1330 : vector<1x256xi1>
    %cst_282 = arith.constant 0.000000e+00 : f32
    %1332 = vector.shape_cast %1331 : vector<1x256xi1> to vector<1x256xi1>
    %1333 = vector.broadcast %1332 : vector<1x256xi1> to vector<8x256xi1>
    %1334 = vector.broadcast %cst_282 : f32 to vector<8x256xf32>
    %1335 = arith.select %1333, %1326, %1334 : vector<8x256xi1>, vector<8x256xf32>
    %1336 = vector.extract_strided_slice %1120 {offsets = [0, 19], sizes = [8, 1], strides = [1, 1]} : vector<8x25xf32> to vector<8x1xf32>
    %1337 = vector.broadcast %1336 : vector<8x1xf32> to vector<8x256xf32>
    %1338 = arith.mulf %1335, %1337 : vector<8x256xf32>
    %1339 = arith.addf %1316, %1338 : vector<8x256xf32>
    %c226_i32_283 = arith.constant 226 : i32
    %1340 = tpu.dynamic_rotate %1118 by %c226_i32_283 dim 1 : vector<8x256xf32>, i32 -> vector<8x256xf32>
    %c14_i32_284 = arith.constant 14 : i32
    %1341 = vector.broadcast %c14_i32_284 : i32 to vector<1x256xi32>
    %1342 = arith.cmpi slt, %1, %1341 : vector<1x256xi32>
    %c2_i32_285 = arith.constant 2 : i32
    %1343 = vector.broadcast %c2_i32_285 : i32 to vector<1x256xi32>
    %1344 = arith.cmpi sge, %2, %1343 : vector<1x256xi32>
    %1345 = arith.andi %1342, %1344 : vector<1x256xi1>
    %cst_286 = arith.constant 0.000000e+00 : f32
    %1346 = vector.shape_cast %1345 : vector<1x256xi1> to vector<1x256xi1>
    %1347 = vector.broadcast %1346 : vector<1x256xi1> to vector<8x256xi1>
    %1348 = vector.broadcast %cst_286 : f32 to vector<8x256xf32>
    %1349 = arith.select %1347, %1340, %1348 : vector<8x256xi1>, vector<8x256xf32>
    %1350 = vector.extract_strided_slice %1120 {offsets = [0, 20], sizes = [8, 1], strides = [1, 1]} : vector<8x25xf32> to vector<8x1xf32>
    %1351 = vector.broadcast %1350 : vector<8x1xf32> to vector<8x256xf32>
    %1352 = arith.mulf %1349, %1351 : vector<8x256xf32>
    %1353 = arith.addf %1325, %1352 : vector<8x256xf32>
    %c225_i32_287 = arith.constant 225 : i32
    %1354 = tpu.dynamic_rotate %1118 by %c225_i32_287 dim 1 : vector<8x256xf32>, i32 -> vector<8x256xf32>
    %c14_i32_288 = arith.constant 14 : i32
    %1355 = vector.broadcast %c14_i32_288 : i32 to vector<1x256xi32>
    %1356 = arith.cmpi slt, %1, %1355 : vector<1x256xi32>
    %c1_i32_289 = arith.constant 1 : i32
    %1357 = vector.broadcast %c1_i32_289 : i32 to vector<1x256xi32>
    %1358 = arith.cmpi sge, %2, %1357 : vector<1x256xi32>
    %1359 = arith.andi %1356, %1358 : vector<1x256xi1>
    %cst_290 = arith.constant 0.000000e+00 : f32
    %1360 = vector.shape_cast %1359 : vector<1x256xi1> to vector<1x256xi1>
    %1361 = vector.broadcast %1360 : vector<1x256xi1> to vector<8x256xi1>
    %1362 = vector.broadcast %cst_290 : f32 to vector<8x256xf32>
    %1363 = arith.select %1361, %1354, %1362 : vector<8x256xi1>, vector<8x256xf32>
    %1364 = vector.extract_strided_slice %1120 {offsets = [0, 21], sizes = [8, 1], strides = [1, 1]} : vector<8x25xf32> to vector<8x1xf32>
    %1365 = vector.broadcast %1364 : vector<8x1xf32> to vector<8x256xf32>
    %1366 = arith.mulf %1363, %1365 : vector<8x256xf32>
    %1367 = arith.addf %1339, %1366 : vector<8x256xf32>
    %c224_i32_291 = arith.constant 224 : i32
    %1368 = tpu.dynamic_rotate %1118 by %c224_i32_291 dim 1 : vector<8x256xf32>, i32 -> vector<8x256xf32>
    %c14_i32_292 = arith.constant 14 : i32
    %1369 = vector.broadcast %c14_i32_292 : i32 to vector<1x256xi32>
    %1370 = arith.cmpi slt, %1, %1369 : vector<1x256xi32>
    %cst_293 = arith.constant 0.000000e+00 : f32
    %1371 = vector.shape_cast %1370 : vector<1x256xi1> to vector<1x256xi1>
    %1372 = vector.broadcast %1371 : vector<1x256xi1> to vector<8x256xi1>
    %1373 = vector.broadcast %cst_293 : f32 to vector<8x256xf32>
    %1374 = arith.select %1372, %1368, %1373 : vector<8x256xi1>, vector<8x256xf32>
    %1375 = vector.extract_strided_slice %1120 {offsets = [0, 22], sizes = [8, 1], strides = [1, 1]} : vector<8x25xf32> to vector<8x1xf32>
    %1376 = vector.broadcast %1375 : vector<8x1xf32> to vector<8x256xf32>
    %1377 = arith.mulf %1374, %1376 : vector<8x256xf32>
    %1378 = arith.addf %1353, %1377 : vector<8x256xf32>
    %c223_i32_294 = arith.constant 223 : i32
    %1379 = tpu.dynamic_rotate %1118 by %c223_i32_294 dim 1 : vector<8x256xf32>, i32 -> vector<8x256xf32>
    %c14_i32_295 = arith.constant 14 : i32
    %1380 = vector.broadcast %c14_i32_295 : i32 to vector<1x256xi32>
    %1381 = arith.cmpi slt, %1, %1380 : vector<1x256xi32>
    %c15_i32_296 = arith.constant 15 : i32
    %1382 = vector.broadcast %c15_i32_296 : i32 to vector<1x256xi32>
    %1383 = arith.cmpi slt, %2, %1382 : vector<1x256xi32>
    %1384 = arith.andi %1381, %1383 : vector<1x256xi1>
    %cst_297 = arith.constant 0.000000e+00 : f32
    %1385 = vector.shape_cast %1384 : vector<1x256xi1> to vector<1x256xi1>
    %1386 = vector.broadcast %1385 : vector<1x256xi1> to vector<8x256xi1>
    %1387 = vector.broadcast %cst_297 : f32 to vector<8x256xf32>
    %1388 = arith.select %1386, %1379, %1387 : vector<8x256xi1>, vector<8x256xf32>
    %1389 = vector.extract_strided_slice %1120 {offsets = [0, 23], sizes = [8, 1], strides = [1, 1]} : vector<8x25xf32> to vector<8x1xf32>
    %1390 = vector.broadcast %1389 : vector<8x1xf32> to vector<8x256xf32>
    %1391 = arith.mulf %1388, %1390 : vector<8x256xf32>
    %1392 = arith.addf %1367, %1391 : vector<8x256xf32>
    %c222_i32_298 = arith.constant 222 : i32
    %1393 = tpu.dynamic_rotate %1118 by %c222_i32_298 dim 1 : vector<8x256xf32>, i32 -> vector<8x256xf32>
    %c14_i32_299 = arith.constant 14 : i32
    %1394 = vector.broadcast %c14_i32_299 : i32 to vector<1x256xi32>
    %1395 = arith.cmpi slt, %1, %1394 : vector<1x256xi32>
    %c14_i32_300 = arith.constant 14 : i32
    %1396 = vector.broadcast %c14_i32_300 : i32 to vector<1x256xi32>
    %1397 = arith.cmpi slt, %2, %1396 : vector<1x256xi32>
    %1398 = arith.andi %1395, %1397 : vector<1x256xi1>
    %cst_301 = arith.constant 0.000000e+00 : f32
    %1399 = vector.shape_cast %1398 : vector<1x256xi1> to vector<1x256xi1>
    %1400 = vector.broadcast %1399 : vector<1x256xi1> to vector<8x256xi1>
    %1401 = vector.broadcast %cst_301 : f32 to vector<8x256xf32>
    %1402 = arith.select %1400, %1393, %1401 : vector<8x256xi1>, vector<8x256xf32>
    %1403 = vector.extract_strided_slice %1120 {offsets = [0, 24], sizes = [8, 1], strides = [1, 1]} : vector<8x25xf32> to vector<8x1xf32>
    %1404 = vector.broadcast %1403 : vector<8x1xf32> to vector<8x256xf32>
    %1405 = arith.mulf %1402, %1404 : vector<8x256xf32>
    %1406 = arith.addf %1378, %1405 : vector<8x256xf32>
    %1407 = arith.addf %1406, %1392 : vector<8x256xf32>
    %c0_302 = arith.constant 0 : index
    %c0_303 = arith.constant 0 : index
    %1408 = vector.load %arg12[%c0_302, %c0_303] : memref<8x8xf32, #tpu.memory_space<vmem>>, vector<8x8xf32>
    %1409 = vector.extract_strided_slice %1407 {offsets = [0, 0], sizes = [1, 256], strides = [1, 1]} : vector<8x256xf32> to vector<1x256xf32>
    %1410 = vector.extract_strided_slice %1408 {offsets = [0, 0], sizes = [8, 1], strides = [1, 1]} : vector<8x8xf32> to vector<8x1xf32>
    %1411 = vector.broadcast %1409 : vector<1x256xf32> to vector<8x256xf32>
    %1412 = vector.broadcast %1410 : vector<8x1xf32> to vector<8x256xf32>
    %1413 = arith.mulf %1411, %1412 : vector<8x256xf32>
    %1414 = vector.extract_strided_slice %1407 {offsets = [1, 0], sizes = [1, 256], strides = [1, 1]} : vector<8x256xf32> to vector<1x256xf32>
    %1415 = vector.extract_strided_slice %1408 {offsets = [0, 1], sizes = [8, 1], strides = [1, 1]} : vector<8x8xf32> to vector<8x1xf32>
    %1416 = vector.broadcast %1414 : vector<1x256xf32> to vector<8x256xf32>
    %1417 = vector.broadcast %1415 : vector<8x1xf32> to vector<8x256xf32>
    %1418 = arith.mulf %1416, %1417 : vector<8x256xf32>
    %1419 = vector.extract_strided_slice %1407 {offsets = [2, 0], sizes = [1, 256], strides = [1, 1]} : vector<8x256xf32> to vector<1x256xf32>
    %1420 = vector.extract_strided_slice %1408 {offsets = [0, 2], sizes = [8, 1], strides = [1, 1]} : vector<8x8xf32> to vector<8x1xf32>
    %1421 = vector.broadcast %1419 : vector<1x256xf32> to vector<8x256xf32>
    %1422 = vector.broadcast %1420 : vector<8x1xf32> to vector<8x256xf32>
    %1423 = arith.mulf %1421, %1422 : vector<8x256xf32>
    %1424 = arith.addf %1413, %1423 : vector<8x256xf32>
    %1425 = vector.extract_strided_slice %1407 {offsets = [3, 0], sizes = [1, 256], strides = [1, 1]} : vector<8x256xf32> to vector<1x256xf32>
    %1426 = vector.extract_strided_slice %1408 {offsets = [0, 3], sizes = [8, 1], strides = [1, 1]} : vector<8x8xf32> to vector<8x1xf32>
    %1427 = vector.broadcast %1425 : vector<1x256xf32> to vector<8x256xf32>
    %1428 = vector.broadcast %1426 : vector<8x1xf32> to vector<8x256xf32>
    %1429 = arith.mulf %1427, %1428 : vector<8x256xf32>
    %1430 = arith.addf %1418, %1429 : vector<8x256xf32>
    %1431 = vector.extract_strided_slice %1407 {offsets = [4, 0], sizes = [1, 256], strides = [1, 1]} : vector<8x256xf32> to vector<1x256xf32>
    %1432 = vector.extract_strided_slice %1408 {offsets = [0, 4], sizes = [8, 1], strides = [1, 1]} : vector<8x8xf32> to vector<8x1xf32>
    %1433 = vector.broadcast %1431 : vector<1x256xf32> to vector<8x256xf32>
    %1434 = vector.broadcast %1432 : vector<8x1xf32> to vector<8x256xf32>
    %1435 = arith.mulf %1433, %1434 : vector<8x256xf32>
    %1436 = arith.addf %1424, %1435 : vector<8x256xf32>
    %1437 = vector.extract_strided_slice %1407 {offsets = [5, 0], sizes = [1, 256], strides = [1, 1]} : vector<8x256xf32> to vector<1x256xf32>
    %1438 = vector.extract_strided_slice %1408 {offsets = [0, 5], sizes = [8, 1], strides = [1, 1]} : vector<8x8xf32> to vector<8x1xf32>
    %1439 = vector.broadcast %1437 : vector<1x256xf32> to vector<8x256xf32>
    %1440 = vector.broadcast %1438 : vector<8x1xf32> to vector<8x256xf32>
    %1441 = arith.mulf %1439, %1440 : vector<8x256xf32>
    %1442 = arith.addf %1430, %1441 : vector<8x256xf32>
    %1443 = vector.extract_strided_slice %1407 {offsets = [6, 0], sizes = [1, 256], strides = [1, 1]} : vector<8x256xf32> to vector<1x256xf32>
    %1444 = vector.extract_strided_slice %1408 {offsets = [0, 6], sizes = [8, 1], strides = [1, 1]} : vector<8x8xf32> to vector<8x1xf32>
    %1445 = vector.broadcast %1443 : vector<1x256xf32> to vector<8x256xf32>
    %1446 = vector.broadcast %1444 : vector<8x1xf32> to vector<8x256xf32>
    %1447 = arith.mulf %1445, %1446 : vector<8x256xf32>
    %1448 = arith.addf %1436, %1447 : vector<8x256xf32>
    %1449 = vector.extract_strided_slice %1407 {offsets = [7, 0], sizes = [1, 256], strides = [1, 1]} : vector<8x256xf32> to vector<1x256xf32>
    %1450 = vector.extract_strided_slice %1408 {offsets = [0, 7], sizes = [8, 1], strides = [1, 1]} : vector<8x8xf32> to vector<8x1xf32>
    %1451 = vector.broadcast %1449 : vector<1x256xf32> to vector<8x256xf32>
    %1452 = vector.broadcast %1450 : vector<8x1xf32> to vector<8x256xf32>
    %1453 = arith.mulf %1451, %1452 : vector<8x256xf32>
    %1454 = arith.addf %1442, %1453 : vector<8x256xf32>
    %1455 = arith.addf %1448, %1454 : vector<8x256xf32>
    %1456 = arith.mulf %1455, %1455 : vector<8x256xf32>
    %c4_i32_304 = arith.constant 4 : i32
    %1457 = tpu.dynamic_rotate %1455 by %c4_i32_304 dim 0 : vector<8x256xf32>, i32 -> vector<8x256xf32>
    %1458 = arith.addf %1455, %1457 : vector<8x256xf32>
    %c4_i32_305 = arith.constant 4 : i32
    %1459 = tpu.dynamic_rotate %1456 by %c4_i32_305 dim 0 : vector<8x256xf32>, i32 -> vector<8x256xf32>
    %1460 = arith.addf %1456, %1459 : vector<8x256xf32>
    %cst_306 = arith.constant dense<0.000000e+00> : vector<8xf32>
    %1461 = vector.multi_reduction <add>, %1458, %cst_306 [1] : vector<8x256xf32> to vector<8xf32>
    %1462 = vector.shape_cast %1461 : vector<8xf32> to vector<8x1xf32>
    %cst_307 = arith.constant 0.001953125 : f32
    %1463 = vector.broadcast %cst_307 : f32 to vector<8x1xf32>
    %1464 = arith.mulf %1462, %1463 : vector<8x1xf32>
    %cst_308 = arith.constant dense<0.000000e+00> : vector<8xf32>
    %1465 = vector.multi_reduction <add>, %1460, %cst_308 [1] : vector<8x256xf32> to vector<8xf32>
    %1466 = vector.shape_cast %1465 : vector<8xf32> to vector<8x1xf32>
    %cst_309 = arith.constant 0.001953125 : f32
    %1467 = vector.broadcast %cst_309 : f32 to vector<8x1xf32>
    %1468 = arith.mulf %1466, %1467 : vector<8x1xf32>
    %1469 = arith.mulf %1464, %1464 : vector<8x1xf32>
    %1470 = arith.subf %1468, %1469 : vector<8x1xf32>
    %cst_310 = arith.constant 0.000000e+00 : f32
    %1471 = vector.broadcast %cst_310 : f32 to vector<8x1xf32>
    %1472 = arith.maximumf %1470, %1471 : vector<8x1xf32>
    %1473 = vector.broadcast %1464 : vector<8x1xf32> to vector<8x256xf32>
    %1474 = arith.subf %1455, %1473 : vector<8x256xf32>
    %cst_311 = arith.constant 9.99999974E-6 : f32
    %1475 = vector.broadcast %cst_311 : f32 to vector<8x1xf32>
    %1476 = arith.addf %1472, %1475 : vector<8x1xf32>
    %1477 = math.rsqrt %1476 : vector<8x1xf32>
    %1478 = vector.broadcast %1477 : vector<8x1xf32> to vector<8x256xf32>
    %1479 = arith.mulf %1474, %1478 : vector<8x256xf32>
    %1480 = vector.broadcast %1119 : f32 to vector<8x256xf32>
    %1481 = arith.mulf %1480, %1479 : vector<8x256xf32>
    %1482 = arith.addf %1044, %1481 : vector<8x256xf32>
    %c6 = arith.constant 6 : index
    %1483 = memref.load %arg0[%c6] : memref<8xf32, #tpu.memory_space<smem>>
    %c0_312 = arith.constant 0 : index
    %c0_313 = arith.constant 0 : index
    %1484 = vector.load %arg14[%c0_312, %c0_313] : memref<8x8xf32, #tpu.memory_space<vmem>>, vector<8x8xf32>
    %1485 = vector.extract_strided_slice %702 {offsets = [0, 0], sizes = [1, 256], strides = [1, 1]} : vector<8x256xf32> to vector<1x256xf32>
    %1486 = vector.extract_strided_slice %1484 {offsets = [0, 0], sizes = [8, 1], strides = [1, 1]} : vector<8x8xf32> to vector<8x1xf32>
    %1487 = vector.broadcast %1485 : vector<1x256xf32> to vector<8x256xf32>
    %1488 = vector.broadcast %1486 : vector<8x1xf32> to vector<8x256xf32>
    %1489 = arith.mulf %1487, %1488 : vector<8x256xf32>
    %1490 = vector.extract_strided_slice %702 {offsets = [1, 0], sizes = [1, 256], strides = [1, 1]} : vector<8x256xf32> to vector<1x256xf32>
    %1491 = vector.extract_strided_slice %1484 {offsets = [0, 1], sizes = [8, 1], strides = [1, 1]} : vector<8x8xf32> to vector<8x1xf32>
    %1492 = vector.broadcast %1490 : vector<1x256xf32> to vector<8x256xf32>
    %1493 = vector.broadcast %1491 : vector<8x1xf32> to vector<8x256xf32>
    %1494 = arith.mulf %1492, %1493 : vector<8x256xf32>
    %1495 = vector.extract_strided_slice %702 {offsets = [2, 0], sizes = [1, 256], strides = [1, 1]} : vector<8x256xf32> to vector<1x256xf32>
    %1496 = vector.extract_strided_slice %1484 {offsets = [0, 2], sizes = [8, 1], strides = [1, 1]} : vector<8x8xf32> to vector<8x1xf32>
    %1497 = vector.broadcast %1495 : vector<1x256xf32> to vector<8x256xf32>
    %1498 = vector.broadcast %1496 : vector<8x1xf32> to vector<8x256xf32>
    %1499 = arith.mulf %1497, %1498 : vector<8x256xf32>
    %1500 = arith.addf %1489, %1499 : vector<8x256xf32>
    %1501 = vector.extract_strided_slice %702 {offsets = [3, 0], sizes = [1, 256], strides = [1, 1]} : vector<8x256xf32> to vector<1x256xf32>
    %1502 = vector.extract_strided_slice %1484 {offsets = [0, 3], sizes = [8, 1], strides = [1, 1]} : vector<8x8xf32> to vector<8x1xf32>
    %1503 = vector.broadcast %1501 : vector<1x256xf32> to vector<8x256xf32>
    %1504 = vector.broadcast %1502 : vector<8x1xf32> to vector<8x256xf32>
    %1505 = arith.mulf %1503, %1504 : vector<8x256xf32>
    %1506 = arith.addf %1494, %1505 : vector<8x256xf32>
    %1507 = vector.extract_strided_slice %702 {offsets = [4, 0], sizes = [1, 256], strides = [1, 1]} : vector<8x256xf32> to vector<1x256xf32>
    %1508 = vector.extract_strided_slice %1484 {offsets = [0, 4], sizes = [8, 1], strides = [1, 1]} : vector<8x8xf32> to vector<8x1xf32>
    %1509 = vector.broadcast %1507 : vector<1x256xf32> to vector<8x256xf32>
    %1510 = vector.broadcast %1508 : vector<8x1xf32> to vector<8x256xf32>
    %1511 = arith.mulf %1509, %1510 : vector<8x256xf32>
    %1512 = arith.addf %1500, %1511 : vector<8x256xf32>
    %1513 = vector.extract_strided_slice %702 {offsets = [5, 0], sizes = [1, 256], strides = [1, 1]} : vector<8x256xf32> to vector<1x256xf32>
    %1514 = vector.extract_strided_slice %1484 {offsets = [0, 5], sizes = [8, 1], strides = [1, 1]} : vector<8x8xf32> to vector<8x1xf32>
    %1515 = vector.broadcast %1513 : vector<1x256xf32> to vector<8x256xf32>
    %1516 = vector.broadcast %1514 : vector<8x1xf32> to vector<8x256xf32>
    %1517 = arith.mulf %1515, %1516 : vector<8x256xf32>
    %1518 = arith.addf %1506, %1517 : vector<8x256xf32>
    %1519 = vector.extract_strided_slice %702 {offsets = [6, 0], sizes = [1, 256], strides = [1, 1]} : vector<8x256xf32> to vector<1x256xf32>
    %1520 = vector.extract_strided_slice %1484 {offsets = [0, 6], sizes = [8, 1], strides = [1, 1]} : vector<8x8xf32> to vector<8x1xf32>
    %1521 = vector.broadcast %1519 : vector<1x256xf32> to vector<8x256xf32>
    %1522 = vector.broadcast %1520 : vector<8x1xf32> to vector<8x256xf32>
    %1523 = arith.mulf %1521, %1522 : vector<8x256xf32>
    %1524 = arith.addf %1512, %1523 : vector<8x256xf32>
    %1525 = vector.extract_strided_slice %702 {offsets = [7, 0], sizes = [1, 256], strides = [1, 1]} : vector<8x256xf32> to vector<1x256xf32>
    %1526 = vector.extract_strided_slice %1484 {offsets = [0, 7], sizes = [8, 1], strides = [1, 1]} : vector<8x8xf32> to vector<8x1xf32>
    %1527 = vector.broadcast %1525 : vector<1x256xf32> to vector<8x256xf32>
    %1528 = vector.broadcast %1526 : vector<8x1xf32> to vector<8x256xf32>
    %1529 = arith.mulf %1527, %1528 : vector<8x256xf32>
    %1530 = arith.addf %1518, %1529 : vector<8x256xf32>
    %1531 = arith.addf %1524, %1530 : vector<8x256xf32>
    %1532 = arith.mulf %1531, %1531 : vector<8x256xf32>
    %c4_i32_314 = arith.constant 4 : i32
    %1533 = tpu.dynamic_rotate %1531 by %c4_i32_314 dim 0 : vector<8x256xf32>, i32 -> vector<8x256xf32>
    %1534 = arith.addf %1531, %1533 : vector<8x256xf32>
    %c4_i32_315 = arith.constant 4 : i32
    %1535 = tpu.dynamic_rotate %1532 by %c4_i32_315 dim 0 : vector<8x256xf32>, i32 -> vector<8x256xf32>
    %1536 = arith.addf %1532, %1535 : vector<8x256xf32>
    %cst_316 = arith.constant dense<0.000000e+00> : vector<8xf32>
    %1537 = vector.multi_reduction <add>, %1534, %cst_316 [1] : vector<8x256xf32> to vector<8xf32>
    %1538 = vector.shape_cast %1537 : vector<8xf32> to vector<8x1xf32>
    %cst_317 = arith.constant 0.001953125 : f32
    %1539 = vector.broadcast %cst_317 : f32 to vector<8x1xf32>
    %1540 = arith.mulf %1538, %1539 : vector<8x1xf32>
    %cst_318 = arith.constant dense<0.000000e+00> : vector<8xf32>
    %1541 = vector.multi_reduction <add>, %1536, %cst_318 [1] : vector<8x256xf32> to vector<8xf32>
    %1542 = vector.shape_cast %1541 : vector<8xf32> to vector<8x1xf32>
    %cst_319 = arith.constant 0.001953125 : f32
    %1543 = vector.broadcast %cst_319 : f32 to vector<8x1xf32>
    %1544 = arith.mulf %1542, %1543 : vector<8x1xf32>
    %1545 = arith.mulf %1540, %1540 : vector<8x1xf32>
    %1546 = arith.subf %1544, %1545 : vector<8x1xf32>
    %cst_320 = arith.constant 0.000000e+00 : f32
    %1547 = vector.broadcast %cst_320 : f32 to vector<8x1xf32>
    %1548 = arith.maximumf %1546, %1547 : vector<8x1xf32>
    %1549 = vector.broadcast %1540 : vector<8x1xf32> to vector<8x256xf32>
    %1550 = arith.subf %1531, %1549 : vector<8x256xf32>
    %cst_321 = arith.constant 9.99999974E-6 : f32
    %1551 = vector.broadcast %cst_321 : f32 to vector<8x1xf32>
    %1552 = arith.addf %1548, %1551 : vector<8x1xf32>
    %1553 = math.rsqrt %1552 : vector<8x1xf32>
    %1554 = vector.broadcast %1553 : vector<8x1xf32> to vector<8x256xf32>
    %1555 = arith.mulf %1550, %1554 : vector<8x256xf32>
    %1556 = vector.broadcast %1483 : f32 to vector<8x256xf32>
    %1557 = arith.mulf %1556, %1555 : vector<8x256xf32>
    %1558 = arith.addf %1482, %1557 : vector<8x256xf32>
    %c7 = arith.constant 7 : index
    %1559 = memref.load %arg0[%c7] : memref<8xf32, #tpu.memory_space<smem>>
    %c0_322 = arith.constant 0 : index
    %c0_323 = arith.constant 0 : index
    %1560 = vector.load %arg16[%c0_322, %c0_323] : memref<8x8xf32, #tpu.memory_space<vmem>>, vector<8x8xf32>
    %1561 = vector.extract_strided_slice %790 {offsets = [0, 0], sizes = [1, 256], strides = [1, 1]} : vector<8x256xf32> to vector<1x256xf32>
    %1562 = vector.extract_strided_slice %1560 {offsets = [0, 0], sizes = [8, 1], strides = [1, 1]} : vector<8x8xf32> to vector<8x1xf32>
    %1563 = vector.broadcast %1561 : vector<1x256xf32> to vector<8x256xf32>
    %1564 = vector.broadcast %1562 : vector<8x1xf32> to vector<8x256xf32>
    %1565 = arith.mulf %1563, %1564 : vector<8x256xf32>
    %1566 = vector.extract_strided_slice %790 {offsets = [1, 0], sizes = [1, 256], strides = [1, 1]} : vector<8x256xf32> to vector<1x256xf32>
    %1567 = vector.extract_strided_slice %1560 {offsets = [0, 1], sizes = [8, 1], strides = [1, 1]} : vector<8x8xf32> to vector<8x1xf32>
    %1568 = vector.broadcast %1566 : vector<1x256xf32> to vector<8x256xf32>
    %1569 = vector.broadcast %1567 : vector<8x1xf32> to vector<8x256xf32>
    %1570 = arith.mulf %1568, %1569 : vector<8x256xf32>
    %1571 = vector.extract_strided_slice %790 {offsets = [2, 0], sizes = [1, 256], strides = [1, 1]} : vector<8x256xf32> to vector<1x256xf32>
    %1572 = vector.extract_strided_slice %1560 {offsets = [0, 2], sizes = [8, 1], strides = [1, 1]} : vector<8x8xf32> to vector<8x1xf32>
    %1573 = vector.broadcast %1571 : vector<1x256xf32> to vector<8x256xf32>
    %1574 = vector.broadcast %1572 : vector<8x1xf32> to vector<8x256xf32>
    %1575 = arith.mulf %1573, %1574 : vector<8x256xf32>
    %1576 = arith.addf %1565, %1575 : vector<8x256xf32>
    %1577 = vector.extract_strided_slice %790 {offsets = [3, 0], sizes = [1, 256], strides = [1, 1]} : vector<8x256xf32> to vector<1x256xf32>
    %1578 = vector.extract_strided_slice %1560 {offsets = [0, 3], sizes = [8, 1], strides = [1, 1]} : vector<8x8xf32> to vector<8x1xf32>
    %1579 = vector.broadcast %1577 : vector<1x256xf32> to vector<8x256xf32>
    %1580 = vector.broadcast %1578 : vector<8x1xf32> to vector<8x256xf32>
    %1581 = arith.mulf %1579, %1580 : vector<8x256xf32>
    %1582 = arith.addf %1570, %1581 : vector<8x256xf32>
    %1583 = vector.extract_strided_slice %790 {offsets = [4, 0], sizes = [1, 256], strides = [1, 1]} : vector<8x256xf32> to vector<1x256xf32>
    %1584 = vector.extract_strided_slice %1560 {offsets = [0, 4], sizes = [8, 1], strides = [1, 1]} : vector<8x8xf32> to vector<8x1xf32>
    %1585 = vector.broadcast %1583 : vector<1x256xf32> to vector<8x256xf32>
    %1586 = vector.broadcast %1584 : vector<8x1xf32> to vector<8x256xf32>
    %1587 = arith.mulf %1585, %1586 : vector<8x256xf32>
    %1588 = arith.addf %1576, %1587 : vector<8x256xf32>
    %1589 = vector.extract_strided_slice %790 {offsets = [5, 0], sizes = [1, 256], strides = [1, 1]} : vector<8x256xf32> to vector<1x256xf32>
    %1590 = vector.extract_strided_slice %1560 {offsets = [0, 5], sizes = [8, 1], strides = [1, 1]} : vector<8x8xf32> to vector<8x1xf32>
    %1591 = vector.broadcast %1589 : vector<1x256xf32> to vector<8x256xf32>
    %1592 = vector.broadcast %1590 : vector<8x1xf32> to vector<8x256xf32>
    %1593 = arith.mulf %1591, %1592 : vector<8x256xf32>
    %1594 = arith.addf %1582, %1593 : vector<8x256xf32>
    %1595 = vector.extract_strided_slice %790 {offsets = [6, 0], sizes = [1, 256], strides = [1, 1]} : vector<8x256xf32> to vector<1x256xf32>
    %1596 = vector.extract_strided_slice %1560 {offsets = [0, 6], sizes = [8, 1], strides = [1, 1]} : vector<8x8xf32> to vector<8x1xf32>
    %1597 = vector.broadcast %1595 : vector<1x256xf32> to vector<8x256xf32>
    %1598 = vector.broadcast %1596 : vector<8x1xf32> to vector<8x256xf32>
    %1599 = arith.mulf %1597, %1598 : vector<8x256xf32>
    %1600 = arith.addf %1588, %1599 : vector<8x256xf32>
    %1601 = vector.extract_strided_slice %790 {offsets = [7, 0], sizes = [1, 256], strides = [1, 1]} : vector<8x256xf32> to vector<1x256xf32>
    %1602 = vector.extract_strided_slice %1560 {offsets = [0, 7], sizes = [8, 1], strides = [1, 1]} : vector<8x8xf32> to vector<8x1xf32>
    %1603 = vector.broadcast %1601 : vector<1x256xf32> to vector<8x256xf32>
    %1604 = vector.broadcast %1602 : vector<8x1xf32> to vector<8x256xf32>
    %1605 = arith.mulf %1603, %1604 : vector<8x256xf32>
    %1606 = arith.addf %1594, %1605 : vector<8x256xf32>
    %1607 = arith.addf %1600, %1606 : vector<8x256xf32>
    %1608 = arith.mulf %1607, %1607 : vector<8x256xf32>
    %c4_i32_324 = arith.constant 4 : i32
    %1609 = tpu.dynamic_rotate %1607 by %c4_i32_324 dim 0 : vector<8x256xf32>, i32 -> vector<8x256xf32>
    %1610 = arith.addf %1607, %1609 : vector<8x256xf32>
    %c4_i32_325 = arith.constant 4 : i32
    %1611 = tpu.dynamic_rotate %1608 by %c4_i32_325 dim 0 : vector<8x256xf32>, i32 -> vector<8x256xf32>
    %1612 = arith.addf %1608, %1611 : vector<8x256xf32>
    %cst_326 = arith.constant dense<0.000000e+00> : vector<8xf32>
    %1613 = vector.multi_reduction <add>, %1610, %cst_326 [1] : vector<8x256xf32> to vector<8xf32>
    %1614 = vector.shape_cast %1613 : vector<8xf32> to vector<8x1xf32>
    %cst_327 = arith.constant 0.001953125 : f32
    %1615 = vector.broadcast %cst_327 : f32 to vector<8x1xf32>
    %1616 = arith.mulf %1614, %1615 : vector<8x1xf32>
    %cst_328 = arith.constant dense<0.000000e+00> : vector<8xf32>
    %1617 = vector.multi_reduction <add>, %1612, %cst_328 [1] : vector<8x256xf32> to vector<8xf32>
    %1618 = vector.shape_cast %1617 : vector<8xf32> to vector<8x1xf32>
    %cst_329 = arith.constant 0.001953125 : f32
    %1619 = vector.broadcast %cst_329 : f32 to vector<8x1xf32>
    %1620 = arith.mulf %1618, %1619 : vector<8x1xf32>
    %1621 = arith.mulf %1616, %1616 : vector<8x1xf32>
    %1622 = arith.subf %1620, %1621 : vector<8x1xf32>
    %cst_330 = arith.constant 0.000000e+00 : f32
    %1623 = vector.broadcast %cst_330 : f32 to vector<8x1xf32>
    %1624 = arith.maximumf %1622, %1623 : vector<8x1xf32>
    %1625 = vector.broadcast %1616 : vector<8x1xf32> to vector<8x256xf32>
    %1626 = arith.subf %1607, %1625 : vector<8x256xf32>
    %cst_331 = arith.constant 9.99999974E-6 : f32
    %1627 = vector.broadcast %cst_331 : f32 to vector<8x1xf32>
    %1628 = arith.addf %1624, %1627 : vector<8x1xf32>
    %1629 = math.rsqrt %1628 : vector<8x1xf32>
    %1630 = vector.broadcast %1629 : vector<8x1xf32> to vector<8x256xf32>
    %1631 = arith.mulf %1626, %1630 : vector<8x256xf32>
    %1632 = vector.broadcast %1559 : f32 to vector<8x256xf32>
    %1633 = arith.mulf %1632, %1631 : vector<8x256xf32>
    %1634 = arith.addf %1558, %1633 : vector<8x256xf32>
    %c0_332 = arith.constant 0 : index
    %c0_333 = arith.constant 0 : index
    %1635 = vector.load %arg17[%c0_332, %c0_333] : memref<8x256xf32, #tpu.memory_space<vmem>>, vector<8x256xf32>
    tpu.vector_store %arg17[%c0_332, %c0_333], %1634 {strides = array<i32>} : memref<8x256xf32, #tpu.memory_space<vmem>>, vector<8x256xf32>,
    return
  }
}

</mosaic_0001>

<llo_original>
// kernel: tpu_custom_call.1
$region0: #{tpu_custom_call.1}
  #allocation0 [shape = 'u32[]', space=smem, size = 0x4, offset = 0x4, fixed_abs, tag = 'smem constant byte address 0x4 - core index']
  #allocation1 [shape = 'u32[144,128]{1,0:T(1,128)}', space=vmem, size = 0x12000, scoped, tag = 'internal scratch']
  %s0 = inlined_call_operand.hbm [shape: f32[8], index: 0, kind: input, shape index: {}]
  %s1 = inlined_call_operand.hbm [shape: f32[8,256], index: 1, kind: input, shape index: {}]
  %s2 = inlined_call_operand.hbm [shape: s32[1,256], index: 2, kind: input, shape index: {}]
  %s3 = inlined_call_operand.hbm [shape: s32[1,256], index: 3, kind: input, shape index: {}]
  %s4 = inlined_call_operand.hbm [shape: f32[1,256], index: 4, kind: input, shape index: {}]
  %s5 = inlined_call_operand.vmem [shape: f32[8,9], index: 5, kind: input, shape index: {}]
  %s6 = inlined_call_operand.vmem [shape: f32[8,8], index: 6, kind: input, shape index: {}]
  %s7 = inlined_call_operand.vmem [shape: f32[8,9], index: 7, kind: input, shape index: {}]
  %s8 = inlined_call_operand.hbm [shape: f32[8,8], index: 8, kind: input, shape index: {}]
  %s9 = inlined_call_operand.vmem [shape: f32[8,25], index: 9, kind: input, shape index: {}]
  %s10 = inlined_call_operand.hbm [shape: f32[8,8], index: 10, kind: input, shape index: {}]
  %s11 = inlined_call_operand.vmem [shape: f32[8,25], index: 11, kind: input, shape index: {}]
  %s12 = inlined_call_operand.hbm [shape: f32[8,8], index: 12, kind: input, shape index: {}]
  %s13 = inlined_call_operand.vmem [shape: f32[8,9], index: 13, kind: input, shape index: {}]
  %s14 = inlined_call_operand.hbm [shape: f32[8,8], index: 14, kind: input, shape index: {}]
  %s15 = inlined_call_operand.vmem [shape: f32[8,25], index: 15, kind: input, shape index: {}]
  %s16 = inlined_call_operand.hbm [shape: f32[8,8], index: 16, kind: input, shape index: {}]
  %s17 = inlined_call_operand.hbm [shape: f32[8,256], index: 17, kind: output, shape index: {}]
  %s18 = sld [smem:[#allocation0]]
  $region118: #{tpu_custom_call.1} parent=0
    _
  %s20 = ssub.s32 1, %s18
  %s21 = scalar_select 0, %s20, %s18
  $region1: #{tpu_custom_call.1} parent=0
    #allocation2 [shape = 'u8[512]{0}', space=smem, size = 0x200, scoped, tag = 'input window, operand 0, single buffered']
    #allocation3 [shape = 's32[1]{0}', space=sflag, size = 0x4, scoped, tag = 'scoped memory for tpu_custom_call.1']
    #allocation4 [shape = 's32[1]{0}', space=sflag, size = 0x4, scoped, tag = 'scoped memory for tpu_custom_call.1']
    #allocation5 [shape = 's32[1]{0}', space=sflag, size = 0x4, scoped, tag = 'scoped memory for tpu_custom_call.1']
    #allocation6 [shape = 'u8[8192]{0}', space=vmem, size = 0x2000, scoped, tag = 'input window, operand 1, single buffered']
    #allocation7 [shape = 'u8[1024]{0}', space=vmem, size = 0x400, scoped, tag = 'input window, operand 2, single buffered']
    #allocation8 [shape = 's32[1]{0}', space=sflag, size = 0x4, scoped, tag = 'scoped memory for tpu_custom_call.1']
    #allocation9 [shape = 'u8[1024]{0}', space=vmem, size = 0x400, scoped, tag = 'input window, operand 3, single buffered']
    #allocation10 [shape = 'u8[1024]{0}', space=vmem, size = 0x400, scoped, tag = 'input window, operand 4, single buffered']
    #allocation11 [shape = 's32[1]{0}', space=sflag, size = 0x4, scoped, tag = 'scoped memory for tpu_custom_call.1']
    #allocation12 [shape = 'u8[4096]{0}', space=vmem, size = 0x1000, scoped, tag = 'input window, operand 8, single buffered']
    #allocation13 [shape = 'u8[4096]{0}', space=vmem, size = 0x1000, scoped, tag = 'input window, operand 10, single buffered']
    #allocation14 [shape = 's32[1]{0}', space=sflag, size = 0x4, scoped, tag = 'scoped memory for tpu_custom_call.1']
    #allocation15 [shape = 'u8[4096]{0}', space=vmem, size = 0x1000, scoped, tag = 'input window, operand 12, single buffered']
    #allocation16 [shape = 'u8[4096]{0}', space=vmem, size = 0x1000, scoped, tag = 'input window, operand 14, single buffered']
    #allocation17 [shape = 's32[1]{0}', space=sflag, size = 0x4, scoped, tag = 'scoped memory for tpu_custom_call.1']
    #allocation18 [shape = 'u8[4096]{0}', space=vmem, size = 0x1000, scoped, tag = 'input window, operand 16, single buffered']
    #allocation19 [shape = 'u8[8192]{0}', space=vmem, size = 0x2000, scoped, tag = 'output window, operand 0, single buffered']
    %22 = vsyncpa [#allocation5], 0
    %23 = vsyncpa [#allocation3], 0
    %24 = vsyncpa [#allocation8], 0
    %25 = vsyncpa [#allocation11], 0
    %26 = vsyncpa [#allocation14], 0
    %27 = vsyncpa [#allocation17], 0
    %28 = vsyncpa [#allocation4], 0
    // Predicated region
    $region2: #{tpu_custom_call.1} parent=1 // pred_check
      _
    $region3: #{tpu_custom_call.1} parent=1 // pred_check_branch
      %30 = sbr.rel (0) target = $region5
    $region4: #{tpu_custom_call.1} parent=1 // pred_region
      %s32 = ssub.s32 16, 16
      %33 = vsyncadd [#allocation5], %s32
      %36 = dma.hbm_to_smem %s0, 16, [#allocation2], [#allocation5]
    $region5: #{tpu_custom_call.1} parent=1 // pred_fallthru
      _
    // Predicated region
    $region6: #{tpu_custom_call.1} parent=1 // pred_check
      _
    $region7: #{tpu_custom_call.1} parent=1 // pred_check_branch
      %38 = sbr.rel (0) target = $region9
    $region8: #{tpu_custom_call.1} parent=1 // pred_region
      %s40 = ssub.s32 256, 256
      %41 = vsyncadd [#allocation3], %s40
      %s43 = sshll.u32 [#allocation6], 4
      %s44 = int_to_ptr.vmem [resolvable:$true] %s43
      %46 = dma.hbm_to_vmem [thread:$0]  %s1, 256, %s44, [#allocation3]
    $region9: #{tpu_custom_call.1} parent=1 // pred_fallthru
      _
    // Predicated region
    $region10: #{tpu_custom_call.1} parent=1 // pred_check
      _
    $region11: #{tpu_custom_call.1} parent=1 // pred_check_branch
      %48 = sbr.rel (0) target = $region13
    $region12: #{tpu_custom_call.1} parent=1 // pred_region
      %s50 = ssub.s32 32, 32
      %51 = vsyncadd [#allocation8], %s50
      %s53 = sshll.u32 [#allocation7], 4
      %s54 = int_to_ptr.vmem [resolvable:$true] %s53
      %56 = dma.hbm_to_vmem [thread:$0]  %s2, 32, %s54, [#allocation8]
    $region13: #{tpu_custom_call.1} parent=1 // pred_fallthru
      _
    // Predicated region
    $region14: #{tpu_custom_call.1} parent=1 // pred_check
      _
    $region15: #{tpu_custom_call.1} parent=1 // pred_check_branch
      %58 = sbr.rel (0) target = $region17
    $region16: #{tpu_custom_call.1} parent=1 // pred_region
      %s60 = ssub.s32 32, 32
      %61 = vsyncadd [#allocation8], %s60
      %s63 = sshll.u32 [#allocation9], 4
      %s64 = int_to_ptr.vmem [resolvable:$true] %s63
      %66 = dma.hbm_to_vmem [thread:$0]  %s3, 32, %s64, [#allocation8]
    $region17: #{tpu_custom_call.1} parent=1 // pred_fallthru
      _
    // Predicated region
    $region18: #{tpu_custom_call.1} parent=1 // pred_check
      _
    $region19: #{tpu_custom_call.1} parent=1 // pred_check_branch
      %68 = sbr.rel (0) target = $region21
    $region20: #{tpu_custom_call.1} parent=1 // pred_region
      %s70 = ssub.s32 32, 32
      %71 = vsyncadd [#allocation11], %s70
      %s73 = sshll.u32 [#allocation10], 4
      %s74 = int_to_ptr.vmem [resolvable:$true] %s73
      %76 = dma.hbm_to_vmem [thread:$0]  %s4, 32, %s74, [#allocation11]
    $region21: #{tpu_custom_call.1} parent=1 // pred_fallthru
      _
    // Predicated region
    $region22: #{tpu_custom_call.1} parent=1 // pred_check
      _
    $region23: #{tpu_custom_call.1} parent=1 // pred_check_branch
      %78 = sbr.rel (0) target = $region25
    $region24: #{tpu_custom_call.1} parent=1 // pred_region
      _
    $region25: #{tpu_custom_call.1} parent=1 // pred_fallthru
      _
    // Predicated region
    $region26: #{tpu_custom_call.1} parent=1 // pred_check
      _
    $region27: #{tpu_custom_call.1} parent=1 // pred_check_branch
      %80 = sbr.rel (0) target = $region29
    $region28: #{tpu_custom_call.1} parent=1 // pred_region
      _
    $region29: #{tpu_custom_call.1} parent=1 // pred_fallthru
      _
    // Predicated region
    $region30: #{tpu_custom_call.1} parent=1 // pred_check
      _
    $region31: #{tpu_custom_call.1} parent=1 // pred_check_branch
      %82 = sbr.rel (0) target = $region33
    $region32: #{tpu_custom_call.1} parent=1 // pred_region
      _
    $region33: #{tpu_custom_call.1} parent=1 // pred_fallthru
      _
    // Predicated region
    $region34: #{tpu_custom_call.1} parent=1 // pred_check
      _
    $region35: #{tpu_custom_call.1} parent=1 // pred_check_branch
      %84 = sbr.rel (0) target = $region37
    $region36: #{tpu_custom_call.1} parent=1 // pred_region
      %s86 = ssub.s32 128, 128
      %87 = vsyncadd [#allocation11], %s86
      %s89 = sshll.u32 [#allocation12], 4
      %s90 = int_to_ptr.vmem [resolvable:$true] %s89
      %92 = dma.hbm_to_vmem [thread:$0]  %s8, 128, %s90, [#allocation11]
    $region37: #{tpu_custom_call.1} parent=1 // pred_fallthru
      _
    // Predicated region
    $region38: #{tpu_custom_call.1} parent=1 // pred_check
      _
    $region39: #{tpu_custom_call.1} parent=1 // pred_check_branch
      %94 = sbr.rel (0) target = $region41
    $region40: #{tpu_custom_call.1} parent=1 // pred_region
      _
    $region41: #{tpu_custom_call.1} parent=1 // pred_fallthru
      _
    // Predicated region
    $region42: #{tpu_custom_call.1} parent=1 // pred_check
      _
    $region43: #{tpu_custom_call.1} parent=1 // pred_check_branch
      %96 = sbr.rel (0) target = $region45
    $region44: #{tpu_custom_call.1} parent=1 // pred_region
      %s98 = ssub.s32 128, 128
      %99 = vsyncadd [#allocation14], %s98
      %s101 = sshll.u32 [#allocation13], 4
      %s102 = int_to_ptr.vmem [resolvable:$true] %s101
      %104 = dma.hbm_to_vmem [thread:$0]  %s10, 128, %s102, [#allocation14]
    $region45: #{tpu_custom_call.1} parent=1 // pred_fallthru
      _
    // Predicated region
    $region46: #{tpu_custom_call.1} parent=1 // pred_check
      _
    $region47: #{tpu_custom_call.1} parent=1 // pred_check_branch
      %106 = sbr.rel (0) target = $region49
    $region48: #{tpu_custom_call.1} parent=1 // pred_region
      _
    $region49: #{tpu_custom_call.1} parent=1 // pred_fallthru
      _
    // Predicated region
    $region50: #{tpu_custom_call.1} parent=1 // pred_check
      _
    $region51: #{tpu_custom_call.1} parent=1 // pred_check_branch
      %108 = sbr.rel (0) target = $region53
    $region52: #{tpu_custom_call.1} parent=1 // pred_region
      %s110 = ssub.s32 128, 128
      %111 = vsyncadd [#allocation14], %s110
      %s113 = sshll.u32 [#allocation15], 4
      %s114 = int_to_ptr.vmem [resolvable:$true] %s113
      %116 = dma.hbm_to_vmem [thread:$0]  %s12, 128, %s114, [#allocation14]
    $region53: #{tpu_custom_call.1} parent=1 // pred_fallthru
      _
    // Predicated region
    $region54: #{tpu_custom_call.1} parent=1 // pred_check
      _
    $region55: #{tpu_custom_call.1} parent=1 // pred_check_branch
      %118 = sbr.rel (0) target = $region57
    $region56: #{tpu_custom_call.1} parent=1 // pred_region
      _
    $region57: #{tpu_custom_call.1} parent=1 // pred_fallthru
      _
    // Predicated region
    $region58: #{tpu_custom_call.1} parent=1 // pred_check
      _
    $region59: #{tpu_custom_call.1} parent=1 // pred_check_branch
      %120 = sbr.rel (0) target = $region61
    $region60: #{tpu_custom_call.1} parent=1 // pred_region
      %s122 = ssub.s32 128, 128
      %123 = vsyncadd [#allocation17], %s122
      %s125 = sshll.u32 [#allocation16], 4
      %s126 = int_to_ptr.vmem [resolvable:$true] %s125
      %128 = dma.hbm_to_vmem [thread:$0]  %s14, 128, %s126, [#allocation17]
    $region61: #{tpu_custom_call.1} parent=1 // pred_fallthru
      _
    // Predicated region
    $region62: #{tpu_custom_call.1} parent=1 // pred_check
      _
    $region63: #{tpu_custom_call.1} parent=1 // pred_check_branch
      %130 = sbr.rel (0) target = $region65
    $region64: #{tpu_custom_call.1} parent=1 // pred_region
      _
    $region65: #{tpu_custom_call.1} parent=1 // pred_fallthru
      _
    // Predicated region
    $region66: #{tpu_custom_call.1} parent=1 // pred_check
      _
    $region67: #{tpu_custom_call.1} parent=1 // pred_check_branch
      %132 = sbr.rel (0) target = $region69
    $region68: #{tpu_custom_call.1} parent=1 // pred_region
      %s134 = ssub.s32 128, 128
      %135 = vsyncadd [#allocation17], %s134
      %s137 = sshll.u32 [#allocation18], 4
      %s138 = int_to_ptr.vmem [resolvable:$true] %s137
      %140 = dma.hbm_to_vmem [thread:$0]  %s16, 128, %s138, [#allocation17]
    $region69: #{tpu_custom_call.1} parent=1 // pred_fallthru
      _
    // Predicated region
    $region70: #{tpu_custom_call.1} parent=1 // pred_check
      _
    $region71: #{tpu_custom_call.1} parent=1 // pred_check_branch
      %142 = sbr.rel (0) target = $region73
    $region72: #{tpu_custom_call.1} parent=1 // pred_region
      %143 = dma.done [#allocation5], 16
    $region73: #{tpu_custom_call.1} parent=1 // pred_fallthru
      _
    // Predicated region
    $region74: #{tpu_custom_call.1} parent=1 // pred_check
      _
    $region75: #{tpu_custom_call.1} parent=1 // pred_check_branch
      %145 = sbr.rel (0) target = $region77
    $region76: #{tpu_custom_call.1} parent=1 // pred_region
      %146 = dma.done [#allocation3], 256
    $region77: #{tpu_custom_call.1} parent=1 // pred_fallthru
      _
    // Predicated region
    $region78: #{tpu_custom_call.1} parent=1 // pred_check
      _
    $region79: #{tpu_custom_call.1} parent=1 // pred_check_branch
      %148 = sbr.rel (0) target = $region81
    $region80: #{tpu_custom_call.1} parent=1 // pred_region
      %149 = dma.done [#allocation8], 32
    $region81: #{tpu_custom_call.1} parent=1 // pred_fallthru
      _
    // Predicated region
    $region82: #{tpu_custom_call.1} parent=1 // pred_check
      _
    $region83: #{tpu_custom_call.1} parent=1 // pred_check_branch
      %151 = sbr.rel (0) target = $region85
    $region84: #{tpu_custom_call.1} parent=1 // pred_region
      %152 = dma.done [#allocation8], 32
    $region85: #{tpu_custom_call.1} parent=1 // pred_fallthru
      _
    // Predicated region
    $region86: #{tpu_custom_call.1} parent=1 // pred_check
      _
    $region87: #{tpu_custom_call.1} parent=1 // pred_check_branch
      %154 = sbr.rel (0) target = $region89
    $region88: #{tpu_custom_call.1} parent=1 // pred_region
      %155 = dma.done [#allocation11], 32
    $region89: #{tpu_custom_call.1} parent=1 // pred_fallthru
      _
    // Predicated region
    $region90: #{tpu_custom_call.1} parent=1 // pred_check
      _
    $region91: #{tpu_custom_call.1} parent=1 // pred_check_branch
      %157 = sbr.rel (0) target = $region93
    $region92: #{tpu_custom_call.1} parent=1 // pred_region
      %158 = dma.done [#allocation11], 128
    $region93: #{tpu_custom_call.1} parent=1 // pred_fallthru
      _
    // Predicated region
    $region94: #{tpu_custom_call.1} parent=1 // pred_check
      _
    $region95: #{tpu_custom_call.1} parent=1 // pred_check_branch
      %160 = sbr.rel (0) target = $region97
    $region96: #{tpu_custom_call.1} parent=1 // pred_region
      %161 = dma.done [#allocation14], 128
    $region97: #{tpu_custom_call.1} parent=1 // pred_fallthru
      _
    // Predicated region
    $region98: #{tpu_custom_call.1} parent=1 // pred_check
      _
    $region99: #{tpu_custom_call.1} parent=1 // pred_check_branch
      %163 = sbr.rel (0) target = $region101
    $region100: #{tpu_custom_call.1} parent=1 // pred_region
      %164 = dma.done [#allocation14], 128
    $region101: #{tpu_custom_call.1} parent=1 // pred_fallthru
      _
    // Predicated region
    $region102: #{tpu_custom_call.1} parent=1 // pred_check
      _
    $region103: #{tpu_custom_call.1} parent=1 // pred_check_branch
      %166 = sbr.rel (0) target = $region105
    $region104: #{tpu_custom_call.1} parent=1 // pred_region
      %167 = dma.done [#allocation17], 128
    $region105: #{tpu_custom_call.1} parent=1 // pred_fallthru
      _
    // Predicated region
    $region106: #{tpu_custom_call.1} parent=1 // pred_check
      _
    $region107: #{tpu_custom_call.1} parent=1 // pred_check_branch
      %169 = sbr.rel (0) target = $region109
    $region108: #{tpu_custom_call.1} parent=1 // pred_region
      %170 = dma.done [#allocation17], 128
    $region109: #{tpu_custom_call.1} parent=1 // pred_fallthru
      _
    %171 = sfence
    %v172 = vld [vmem:[#allocation6] sm:$0xff]
    %v173 = vld [vmem:[#allocation6 + $0x8] sm:$0xff]
    %v174 = vld [vmem:[#allocation7] sm:$0x3]
    %v175 = vld [vmem:[#allocation9] sm:$0x3]
    %176 = vrot.lane.b32.xlu0 %v172, 17
    %v177 = vpop.permute.xlu0 %176
    %178 = vrot.lane.b32.xlu0 %v173, 17
    %v179 = vpop.permute.xlu0 %178
    %v180 = vlaneseq
    %v181 = vand.u32 %v180, 127
    %vm182 = vcmp.lt.s32.totalorder %v181, 17
    %v183 = vsel %vm182, %v177, %v179
    %v184 = vsel %vm182, %v179, %v177
    %vm185 = vcmp.ge.s32.totalorder %v174, 1
    %vm186 = vcmp.ge.s32.totalorder %v175, 1
    %vm187 = vmand %vm185, %vm186
    %v188 = vsel %vm187, 1, 0
    %v189 = vlaneseq
    %v190 = vshrl.u32 %v189, 7
    %v191 = vsub.s32 0, %v190
    %v192 = vrot.slane %v188, %v191
    %v193 = vlaneseq
    %v194 = vshrl.u32 %v193, 7
    %v195 = vsub.s32 1, %v194
    %v196 = vrot.slane %v188, %v195
    %vm197 = vcmp.eq.s32.totalorder %v192, 1
    %vm198 = vcmp.eq.s32.totalorder %v196, 1
    %v199 = vsel %vm197, %v184, -inf
    %v200 = vsel %vm198, %v183, -inf
    %v201 = vmax.f32 %v172, %v199
    %v202 = vmax.f32 %v173, %v200
    %v203 = vsel %vm197, %v184, 0.0
    %v204 = vsel %vm198, %v183, 0.0
    %v205 = vadd.f32 %v172, %v203
    %v206 = vadd.f32 %v173, %v204
    %207 = vrot.lane.b32.xlu0 %v172, 16
    %v208 = vpop.permute.xlu0 %207
    %209 = vrot.lane.b32.xlu0 %v173, 16
    %v210 = vpop.permute.xlu0 %209
    %vm211 = vcmp.lt.s32.totalorder %v181, 16
    %v212 = vsel %vm211, %v208, %v210
    %v213 = vsel %vm211, %v210, %v208
    %v214 = vsel %vm185, 1, 0
    %v215 = vlaneseq
    %v216 = vshrl.u32 %v215, 7
    %v217 = vsub.s32 0, %v216
    %v218 = vrot.slane %v214, %v217
    %v219 = vlaneseq
    %v220 = vshrl.u32 %v219, 7
    %v221 = vsub.s32 1, %v220
    %v222 = vrot.slane %v214, %v221
    %vm223 = vcmp.eq.s32.totalorder %v218, 1
    %vm224 = vcmp.eq.s32.totalorder %v222, 1
    %v225 = vsel %vm223, %v213, -inf
    %v226 = vsel %vm224, %v212, -inf
    %v227 = vmax.f32 %v201, %v225
    %v228 = vmax.f32 %v202, %v226
    %v229 = vsel %vm223, %v213, 0.0
    %v230 = vsel %vm224, %v212, 0.0
    %v231 = vadd.f32 %v205, %v229
    %v232 = vadd.f32 %v206, %v230
    %233 = vrot.lane.b32.xlu0 %v172, 15
    %v234 = vpop.permute.xlu0 %233
    %235 = vrot.lane.b32.xlu0 %v173, 15
    %v236 = vpop.permute.xlu0 %235
    %vm237 = vcmp.lt.s32.totalorder %v181, 15
    %v238 = vsel %vm237, %v234, %v236
    %v239 = vsel %vm237, %v236, %v234
    %vm240 = vcmp.lt.s32.totalorder %v175, 15
    %vm241 = vmand %vm185, %vm240
    %v242 = vsel %vm241, 1, 0
    %v243 = vlaneseq
    %v244 = vshrl.u32 %v243, 7
    %v245 = vsub.s32 0, %v244
    %v246 = vrot.slane %v242, %v245
    %v247 = vlaneseq
    %v248 = vshrl.u32 %v247, 7
    %v249 = vsub.s32 1, %v248
    %v250 = vrot.slane %v242, %v249
    %vm251 = vcmp.eq.s32.totalorder %v246, 1
    %vm252 = vcmp.eq.s32.totalorder %v250, 1
    %v253 = vsel %vm251, %v239, -inf
    %v254 = vsel %vm252, %v238, -inf
    %v255 = vmax.f32 %v227, %v253
    %v256 = vmax.f32 %v228, %v254
    %v257 = vsel %vm251, %v239, 0.0
    %v258 = vsel %vm252, %v238, 0.0
    %v259 = vadd.f32 %v231, %v257
    %v260 = vadd.f32 %v232, %v258
    %261 = vrot.lane.b32.xlu0 %v172, 1
    %v262 = vpop.permute.xlu0 %261
    %263 = vrot.lane.b32.xlu0 %v173, 1
    %v264 = vpop.permute.xlu0 %263
    %vm265 = vcmp.lt.s32.totalorder %v181, 1
    %v266 = vsel %vm265, %v262, %v264
    %v267 = vsel %vm265, %v264, %v262
    %v268 = vsel %vm186, 1, 0
    %v269 = vlaneseq
    %v270 = vshrl.u32 %v269, 7
    %v271 = vsub.s32 0, %v270
    %v272 = vrot.slane %v268, %v271
    %v273 = vlaneseq
    %v274 = vshrl.u32 %v273, 7
    %v275 = vsub.s32 1, %v274
    %v276 = vrot.slane %v268, %v275
    %vm277 = vcmp.eq.s32.totalorder %v272, 1
    %vm278 = vcmp.eq.s32.totalorder %v276, 1
    %v279 = vsel %vm277, %v267, -inf
    %v280 = vsel %vm278, %v266, -inf
    %v281 = vmax.f32 %v255, %v279
    %v282 = vmax.f32 %v256, %v280
    %v283 = vsel %vm277, %v267, 0.0
    %v284 = vsel %vm278, %v266, 0.0
    %v285 = vadd.f32 %v259, %v283
    %v286 = vadd.f32 %v260, %v284
    %287 = vrot.lane.b32.xlu0 %v172, 127
    %v288 = vpop.permute.xlu0 %287
    %289 = vrot.lane.b32.xlu0 %v173, 127
    %v290 = vpop.permute.xlu0 %289
    %vm291 = vcmp.lt.s32.totalorder %v181, 127
    %v292 = vsel %vm291, %v288, %v290
    %v293 = vsel %vm291, %v290, %v288
    %v294 = vsel %vm240, 1, 0
    %v295 = vlaneseq
    %v296 = vshrl.u32 %v295, 7
    %v297 = vsub.s32 0, %v296
    %v298 = vrot.slane %v294, %v297
    %v299 = vlaneseq
    %v300 = vshrl.u32 %v299, 7
    %v301 = vsub.s32 1, %v300
    %v302 = vrot.slane %v294, %v301
    %vm303 = vcmp.eq.s32.totalorder %v298, 1
    %vm304 = vcmp.eq.s32.totalorder %v302, 1
    %v305 = vsel %vm303, %v292, -inf
    %v306 = vsel %vm304, %v293, -inf
    %v307 = vmax.f32 %v281, %v305
    %v308 = vmax.f32 %v282, %v306
    %v309 = vsel %vm303, %v292, 0.0
    %v310 = vsel %vm304, %v293, 0.0
    %v311 = vadd.f32 %v285, %v309
    %v312 = vadd.f32 %v286, %v310
    %313 = vrot.lane.b32.xlu0 %v172, 113
    %v314 = vpop.permute.xlu0 %313
    %315 = vrot.lane.b32.xlu0 %v173, 113
    %v316 = vpop.permute.xlu0 %315
    %vm317 = vcmp.lt.s32.totalorder %v181, 113
    %v318 = vsel %vm317, %v314, %v316
    %v319 = vsel %vm317, %v316, %v314
    %vm320 = vcmp.lt.s32.totalorder %v174, 15
    %vm321 = vmand %vm320, %vm186
    %v322 = vsel %vm321, 1, 0
    %v323 = vlaneseq
    %v324 = vshrl.u32 %v323, 7
    %v325 = vsub.s32 0, %v324
    %v326 = vrot.slane %v322, %v325
    %v327 = vlaneseq
    %v328 = vshrl.u32 %v327, 7
    %v329 = vsub.s32 1, %v328
    %v330 = vrot.slane %v322, %v329
    %vm331 = vcmp.eq.s32.totalorder %v326, 1
    %vm332 = vcmp.eq.s32.totalorder %v330, 1
    %v333 = vsel %vm331, %v318, -inf
    %v334 = vsel %vm332, %v319, -inf
    %v335 = vmax.f32 %v307, %v333
    %v336 = vmax.f32 %v308, %v334
    %v337 = vsel %vm331, %v318, 0.0
    %v338 = vsel %vm332, %v319, 0.0
    %v339 = vadd.f32 %v311, %v337
    %v340 = vadd.f32 %v312, %v338
    %341 = vrot.lane.b32.xlu0 %v172, 112
    %v342 = vpop.permute.xlu0 %341
    %343 = vrot.lane.b32.xlu0 %v173, 112
    %v344 = vpop.permute.xlu0 %343
    %vm345 = vcmp.lt.s32.totalorder %v181, 112
    %v346 = vsel %vm345, %v342, %v344
    %v347 = vsel %vm345, %v344, %v342
    %v348 = vsel %vm320, 1, 0
    %v349 = vlaneseq
    %v350 = vshrl.u32 %v349, 7
    %v351 = vsub.s32 0, %v350
    %v352 = vrot.slane %v348, %v351
    %v353 = vlaneseq
    %v354 = vshrl.u32 %v353, 7
    %v355 = vsub.s32 1, %v354
    %v356 = vrot.slane %v348, %v355
    %vm357 = vcmp.eq.s32.totalorder %v352, 1
    %vm358 = vcmp.eq.s32.totalorder %v356, 1
    %v359 = vsel %vm357, %v346, -inf
    %v360 = vsel %vm358, %v347, -inf
    %v361 = vmax.f32 %v335, %v359
    %v362 = vmax.f32 %v336, %v360
    %v363 = vsel %vm357, %v346, 0.0
    %v364 = vsel %vm358, %v347, 0.0
    %v365 = vadd.f32 %v339, %v363
    %v366 = vadd.f32 %v340, %v364
    %367 = vrot.lane.b32.xlu0 %v172, 111
    %v368 = vpop.permute.xlu0 %367
    %369 = vrot.lane.b32.xlu0 %v173, 111
    %v370 = vpop.permute.xlu0 %369
    %vm371 = vcmp.lt.s32.totalorder %v181, 111
    %v372 = vsel %vm371, %v368, %v370
    %v373 = vsel %vm371, %v370, %v368
    %vm374 = vmand %vm320, %vm240
    %v375 = vsel %vm374, 1, 0
    %v376 = vlaneseq
    %v377 = vshrl.u32 %v376, 7
    %v378 = vsub.s32 0, %v377
    %v379 = vrot.slane %v375, %v378
    %v380 = vlaneseq
    %v381 = vshrl.u32 %v380, 7
    %v382 = vsub.s32 1, %v381
    %v383 = vrot.slane %v375, %v382
    %vm384 = vcmp.eq.s32.totalorder %v379, 1
    %vm385 = vcmp.eq.s32.totalorder %v383, 1
    %v386 = vsel %vm384, %v372, -inf
    %v387 = vsel %vm385, %v373, -inf
    %v388 = vmax.f32 %v361, %v386
    %v389 = vmax.f32 %v362, %v387
    %v390 = vsel %vm384, %v372, 0.0
    %v391 = vsel %vm385, %v373, 0.0
    %v392 = vadd.f32 %v365, %v390
    %v393 = vadd.f32 %v366, %v391
    %s394 = sld [smem:[#allocation2 + $0x1]]
    %v395 = vmul.f32 %v388, %v388
    %v396 = vmul.f32 %v389, %v389
    %v397 = vrot.slane %v388, 4
    %v398 = vrot.slane %v389, 4
    %v399 = vadd.f32 %v388, %v397
    %v400 = vadd.f32 %v389, %v398
    %v401 = vrot.slane %v395, 4
    %v402 = vrot.slane %v396, 4
    %v403 = vadd.f32 %v395, %v401
    %v404 = vadd.f32 %v396, %v402
    %v405 = vadd.f32 %v399, %v400
    %406 = vadd.xlane.f32.xlu0 %v405
    %v407 = vpop.xlane.xlu0 %406
    %v408 = vmul.f32 %v407, 0.001953125
    %v409 = vadd.f32 %v403, %v404
    %410 = vadd.xlane.f32.xlu0 %v409
    %v411 = vpop.xlane.xlu0 %410
    %v412 = vmul.f32 %v411, 0.001953125
    %v413 = vmul.f32 %v408, %v408
    %v414 = vsub.f32 %v412, %v413
    %v415 = vmax.f32 %v414, 0.0
    %v416 = vsub.f32 %v388, %v408
    %v417 = vsub.f32 %v389, %v408
    %v418 = vadd.f32 %v415, 1e-05
    %v419 = vrsqrt.pop %v418
    %v420 = vmul.f32 %v416, %v419
    %v421 = vmul.f32 %v417, %v419
    %v422 = vstv %s394
    %v423 = vmul.f32 %v422, %v420
    %v424 = vmul.f32 %v422, %v421
    %s425 = sld [smem:[#allocation2 + $0x2]]
    %v426 = vld [vmem:[#allocation10] sm:$0x3]
    %v428 = vlaneseq
    %v429 = vshrl.u32 %v428, 7
    %v430 = vsub.s32 0, %v429
    %v431 = vrot.slane %v426, %v430
    %v432 = vlaneseq
    %v433 = vshrl.u32 %v432, 7
    %v434 = vsub.s32 1, %v433
    %v435 = vrot.slane %v426, %v434
    %v438 = vmul.f32 %v392, %v431
    %v439 = vmul.f32 %v393, %v435
    %v440 = vmul.f32 %v438, %v438
    %v441 = vmul.f32 %v439, %v439
    %v442 = vrot.slane %v438, 4
    %v443 = vrot.slane %v439, 4
    %v444 = vadd.f32 %v438, %v442
    %v445 = vadd.f32 %v439, %v443
    %v446 = vrot.slane %v440, 4
    %v447 = vrot.slane %v441, 4
    %v448 = vadd.f32 %v440, %v446
    %v449 = vadd.f32 %v441, %v447
    %v450 = vadd.f32 %v444, %v445
    %451 = vadd.xlane.f32.xlu0 %v450
    %v452 = vpop.xlane.xlu0 %451
    %v453 = vmul.f32 %v452, 0.001953125
    %v454 = vadd.f32 %v448, %v449
    %455 = vadd.xlane.f32.xlu0 %v454
    %v456 = vpop.xlane.xlu0 %455
    %v457 = vmul.f32 %v456, 0.001953125
    %v458 = vmul.f32 %v453, %v453
    %v459 = vsub.f32 %v457, %v458
    %v460 = vmax.f32 %v459, 0.0
    %v461 = vsub.f32 %v438, %v453
    %v462 = vsub.f32 %v439, %v453
    %v463 = vadd.f32 %v460, 1e-05
    %v464 = vrsqrt.pop %v463
    %v465 = vmul.f32 %v461, %v464
    %v466 = vmul.f32 %v462, %v464
    %v467 = vstv %s425
    %v468 = vmul.f32 %v467, %v465
    %v469 = vmul.f32 %v467, %v466
    %v470 = vadd.f32 %v423, %v468
    %v471 = vadd.f32 %v424, %v469
    %s472 = sld [smem:[#allocation2 + $0x3]]
    %v473 = vstv %s472
    %v474 = vmul.f32 %v473, %v172
    %v475 = vmul.f32 %v473, %v173
    %v476 = vadd.f32 %v470, %v474
    %v477 = vadd.f32 %v471, %v475
    %v478 = vmax.f32 %v172, 0.0
    %v479 = vmax.f32 %v173, 0.0
    %v480 = vld [vmem:[%s5] sm:$0xff]
    %v481 = vld [vmem:[%s9] sm:$0xff]
    %v482 = vld [vmem:[%s13] sm:$0xff]
    %v483 = vld [vmem:[%s15] sm:$0xff]
    %484 = vrot.lane.b32.xlu0 %v478, 68
    %v485 = vpop.permute.xlu0 %484
    %486 = vrot.lane.b32.xlu0 %v479, 68
    %v487 = vpop.permute.xlu0 %486
    %vm488 = vcmp.lt.s32.totalorder %v181, 68
    %v489 = vsel %vm488, %v485, %v487
    %v490 = vsel %vm488, %v487, %v485
    %vm491 = vcmp.ge.s32.totalorder %v174, 4
    %vm492 = vcmp.ge.s32.totalorder %v175, 4
    %vm493 = vmand %vm491, %vm492
    %v494 = vsel %vm493, 1, 0
    %v495 = vlaneseq
    %v496 = vshrl.u32 %v495, 7
    %v497 = vsub.s32 0, %v496
    %v498 = vrot.slane %v494, %v497
    %v499 = vlaneseq
    %v500 = vshrl.u32 %v499, 7
    %v501 = vsub.s32 1, %v500
    %v502 = vrot.slane %v494, %v501
    %vm503 = vcmp.eq.s32.totalorder %v498, 1
    %vm504 = vcmp.eq.s32.totalorder %v502, 1
    %v505 = vsel %vm503, %v490, 0.0
    %v506 = vsel %vm504, %v489, 0.0
    %508 = vset.pattern.permute.xlu0 0
    %509 = vperm.xlu0 %508, %v483
    %v510 = vpop.permute.xlu0 %509
    %v512 = vmul.f32 %v505, %v510
    %v513 = vmul.f32 %v506, %v510
    %514 = vrot.lane.b32.xlu0 %v478, 66
    %v515 = vpop.permute.xlu0 %514
    %516 = vrot.lane.b32.xlu0 %v479, 66
    %v517 = vpop.permute.xlu0 %516
    %vm518 = vcmp.lt.s32.totalorder %v181, 66
    %v519 = vsel %vm518, %v515, %v517
    %v520 = vsel %vm518, %v517, %v515
    %vm521 = vcmp.ge.s32.totalorder %v175, 2
    %vm522 = vmand %vm491, %vm521
    %v523 = vsel %vm522, 1, 0
    %v524 = vlaneseq
    %v525 = vshrl.u32 %v524, 7
    %v526 = vsub.s32 0, %v525
    %v527 = vrot.slane %v523, %v526
    %v528 = vlaneseq
    %v529 = vshrl.u32 %v528, 7
    %v530 = vsub.s32 1, %v529
    %v531 = vrot.slane %v523, %v530
    %vm532 = vcmp.eq.s32.totalorder %v527, 1
    %vm533 = vcmp.eq.s32.totalorder %v531, 1
    %v534 = vsel %vm532, %v520, 0.0
    %v535 = vsel %vm533, %v519, 0.0
    %536 = vset.pattern.permute.xlu0 1
    %537 = vperm.xlu0 %536, %v483
    %v538 = vpop.permute.xlu0 %537
    %v540 = vmul.f32 %v534, %v538
    %v541 = vmul.f32 %v535, %v538
    %542 = vrot.lane.b32.xlu0 %v478, 64
    %v543 = vpop.permute.xlu0 %542
    %544 = vrot.lane.b32.xlu0 %v479, 64
    %v545 = vpop.permute.xlu0 %544
    %vm546 = vcmp.lt.s32.totalorder %v181, 64
    %v547 = vsel %vm546, %v543, %v545
    %v548 = vsel %vm546, %v545, %v543
    %v549 = vsel %vm491, 1, 0
    %v550 = vlaneseq
    %v551 = vshrl.u32 %v550, 7
    %v552 = vsub.s32 0, %v551
    %v553 = vrot.slane %v549, %v552
    %v554 = vlaneseq
    %v555 = vshrl.u32 %v554, 7
    %v556 = vsub.s32 1, %v555
    %v557 = vrot.slane %v549, %v556
    %vm558 = vcmp.eq.s32.totalorder %v553, 1
    %vm559 = vcmp.eq.s32.totalorder %v557, 1
    %v560 = vsel %vm558, %v548, 0.0
    %v561 = vsel %vm559, %v547, 0.0
    %562 = vset.pattern.permute.xlu0 2
    %563 = vperm.xlu0 %562, %v483
    %v564 = vpop.permute.xlu0 %563
    %v566 = vmul.f32 %v560, %v564
    %v567 = vmul.f32 %v561, %v564
    %v568 = vadd.f32 %v512, %v566
    %v569 = vadd.f32 %v513, %v567
    %570 = vrot.lane.b32.xlu0 %v478, 62
    %v571 = vpop.permute.xlu0 %570
    %572 = vrot.lane.b32.xlu0 %v479, 62
    %v573 = vpop.permute.xlu0 %572
    %vm574 = vcmp.lt.s32.totalorder %v181, 62
    %v575 = vsel %vm574, %v571, %v573
    %v576 = vsel %vm574, %v573, %v571
    %vm577 = vcmp.lt.s32.totalorder %v175, 14
    %vm578 = vmand %vm491, %vm577
    %v579 = vsel %vm578, 1, 0
    %v580 = vlaneseq
    %v581 = vshrl.u32 %v580, 7
    %v582 = vsub.s32 0, %v581
    %v583 = vrot.slane %v579, %v582
    %v584 = vlaneseq
    %v585 = vshrl.u32 %v584, 7
    %v586 = vsub.s32 1, %v585
    %v587 = vrot.slane %v579, %v586
    %vm588 = vcmp.eq.s32.totalorder %v583, 1
    %vm589 = vcmp.eq.s32.totalorder %v587, 1
    %v590 = vsel %vm588, %v576, 0.0
    %v591 = vsel %vm589, %v575, 0.0
    %592 = vset.pattern.permute.xlu0 3
    %593 = vperm.xlu0 %592, %v483
    %v594 = vpop.permute.xlu0 %593
    %v596 = vmul.f32 %v590, %v594
    %v597 = vmul.f32 %v591, %v594
    %v598 = vadd.f32 %v540, %v596
    %v599 = vadd.f32 %v541, %v597
    %600 = vrot.lane.b32.xlu0 %v478, 60
    %v601 = vpop.permute.xlu0 %600
    %602 = vrot.lane.b32.xlu0 %v479, 60
    %v603 = vpop.permute.xlu0 %602
    %vm604 = vcmp.lt.s32.totalorder %v181, 60
    %v605 = vsel %vm604, %v601, %v603
    %v606 = vsel %vm604, %v603, %v601
    %vm607 = vcmp.lt.s32.totalorder %v175, 12
    %vm608 = vmand %vm491, %vm607
    %v609 = vsel %vm608, 1, 0
    %v610 = vlaneseq
    %v611 = vshrl.u32 %v610, 7
    %v612 = vsub.s32 0, %v611
    %v613 = vrot.slane %v609, %v612
    %v614 = vlaneseq
    %v615 = vshrl.u32 %v614, 7
    %v616 = vsub.s32 1, %v615
    %v617 = vrot.slane %v609, %v616
    %vm618 = vcmp.eq.s32.totalorder %v613, 1
    %vm619 = vcmp.eq.s32.totalorder %v617, 1
    %v620 = vsel %vm618, %v606, 0.0
    %v621 = vsel %vm619, %v605, 0.0
    %622 = vset.pattern.permute.xlu0 4
    %623 = vperm.xlu0 %622, %v483
    %v624 = vpop.permute.xlu0 %623
    %v626 = vmul.f32 %v620, %v624
    %v627 = vmul.f32 %v621, %v624
    %v628 = vadd.f32 %v568, %v626
    %v629 = vadd.f32 %v569, %v627
    %630 = vrot.lane.b32.xlu0 %v478, 36
    %v631 = vpop.permute.xlu0 %630
    %632 = vrot.lane.b32.xlu0 %v479, 36
    %v633 = vpop.permute.xlu0 %632
    %vm634 = vcmp.lt.s32.totalorder %v181, 36
    %v635 = vsel %vm634, %v631, %v633
    %v636 = vsel %vm634, %v633, %v631
    %vm637 = vcmp.ge.s32.totalorder %v174, 2
    %vm638 = vmand %vm637, %vm492
    %v639 = vsel %vm638, 1, 0
    %v640 = vlaneseq
    %v641 = vshrl.u32 %v640, 7
    %v642 = vsub.s32 0, %v641
    %v643 = vrot.slane %v639, %v642
    %v644 = vlaneseq
    %v645 = vshrl.u32 %v644, 7
    %v646 = vsub.s32 1, %v645
    %v647 = vrot.slane %v639, %v646
    %vm648 = vcmp.eq.s32.totalorder %v643, 1
    %vm649 = vcmp.eq.s32.totalorder %v647, 1
    %v650 = vsel %vm648, %v636, 0.0
    %v651 = vsel %vm649, %v635, 0.0
    %652 = vset.pattern.permute.xlu0 5
    %653 = vperm.xlu0 %652, %v483
    %v654 = vpop.permute.xlu0 %653
    %v656 = vmul.f32 %v650, %v654
    %v657 = vmul.f32 %v651, %v654
    %v658 = vadd.f32 %v598, %v656
    %v659 = vadd.f32 %v599, %v657
    %660 = vrot.lane.b32.xlu0 %v478, 34
    %v661 = vpop.permute.xlu0 %660
    %662 = vrot.lane.b32.xlu0 %v479, 34
    %v663 = vpop.permute.xlu0 %662
    %vm664 = vcmp.lt.s32.totalorder %v181, 34
    %v665 = vsel %vm664, %v661, %v663
    %v666 = vsel %vm664, %v663, %v661
    %vm667 = vmand %vm637, %vm521
    %v668 = vsel %vm667, 1, 0
    %v669 = vlaneseq
    %v670 = vshrl.u32 %v669, 7
    %v671 = vsub.s32 0, %v670
    %v672 = vrot.slane %v668, %v671
    %v673 = vlaneseq
    %v674 = vshrl.u32 %v673, 7
    %v675 = vsub.s32 1, %v674
    %v676 = vrot.slane %v668, %v675
    %vm677 = vcmp.eq.s32.totalorder %v672, 1
    %vm678 = vcmp.eq.s32.totalorder %v676, 1
    %v679 = vsel %vm677, %v666, 0.0
    %v680 = vsel %vm678, %v665, 0.0
    %682 = vset.pattern.permute.xlu0 0
    %683 = vperm.xlu0 %682, %v481
    %v684 = vpop.permute.xlu0 %683
    %v686 = vmul.f32 %v679, %v684
    %v687 = vmul.f32 %v680, %v684
    %689 = vset.pattern.permute.xlu0 0
    %690 = vperm.xlu0 %689, %v482
    %v691 = vpop.permute.xlu0 %690
    %v693 = vmul.f32 %v679, %v691
    %v694 = vmul.f32 %v680, %v691
    %695 = vset.pattern.permute.xlu0 6
    %696 = vperm.xlu0 %695, %v483
    %v697 = vpop.permute.xlu0 %696
    %v699 = vmul.f32 %v679, %v697
    %v700 = vmul.f32 %v680, %v697
    %v701 = vadd.f32 %v628, %v699
    %v702 = vadd.f32 %v629, %v700
    %703 = vrot.lane.b32.xlu0 %v478, 33
    %v704 = vpop.permute.xlu0 %703
    %705 = vrot.lane.b32.xlu0 %v479, 33
    %v706 = vpop.permute.xlu0 %705
    %vm707 = vcmp.lt.s32.totalorder %v181, 33
    %v708 = vsel %vm707, %v704, %v706
    %v709 = vsel %vm707, %v706, %v704
    %vm710 = vmand %vm637, %vm186
    %v711 = vsel %vm710, 1, 0
    %v712 = vlaneseq
    %v713 = vshrl.u32 %v712, 7
    %v714 = vsub.s32 0, %v713
    %v715 = vrot.slane %v711, %v714
    %v716 = vlaneseq
    %v717 = vshrl.u32 %v716, 7
    %v718 = vsub.s32 1, %v717
    %v719 = vrot.slane %v711, %v718
    %vm720 = vcmp.eq.s32.totalorder %v715, 1
    %vm721 = vcmp.eq.s32.totalorder %v719, 1
    %v722 = vsel %vm720, %v709, 0.0
    %v723 = vsel %vm721, %v708, 0.0
    %724 = vset.pattern.permute.xlu0 1
    %725 = vperm.xlu0 %724, %v481
    %v726 = vpop.permute.xlu0 %725
    %v728 = vmul.f32 %v722, %v726
    %v729 = vmul.f32 %v723, %v726
    %730 = vrot.lane.b32.xlu0 %v478, 32
    %v731 = vpop.permute.xlu0 %730
    %732 = vrot.lane.b32.xlu0 %v479, 32
    %v733 = vpop.permute.xlu0 %732
    %vm734 = vcmp.lt.s32.totalorder %v181, 32
    %v735 = vsel %vm734, %v731, %v733
    %v736 = vsel %vm734, %v733, %v731
    %v737 = vsel %vm637, 1, 0
    %v738 = vlaneseq
    %v739 = vshrl.u32 %v738, 7
    %v740 = vsub.s32 0, %v739
    %v741 = vrot.slane %v737, %v740
    %v742 = vlaneseq
    %v743 = vshrl.u32 %v742, 7
    %v744 = vsub.s32 1, %v743
    %v745 = vrot.slane %v737, %v744
    %vm746 = vcmp.eq.s32.totalorder %v741, 1
    %vm747 = vcmp.eq.s32.totalorder %v745, 1
    %v748 = vsel %vm746, %v736, 0.0
    %v749 = vsel %vm747, %v735, 0.0
    %750 = vset.pattern.permute.xlu0 2
    %751 = vperm.xlu0 %750, %v481
    %v752 = vpop.permute.xlu0 %751
    %v754 = vmul.f32 %v748, %v752
    %v755 = vmul.f32 %v749, %v752
    %v756 = vadd.f32 %v686, %v754
    %v757 = vadd.f32 %v687, %v755
    %758 = vset.pattern.permute.xlu0 1
    %759 = vperm.xlu0 %758, %v482
    %v760 = vpop.permute.xlu0 %759
    %v762 = vmul.f32 %v748, %v760
    %v763 = vmul.f32 %v749, %v760
    %v764 = vadd.f32 %v693, %v762
    %v765 = vadd.f32 %v694, %v763
    %766 = vset.pattern.permute.xlu0 7
    %767 = vperm.xlu0 %766, %v483
    %v768 = vpop.permute.xlu0 %767
    %v770 = vmul.f32 %v748, %v768
    %v771 = vmul.f32 %v749, %v768
    %v772 = vadd.f32 %v701, %v770
    %v773 = vadd.f32 %v702, %v771
    %774 = vrot.lane.b32.xlu0 %v478, 31
    %v775 = vpop.permute.xlu0 %774
    %776 = vrot.lane.b32.xlu0 %v479, 31
    %v777 = vpop.permute.xlu0 %776
    %vm778 = vcmp.lt.s32.totalorder %v181, 31
    %v779 = vsel %vm778, %v775, %v777
    %v780 = vsel %vm778, %v777, %v775
    %vm781 = vmand %vm637, %vm240
    %v782 = vsel %vm781, 1, 0
    %v783 = vlaneseq
    %v784 = vshrl.u32 %v783, 7
    %v785 = vsub.s32 0, %v784
    %v786 = vrot.slane %v782, %v785
    %v787 = vlaneseq
    %v788 = vshrl.u32 %v787, 7
    %v789 = vsub.s32 1, %v788
    %v790 = vrot.slane %v782, %v789
    %vm791 = vcmp.eq.s32.totalorder %v786, 1
    %vm792 = vcmp.eq.s32.totalorder %v790, 1
    %v793 = vsel %vm791, %v780, 0.0
    %v794 = vsel %vm792, %v779, 0.0
    %795 = vset.pattern.permute.xlu0 3
    %796 = vperm.xlu0 %795, %v481
    %v797 = vpop.permute.xlu0 %796
    %v799 = vmul.f32 %v793, %v797
    %v800 = vmul.f32 %v794, %v797
    %v801 = vadd.f32 %v728, %v799
    %v802 = vadd.f32 %v729, %v800
    %803 = vrot.lane.b32.xlu0 %v478, 30
    %v804 = vpop.permute.xlu0 %803
    %805 = vrot.lane.b32.xlu0 %v479, 30
    %v806 = vpop.permute.xlu0 %805
    %vm807 = vcmp.lt.s32.totalorder %v181, 30
    %v808 = vsel %vm807, %v804, %v806
    %v809 = vsel %vm807, %v806, %v804
    %vm810 = vmand %vm637, %vm577
    %v811 = vsel %vm810, 1, 0
    %v812 = vlaneseq
    %v813 = vshrl.u32 %v812, 7
    %v814 = vsub.s32 0, %v813
    %v815 = vrot.slane %v811, %v814
    %v816 = vlaneseq
    %v817 = vshrl.u32 %v816, 7
    %v818 = vsub.s32 1, %v817
    %v819 = vrot.slane %v811, %v818
    %vm820 = vcmp.eq.s32.totalorder %v815, 1
    %vm821 = vcmp.eq.s32.totalorder %v819, 1
    %v822 = vsel %vm820, %v809, 0.0
    %v823 = vsel %vm821, %v808, 0.0
    %824 = vset.pattern.permute.xlu0 4
    %825 = vperm.xlu0 %824, %v481
    %v826 = vpop.permute.xlu0 %825
    %v828 = vmul.f32 %v822, %v826
    %v829 = vmul.f32 %v823, %v826
    %v830 = vadd.f32 %v756, %v828
    %v831 = vadd.f32 %v757, %v829
    %832 = vset.pattern.permute.xlu0 2
    %833 = vperm.xlu0 %832, %v482
    %v834 = vpop.permute.xlu0 %833
    %v836 = vmul.f32 %v822, %v834
    %v837 = vmul.f32 %v823, %v834
    %v838 = vadd.f32 %v764, %v836
    %v839 = vadd.f32 %v765, %v837
    %840 = vset.pattern.permute.xlu0 8
    %841 = vperm.xlu0 %840, %v483
    %v842 = vpop.permute.xlu0 %841
    %v844 = vmul.f32 %v822, %v842
    %v845 = vmul.f32 %v823, %v842
    %v846 = vadd.f32 %v772, %v844
    %v847 = vadd.f32 %v773, %v845
    %848 = vrot.lane.b32.xlu0 %v478, 28
    %v849 = vpop.permute.xlu0 %848
    %850 = vrot.lane.b32.xlu0 %v479, 28
    %v851 = vpop.permute.xlu0 %850
    %vm852 = vcmp.lt.s32.totalorder %v181, 28
    %v853 = vsel %vm852, %v849, %v851
    %v854 = vsel %vm852, %v851, %v849
    %vm855 = vmand %vm637, %vm607
    %v856 = vsel %vm855, 1, 0
    %v857 = vlaneseq
    %v858 = vshrl.u32 %v857, 7
    %v859 = vsub.s32 0, %v858
    %v860 = vrot.slane %v856, %v859
    %v861 = vlaneseq
    %v862 = vshrl.u32 %v861, 7
    %v863 = vsub.s32 1, %v862
    %v864 = vrot.slane %v856, %v863
    %vm865 = vcmp.eq.s32.totalorder %v860, 1
    %vm866 = vcmp.eq.s32.totalorder %v864, 1
    %v867 = vsel %vm865, %v854, 0.0
    %v868 = vsel %vm866, %v853, 0.0
    %869 = vset.pattern.permute.xlu0 9
    %870 = vperm.xlu0 %869, %v483
    %v871 = vpop.permute.xlu0 %870
    %v873 = vmul.f32 %v867, %v871
    %v874 = vmul.f32 %v868, %v871
    %v875 = vadd.f32 %v658, %v873
    %v876 = vadd.f32 %v659, %v874
    %877 = vrot.lane.b32.xlu0 %v478, 18
    %v878 = vpop.permute.xlu0 %877
    %879 = vrot.lane.b32.xlu0 %v479, 18
    %v880 = vpop.permute.xlu0 %879
    %vm881 = vcmp.lt.s32.totalorder %v181, 18
    %v882 = vsel %vm881, %v878, %v880
    %v883 = vsel %vm881, %v880, %v878
    %vm884 = vmand %vm185, %vm521
    %v885 = vsel %vm884, 1, 0
    %v886 = vlaneseq
    %v887 = vshrl.u32 %v886, 7
    %v888 = vsub.s32 0, %v887
    %v889 = vrot.slane %v885, %v888
    %v890 = vlaneseq
    %v891 = vshrl.u32 %v890, 7
    %v892 = vsub.s32 1, %v891
    %v893 = vrot.slane %v885, %v892
    %vm894 = vcmp.eq.s32.totalorder %v889, 1
    %vm895 = vcmp.eq.s32.totalorder %v893, 1
    %v896 = vsel %vm894, %v883, 0.0
    %v897 = vsel %vm895, %v882, 0.0
    %898 = vset.pattern.permute.xlu0 5
    %899 = vperm.xlu0 %898, %v481
    %v900 = vpop.permute.xlu0 %899
    %v902 = vmul.f32 %v896, %v900
    %v903 = vmul.f32 %v897, %v900
    %v904 = vadd.f32 %v830, %v902
    %v905 = vadd.f32 %v831, %v903
    %906 = vrot.lane.b32.xlu0 %v478, 17
    %v907 = vpop.permute.xlu0 %906
    %908 = vrot.lane.b32.xlu0 %v479, 17
    %v909 = vpop.permute.xlu0 %908
    %v910 = vsel %vm182, %v907, %v909
    %v911 = vsel %vm182, %v909, %v907
    %v912 = vsel %vm197, %v911, 0.0
    %v913 = vsel %vm198, %v910, 0.0
    %915 = vset.pattern.permute.xlu0 0
    %916 = vperm.xlu0 %915, %v480
    %v917 = vpop.permute.xlu0 %916
    %v919 = vmul.f32 %v912, %v917
    %v920 = vmul.f32 %v913, %v917
    %921 = vset.pattern.permute.xlu0 6
    %922 = vperm.xlu0 %921, %v481
    %v923 = vpop.permute.xlu0 %922
    %v925 = vmul.f32 %v912, %v923
    %v926 = vmul.f32 %v913, %v923
    %v927 = vadd.f32 %v801, %v925
    %v928 = vadd.f32 %v802, %v926
    %929 = vrot.lane.b32.xlu0 %v478, 16
    %v930 = vpop.permute.xlu0 %929
    %931 = vrot.lane.b32.xlu0 %v479, 16
    %v932 = vpop.permute.xlu0 %931
    %v933 = vsel %vm211, %v930, %v932
    %v934 = vsel %vm211, %v932, %v930
    %v935 = vsel %vm223, %v934, 0.0
    %v936 = vsel %vm224, %v933, 0.0
    %937 = vset.pattern.permute.xlu0 1
    %938 = vperm.xlu0 %937, %v480
    %v939 = vpop.permute.xlu0 %938
    %v941 = vmul.f32 %v935, %v939
    %v942 = vmul.f32 %v936, %v939
    %943 = vset.pattern.permute.xlu0 7
    %944 = vperm.xlu0 %943, %v481
    %v945 = vpop.permute.xlu0 %944
    %v947 = vmul.f32 %v935, %v945
    %v948 = vmul.f32 %v936, %v945
    %v949 = vadd.f32 %v904, %v947
    %v950 = vadd.f32 %v905, %v948
    %951 = vrot.lane.b32.xlu0 %v478, 15
    %v952 = vpop.permute.xlu0 %951
    %953 = vrot.lane.b32.xlu0 %v479, 15
    %v954 = vpop.permute.xlu0 %953
    %v955 = vsel %vm237, %v952, %v954
    %v956 = vsel %vm237, %v954, %v952
    %v957 = vsel %vm251, %v956, 0.0
    %v958 = vsel %vm252, %v955, 0.0
    %959 = vset.pattern.permute.xlu0 2
    %960 = vperm.xlu0 %959, %v480
    %v961 = vpop.permute.xlu0 %960
    %v963 = vmul.f32 %v957, %v961
    %v964 = vmul.f32 %v958, %v961
    %v965 = vadd.f32 %v919, %v963
    %v966 = vadd.f32 %v920, %v964
    %967 = vset.pattern.permute.xlu0 8
    %968 = vperm.xlu0 %967, %v481
    %v969 = vpop.permute.xlu0 %968
    %v971 = vmul.f32 %v957, %v969
    %v972 = vmul.f32 %v958, %v969
    %v973 = vadd.f32 %v927, %v971
    %v974 = vadd.f32 %v928, %v972
    %975 = vrot.lane.b32.xlu0 %v478, 14
    %v976 = vpop.permute.xlu0 %975
    %977 = vrot.lane.b32.xlu0 %v479, 14
    %v978 = vpop.permute.xlu0 %977
    %vm979 = vcmp.lt.s32.totalorder %v181, 14
    %v980 = vsel %vm979, %v976, %v978
    %v981 = vsel %vm979, %v978, %v976
    %vm982 = vmand %vm185, %vm577
    %v983 = vsel %vm982, 1, 0
    %v984 = vlaneseq
    %v985 = vshrl.u32 %v984, 7
    %v986 = vsub.s32 0, %v985
    %v987 = vrot.slane %v983, %v986
    %v988 = vlaneseq
    %v989 = vshrl.u32 %v988, 7
    %v990 = vsub.s32 1, %v989
    %v991 = vrot.slane %v983, %v990
    %vm992 = vcmp.eq.s32.totalorder %v987, 1
    %vm993 = vcmp.eq.s32.totalorder %v991, 1
    %v994 = vsel %vm992, %v981, 0.0
    %v995 = vsel %vm993, %v980, 0.0
    %996 = vset.pattern.permute.xlu0 9
    %997 = vperm.xlu0 %996, %v481
    %v998 = vpop.permute.xlu0 %997
    %v1000 = vmul.f32 %v994, %v998
    %v1001 = vmul.f32 %v995, %v998
    %v1002 = vadd.f32 %v949, %v1000
    %v1003 = vadd.f32 %v950, %v1001
    %1004 = vrot.lane.b32.xlu0 %v478, 4
    %v1005 = vpop.permute.xlu0 %1004
    %1006 = vrot.lane.b32.xlu0 %v479, 4
    %v1007 = vpop.permute.xlu0 %1006
    %vm1008 = vcmp.lt.s32.totalorder %v181, 4
    %v1009 = vsel %vm1008, %v1005, %v1007
    %v1010 = vsel %vm1008, %v1007, %v1005
    %v1011 = vsel %vm492, 1, 0
    %v1012 = vlaneseq
    %v1013 = vshrl.u32 %v1012, 7
    %v1014 = vsub.s32 0, %v1013
    %v1015 = vrot.slane %v1011, %v1014
    %v1016 = vlaneseq
    %v1017 = vshrl.u32 %v1016, 7
    %v1018 = vsub.s32 1, %v1017
    %v1019 = vrot.slane %v1011, %v1018
    %vm1020 = vcmp.eq.s32.totalorder %v1015, 1
    %vm1021 = vcmp.eq.s32.totalorder %v1019, 1
    %v1022 = vsel %vm1020, %v1010, 0.0
    %v1023 = vsel %vm1021, %v1009, 0.0
    %1024 = vset.pattern.permute.xlu0 10
    %1025 = vperm.xlu0 %1024, %v483
    %v1026 = vpop.permute.xlu0 %1025
    %v1028 = vmul.f32 %v1022, %v1026
    %v1029 = vmul.f32 %v1023, %v1026
    %v1030 = vadd.f32 %v875, %v1028
    %v1031 = vadd.f32 %v876, %v1029
    %1032 = vrot.lane.b32.xlu0 %v478, 2
    %v1033 = vpop.permute.xlu0 %1032
    %1034 = vrot.lane.b32.xlu0 %v479, 2
    %v1035 = vpop.permute.xlu0 %1034
    %vm1036 = vcmp.lt.s32.totalorder %v181, 2
    %v1037 = vsel %vm1036, %v1033, %v1035
    %v1038 = vsel %vm1036, %v1035, %v1033
    %v1039 = vsel %vm521, 1, 0
    %v1040 = vlaneseq
    %v1041 = vshrl.u32 %v1040, 7
    %v1042 = vsub.s32 0, %v1041
    %v1043 = vrot.slane %v1039, %v1042
    %v1044 = vlaneseq
    %v1045 = vshrl.u32 %v1044, 7
    %v1046 = vsub.s32 1, %v1045
    %v1047 = vrot.slane %v1039, %v1046
    %vm1048 = vcmp.eq.s32.totalorder %v1043, 1
    %vm1049 = vcmp.eq.s32.totalorder %v1047, 1
    %v1050 = vsel %vm1048, %v1038, 0.0
    %v1051 = vsel %vm1049, %v1037, 0.0
    %1052 = vset.pattern.permute.xlu0 10
    %1053 = vperm.xlu0 %1052, %v481
    %v1054 = vpop.permute.xlu0 %1053
    %v1056 = vmul.f32 %v1050, %v1054
    %v1057 = vmul.f32 %v1051, %v1054
    %v1058 = vadd.f32 %v1002, %v1056
    %v1059 = vadd.f32 %v1003, %v1057
    %1060 = vset.pattern.permute.xlu0 3
    %1061 = vperm.xlu0 %1060, %v482
    %v1062 = vpop.permute.xlu0 %1061
    %v1064 = vmul.f32 %v1050, %v1062
    %v1065 = vmul.f32 %v1051, %v1062
    %v1066 = vadd.f32 %v838, %v1064
    %v1067 = vadd.f32 %v839, %v1065
    %1068 = vset.pattern.permute.xlu0 11
    %1069 = vperm.xlu0 %1068, %v483
    %v1070 = vpop.permute.xlu0 %1069
    %v1072 = vmul.f32 %v1050, %v1070
    %v1073 = vmul.f32 %v1051, %v1070
    %v1074 = vadd.f32 %v846, %v1072
    %v1075 = vadd.f32 %v847, %v1073
    %1076 = vrot.lane.b32.xlu0 %v478, 1
    %v1077 = vpop.permute.xlu0 %1076
    %1078 = vrot.lane.b32.xlu0 %v479, 1
    %v1079 = vpop.permute.xlu0 %1078
    %v1080 = vsel %vm265, %v1077, %v1079
    %v1081 = vsel %vm265, %v1079, %v1077
    %v1082 = vsel %vm277, %v1081, 0.0
    %v1083 = vsel %vm278, %v1080, 0.0
    %1084 = vset.pattern.permute.xlu0 3
    %1085 = vperm.xlu0 %1084, %v480
    %v1086 = vpop.permute.xlu0 %1085
    %v1088 = vmul.f32 %v1082, %v1086
    %v1089 = vmul.f32 %v1083, %v1086
    %v1090 = vadd.f32 %v965, %v1088
    %v1091 = vadd.f32 %v966, %v1089
    %1092 = vset.pattern.permute.xlu0 11
    %1093 = vperm.xlu0 %1092, %v481
    %v1094 = vpop.permute.xlu0 %1093
    %v1096 = vmul.f32 %v1082, %v1094
    %v1097 = vmul.f32 %v1083, %v1094
    %v1098 = vadd.f32 %v973, %v1096
    %v1099 = vadd.f32 %v974, %v1097
    %1100 = vset.pattern.permute.xlu0 4
    %1101 = vperm.xlu0 %1100, %v480
    %v1102 = vpop.permute.xlu0 %1101
    %v1104 = vmul.f32 %v478, %v1102
    %v1105 = vmul.f32 %v479, %v1102
    %v1106 = vadd.f32 %v941, %v1104
    %v1107 = vadd.f32 %v942, %v1105
    %1108 = vset.pattern.permute.xlu0 12
    %1109 = vperm.xlu0 %1108, %v481
    %v1110 = vpop.permute.xlu0 %1109
    %v1112 = vmul.f32 %v478, %v1110
    %v1113 = vmul.f32 %v479, %v1110
    %v1114 = vadd.f32 %v1058, %v1112
    %v1115 = vadd.f32 %v1059, %v1113
    %1116 = vset.pattern.permute.xlu0 4
    %1117 = vperm.xlu0 %1116, %v482
    %v1118 = vpop.permute.xlu0 %1117
    %v1120 = vmul.f32 %v478, %v1118
    %v1121 = vmul.f32 %v479, %v1118
    %v1122 = vadd.f32 %v1066, %v1120
    %v1123 = vadd.f32 %v1067, %v1121
    %1124 = vset.pattern.permute.xlu0 12
    %1125 = vperm.xlu0 %1124, %v483
    %v1126 = vpop.permute.xlu0 %1125
    %v1128 = vmul.f32 %v478, %v1126
    %v1129 = vmul.f32 %v479, %v1126
    %v1130 = vadd.f32 %v1074, %v1128
    %v1131 = vadd.f32 %v1075, %v1129
    %1132 = vrot.lane.b32.xlu0 %v478, 127
    %v1133 = vpop.permute.xlu0 %1132
    %1134 = vrot.lane.b32.xlu0 %v479, 127
    %v1135 = vpop.permute.xlu0 %1134
    %v1136 = vsel %vm291, %v1133, %v1135
    %v1137 = vsel %vm291, %v1135, %v1133
    %v1138 = vsel %vm303, %v1136, 0.0
    %v1139 = vsel %vm304, %v1137, 0.0
    %1140 = vset.pattern.permute.xlu0 5
    %1141 = vperm.xlu0 %1140, %v480
    %v1142 = vpop.permute.xlu0 %1141
    %v1144 = vmul.f32 %v1138, %v1142
    %v1145 = vmul.f32 %v1139, %v1142
    %v1146 = vadd.f32 %v1090, %v1144
    %v1147 = vadd.f32 %v1091, %v1145
    %1148 = vset.pattern.permute.xlu0 13
    %1149 = vperm.xlu0 %1148, %v481
    %v1150 = vpop.permute.xlu0 %1149
    %v1152 = vmul.f32 %v1138, %v1150
    %v1153 = vmul.f32 %v1139, %v1150
    %v1154 = vadd.f32 %v1098, %v1152
    %v1155 = vadd.f32 %v1099, %v1153
    %1156 = vrot.lane.b32.xlu0 %v478, 126
    %v1157 = vpop.permute.xlu0 %1156
    %1158 = vrot.lane.b32.xlu0 %v479, 126
    %v1159 = vpop.permute.xlu0 %1158
    %vm1160 = vcmp.lt.s32.totalorder %v181, 126
    %v1161 = vsel %vm1160, %v1157, %v1159
    %v1162 = vsel %vm1160, %v1159, %v1157
    %v1163 = vsel %vm577, 1, 0
    %v1164 = vlaneseq
    %v1165 = vshrl.u32 %v1164, 7
    %v1166 = vsub.s32 0, %v1165
    %v1167 = vrot.slane %v1163, %v1166
    %v1168 = vlaneseq
    %v1169 = vshrl.u32 %v1168, 7
    %v1170 = vsub.s32 1, %v1169
    %v1171 = vrot.slane %v1163, %v1170
    %vm1172 = vcmp.eq.s32.totalorder %v1167, 1
    %vm1173 = vcmp.eq.s32.totalorder %v1171, 1
    %v1174 = vsel %vm1172, %v1161, 0.0
    %v1175 = vsel %vm1173, %v1162, 0.0
    %1176 = vset.pattern.permute.xlu0 14
    %1177 = vperm.xlu0 %1176, %v481
    %v1178 = vpop.permute.xlu0 %1177
    %v1180 = vmul.f32 %v1174, %v1178
    %v1181 = vmul.f32 %v1175, %v1178
    %v1182 = vadd.f32 %v1114, %v1180
    %v1183 = vadd.f32 %v1115, %v1181
    %1184 = vset.pattern.permute.xlu0 5
    %1185 = vperm.xlu0 %1184, %v482
    %v1186 = vpop.permute.xlu0 %1185
    %v1188 = vmul.f32 %v1174, %v1186
    %v1189 = vmul.f32 %v1175, %v1186
    %v1190 = vadd.f32 %v1122, %v1188
    %v1191 = vadd.f32 %v1123, %v1189
    %1192 = vset.pattern.permute.xlu0 13
    %1193 = vperm.xlu0 %1192, %v483
    %v1194 = vpop.permute.xlu0 %1193
    %v1196 = vmul.f32 %v1174, %v1194
    %v1197 = vmul.f32 %v1175, %v1194
    %v1198 = vadd.f32 %v1130, %v1196
    %v1199 = vadd.f32 %v1131, %v1197
    %1200 = vrot.lane.b32.xlu0 %v478, 124
    %v1201 = vpop.permute.xlu0 %1200
    %1202 = vrot.lane.b32.xlu0 %v479, 124
    %v1203 = vpop.permute.xlu0 %1202
    %vm1204 = vcmp.lt.s32.totalorder %v181, 124
    %v1205 = vsel %vm1204, %v1201, %v1203
    %v1206 = vsel %vm1204, %v1203, %v1201
    %v1207 = vsel %vm607, 1, 0
    %v1208 = vlaneseq
    %v1209 = vshrl.u32 %v1208, 7
    %v1210 = vsub.s32 0, %v1209
    %v1211 = vrot.slane %v1207, %v1210
    %v1212 = vlaneseq
    %v1213 = vshrl.u32 %v1212, 7
    %v1214 = vsub.s32 1, %v1213
    %v1215 = vrot.slane %v1207, %v1214
    %vm1216 = vcmp.eq.s32.totalorder %v1211, 1
    %vm1217 = vcmp.eq.s32.totalorder %v1215, 1
    %v1218 = vsel %vm1216, %v1205, 0.0
    %v1219 = vsel %vm1217, %v1206, 0.0
    %1220 = vset.pattern.permute.xlu0 14
    %1221 = vperm.xlu0 %1220, %v483
    %v1222 = vpop.permute.xlu0 %1221
    %v1224 = vmul.f32 %v1218, %v1222
    %v1225 = vmul.f32 %v1219, %v1222
    %v1226 = vadd.f32 %v1030, %v1224
    %v1227 = vadd.f32 %v1031, %v1225
    %1228 = vrot.lane.b32.xlu0 %v478, 114
    %v1229 = vpop.permute.xlu0 %1228
    %1230 = vrot.lane.b32.xlu0 %v479, 114
    %v1231 = vpop.permute.xlu0 %1230
    %vm1232 = vcmp.lt.s32.totalorder %v181, 114
    %v1233 = vsel %vm1232, %v1229, %v1231
    %v1234 = vsel %vm1232, %v1231, %v1229
    %vm1235 = vmand %vm320, %vm521
    %v1236 = vsel %vm1235, 1, 0
    %v1237 = vlaneseq
    %v1238 = vshrl.u32 %v1237, 7
    %v1239 = vsub.s32 0, %v1238
    %v1240 = vrot.slane %v1236, %v1239
    %v1241 = vlaneseq
    %v1242 = vshrl.u32 %v1241, 7
    %v1243 = vsub.s32 1, %v1242
    %v1244 = vrot.slane %v1236, %v1243
    %vm1245 = vcmp.eq.s32.totalorder %v1240, 1
    %vm1246 = vcmp.eq.s32.totalorder %v1244, 1
    %v1247 = vsel %vm1245, %v1233, 0.0
    %v1248 = vsel %vm1246, %v1234, 0.0
    %1249 = vset.pattern.permute.xlu0 15
    %1250 = vperm.xlu0 %1249, %v481
    %v1251 = vpop.permute.xlu0 %1250
    %v1253 = vmul.f32 %v1247, %v1251
    %v1254 = vmul.f32 %v1248, %v1251
    %v1255 = vadd.f32 %v1182, %v1253
    %v1256 = vadd.f32 %v1183, %v1254
    %1257 = vrot.lane.b32.xlu0 %v478, 113
    %v1258 = vpop.permute.xlu0 %1257
    %1259 = vrot.lane.b32.xlu0 %v479, 113
    %v1260 = vpop.permute.xlu0 %1259
    %v1261 = vsel %vm317, %v1258, %v1260
    %v1262 = vsel %vm317, %v1260, %v1258
    %v1263 = vsel %vm331, %v1261, 0.0
    %v1264 = vsel %vm332, %v1262, 0.0
    %1265 = vset.pattern.permute.xlu0 6
    %1266 = vperm.xlu0 %1265, %v480
    %v1267 = vpop.permute.xlu0 %1266
    %v1269 = vmul.f32 %v1263, %v1267
    %v1270 = vmul.f32 %v1264, %v1267
    %v1271 = vadd.f32 %v1146, %v1269
    %v1272 = vadd.f32 %v1147, %v1270
    %1273 = vset.pattern.permute.xlu0 16
    %1274 = vperm.xlu0 %1273, %v481
    %v1275 = vpop.permute.xlu0 %1274
    %v1277 = vmul.f32 %v1263, %v1275
    %v1278 = vmul.f32 %v1264, %v1275
    %v1279 = vadd.f32 %v1154, %v1277
    %v1280 = vadd.f32 %v1155, %v1278
    %1281 = vrot.lane.b32.xlu0 %v478, 112
    %v1282 = vpop.permute.xlu0 %1281
    %1283 = vrot.lane.b32.xlu0 %v479, 112
    %v1284 = vpop.permute.xlu0 %1283
    %v1285 = vsel %vm345, %v1282, %v1284
    %v1286 = vsel %vm345, %v1284, %v1282
    %v1287 = vsel %vm357, %v1285, 0.0
    %v1288 = vsel %vm358, %v1286, 0.0
    %1289 = vset.pattern.permute.xlu0 7
    %1290 = vperm.xlu0 %1289, %v480
    %v1291 = vpop.permute.xlu0 %1290
    %v1293 = vmul.f32 %v1287, %v1291
    %v1294 = vmul.f32 %v1288, %v1291
    %v1295 = vadd.f32 %v1106, %v1293
    %v1296 = vadd.f32 %v1107, %v1294
    %1297 = vset.pattern.permute.xlu0 17
    %1298 = vperm.xlu0 %1297, %v481
    %v1299 = vpop.permute.xlu0 %1298
    %v1301 = vmul.f32 %v1287, %v1299
    %v1302 = vmul.f32 %v1288, %v1299
    %v1303 = vadd.f32 %v1255, %v1301
    %v1304 = vadd.f32 %v1256, %v1302
    %1305 = vrot.lane.b32.xlu0 %v478, 111
    %v1306 = vpop.permute.xlu0 %1305
    %1307 = vrot.lane.b32.xlu0 %v479, 111
    %v1308 = vpop.permute.xlu0 %1307
    %v1309 = vsel %vm371, %v1306, %v1308
    %v1310 = vsel %vm371, %v1308, %v1306
    %v1311 = vsel %vm384, %v1309, 0.0
    %v1312 = vsel %vm385, %v1310, 0.0
    %1313 = vset.pattern.permute.xlu0 8
    %1314 = vperm.xlu0 %1313, %v480
    %v1315 = vpop.permute.xlu0 %1314
    %v1317 = vmul.f32 %v1311, %v1315
    %v1318 = vmul.f32 %v1312, %v1315
    %v1319 = vadd.f32 %v1271, %v1317
    %v1320 = vadd.f32 %v1272, %v1318
    %1321 = vset.pattern.permute.xlu0 18
    %1322 = vperm.xlu0 %1321, %v481
    %v1323 = vpop.permute.xlu0 %1322
    %v1325 = vmul.f32 %v1311, %v1323
    %v1326 = vmul.f32 %v1312, %v1323
    %v1327 = vadd.f32 %v1279, %v1325
    %v1328 = vadd.f32 %v1280, %v1326
    %1329 = vrot.lane.b32.xlu0 %v478, 110
    %v1330 = vpop.permute.xlu0 %1329
    %1331 = vrot.lane.b32.xlu0 %v479, 110
    %v1332 = vpop.permute.xlu0 %1331
    %vm1333 = vcmp.lt.s32.totalorder %v181, 110
    %v1334 = vsel %vm1333, %v1330, %v1332
    %v1335 = vsel %vm1333, %v1332, %v1330
    %vm1336 = vmand %vm320, %vm577
    %v1337 = vsel %vm1336, 1, 0
    %v1338 = vlaneseq
    %v1339 = vshrl.u32 %v1338, 7
    %v1340 = vsub.s32 0, %v1339
    %v1341 = vrot.slane %v1337, %v1340
    %v1342 = vlaneseq
    %v1343 = vshrl.u32 %v1342, 7
    %v1344 = vsub.s32 1, %v1343
    %v1345 = vrot.slane %v1337, %v1344
    %vm1346 = vcmp.eq.s32.totalorder %v1341, 1
    %vm1347 = vcmp.eq.s32.totalorder %v1345, 1
    %v1348 = vsel %vm1346, %v1334, 0.0
    %v1349 = vsel %vm1347, %v1335, 0.0
    %1350 = vset.pattern.permute.xlu0 19
    %1351 = vperm.xlu0 %1350, %v481
    %v1352 = vpop.permute.xlu0 %1351
    %v1354 = vmul.f32 %v1348, %v1352
    %v1355 = vmul.f32 %v1349, %v1352
    %v1356 = vadd.f32 %v1303, %v1354
    %v1357 = vadd.f32 %v1304, %v1355
    %1358 = vrot.lane.b32.xlu0 %v478, 100
    %v1359 = vpop.permute.xlu0 %1358
    %1360 = vrot.lane.b32.xlu0 %v479, 100
    %v1361 = vpop.permute.xlu0 %1360
    %vm1362 = vcmp.lt.s32.totalorder %v181, 100
    %v1363 = vsel %vm1362, %v1359, %v1361
    %v1364 = vsel %vm1362, %v1361, %v1359
    %vm1365 = vcmp.lt.s32.totalorder %v174, 14
    %vm1366 = vmand %vm1365, %vm492
    %v1367 = vsel %vm1366, 1, 0
    %v1368 = vlaneseq
    %v1369 = vshrl.u32 %v1368, 7
    %v1370 = vsub.s32 0, %v1369
    %v1371 = vrot.slane %v1367, %v1370
    %v1372 = vlaneseq
    %v1373 = vshrl.u32 %v1372, 7
    %v1374 = vsub.s32 1, %v1373
    %v1375 = vrot.slane %v1367, %v1374
    %vm1376 = vcmp.eq.s32.totalorder %v1371, 1
    %vm1377 = vcmp.eq.s32.totalorder %v1375, 1
    %v1378 = vsel %vm1376, %v1363, 0.0
    %v1379 = vsel %vm1377, %v1364, 0.0
    %1380 = vset.pattern.permute.xlu0 15
    %1381 = vperm.xlu0 %1380, %v483
    %v1382 = vpop.permute.xlu0 %1381
    %v1384 = vmul.f32 %v1378, %v1382
    %v1385 = vmul.f32 %v1379, %v1382
    %v1386 = vadd.f32 %v1226, %v1384
    %v1387 = vadd.f32 %v1227, %v1385
    %1388 = vrot.lane.b32.xlu0 %v478, 98
    %v1389 = vpop.permute.xlu0 %1388
    %1390 = vrot.lane.b32.xlu0 %v479, 98
    %v1391 = vpop.permute.xlu0 %1390
    %vm1392 = vcmp.lt.s32.totalorder %v181, 98
    %v1393 = vsel %vm1392, %v1389, %v1391
    %v1394 = vsel %vm1392, %v1391, %v1389
    %vm1395 = vmand %vm1365, %vm521
    %v1396 = vsel %vm1395, 1, 0
    %v1397 = vlaneseq
    %v1398 = vshrl.u32 %v1397, 7
    %v1399 = vsub.s32 0, %v1398
    %v1400 = vrot.slane %v1396, %v1399
    %v1401 = vlaneseq
    %v1402 = vshrl.u32 %v1401, 7
    %v1403 = vsub.s32 1, %v1402
    %v1404 = vrot.slane %v1396, %v1403
    %vm1405 = vcmp.eq.s32.totalorder %v1400, 1
    %vm1406 = vcmp.eq.s32.totalorder %v1404, 1
    %v1407 = vsel %vm1405, %v1393, 0.0
    %v1408 = vsel %vm1406, %v1394, 0.0
    %1409 = vset.pattern.permute.xlu0 20
    %1410 = vperm.xlu0 %1409, %v481
    %v1411 = vpop.permute.xlu0 %1410
    %v1413 = vmul.f32 %v1407, %v1411
    %v1414 = vmul.f32 %v1408, %v1411
    %v1415 = vadd.f32 %v1356, %v1413
    %v1416 = vadd.f32 %v1357, %v1414
    %1417 = vset.pattern.permute.xlu0 6
    %1418 = vperm.xlu0 %1417, %v482
    %v1419 = vpop.permute.xlu0 %1418
    %v1421 = vmul.f32 %v1407, %v1419
    %v1422 = vmul.f32 %v1408, %v1419
    %v1423 = vadd.f32 %v1190, %v1421
    %v1424 = vadd.f32 %v1191, %v1422
    %1425 = vset.pattern.permute.xlu0 16
    %1426 = vperm.xlu0 %1425, %v483
    %v1427 = vpop.permute.xlu0 %1426
    %v1429 = vmul.f32 %v1407, %v1427
    %v1430 = vmul.f32 %v1408, %v1427
    %v1431 = vadd.f32 %v1198, %v1429
    %v1432 = vadd.f32 %v1199, %v1430
    %1433 = vrot.lane.b32.xlu0 %v478, 97
    %v1434 = vpop.permute.xlu0 %1433
    %1435 = vrot.lane.b32.xlu0 %v479, 97
    %v1436 = vpop.permute.xlu0 %1435
    %vm1437 = vcmp.lt.s32.totalorder %v181, 97
    %v1438 = vsel %vm1437, %v1434, %v1436
    %v1439 = vsel %vm1437, %v1436, %v1434
    %vm1440 = vmand %vm1365, %vm186
    %v1441 = vsel %vm1440, 1, 0
    %v1442 = vlaneseq
    %v1443 = vshrl.u32 %v1442, 7
    %v1444 = vsub.s32 0, %v1443
    %v1445 = vrot.slane %v1441, %v1444
    %v1446 = vlaneseq
    %v1447 = vshrl.u32 %v1446, 7
    %v1448 = vsub.s32 1, %v1447
    %v1449 = vrot.slane %v1441, %v1448
    %vm1450 = vcmp.eq.s32.totalorder %v1445, 1
    %vm1451 = vcmp.eq.s32.totalorder %v1449, 1
    %v1452 = vsel %vm1450, %v1438, 0.0
    %v1453 = vsel %vm1451, %v1439, 0.0
    %1454 = vset.pattern.permute.xlu0 21
    %1455 = vperm.xlu0 %1454, %v481
    %v1456 = vpop.permute.xlu0 %1455
    %v1458 = vmul.f32 %v1452, %v1456
    %v1459 = vmul.f32 %v1453, %v1456
    %v1460 = vadd.f32 %v1327, %v1458
    %v1461 = vadd.f32 %v1328, %v1459
    %1462 = vrot.lane.b32.xlu0 %v478, 96
    %v1463 = vpop.permute.xlu0 %1462
    %1464 = vrot.lane.b32.xlu0 %v479, 96
    %v1465 = vpop.permute.xlu0 %1464
    %vm1466 = vcmp.lt.s32.totalorder %v181, 96
    %v1467 = vsel %vm1466, %v1463, %v1465
    %v1468 = vsel %vm1466, %v1465, %v1463
    %v1469 = vsel %vm1365, 1, 0
    %v1470 = vlaneseq
    %v1471 = vshrl.u32 %v1470, 7
    %v1472 = vsub.s32 0, %v1471
    %v1473 = vrot.slane %v1469, %v1472
    %v1474 = vlaneseq
    %v1475 = vshrl.u32 %v1474, 7
    %v1476 = vsub.s32 1, %v1475
    %v1477 = vrot.slane %v1469, %v1476
    %vm1478 = vcmp.eq.s32.totalorder %v1473, 1
    %vm1479 = vcmp.eq.s32.totalorder %v1477, 1
    %v1480 = vsel %vm1478, %v1467, 0.0
    %v1481 = vsel %vm1479, %v1468, 0.0
    %1482 = vset.pattern.permute.xlu0 22
    %1483 = vperm.xlu0 %1482, %v481
    %v1484 = vpop.permute.xlu0 %1483
    %v1486 = vmul.f32 %v1480, %v1484
    %v1487 = vmul.f32 %v1481, %v1484
    %v1488 = vadd.f32 %v1415, %v1486
    %v1489 = vadd.f32 %v1416, %v1487
    %1490 = vset.pattern.permute.xlu0 7
    %1491 = vperm.xlu0 %1490, %v482
    %v1492 = vpop.permute.xlu0 %1491
    %v1494 = vmul.f32 %v1480, %v1492
    %v1495 = vmul.f32 %v1481, %v1492
    %v1496 = vadd.f32 %v1423, %v1494
    %v1497 = vadd.f32 %v1424, %v1495
    %1498 = vset.pattern.permute.xlu0 17
    %1499 = vperm.xlu0 %1498, %v483
    %v1500 = vpop.permute.xlu0 %1499
    %v1502 = vmul.f32 %v1480, %v1500
    %v1503 = vmul.f32 %v1481, %v1500
    %v1504 = vadd.f32 %v1431, %v1502
    %v1505 = vadd.f32 %v1432, %v1503
    %1506 = vrot.lane.b32.xlu0 %v478, 95
    %v1507 = vpop.permute.xlu0 %1506
    %1508 = vrot.lane.b32.xlu0 %v479, 95
    %v1509 = vpop.permute.xlu0 %1508
    %vm1510 = vcmp.lt.s32.totalorder %v181, 95
    %v1511 = vsel %vm1510, %v1507, %v1509
    %v1512 = vsel %vm1510, %v1509, %v1507
    %vm1513 = vmand %vm1365, %vm240
    %v1514 = vsel %vm1513, 1, 0
    %v1515 = vlaneseq
    %v1516 = vshrl.u32 %v1515, 7
    %v1517 = vsub.s32 0, %v1516
    %v1518 = vrot.slane %v1514, %v1517
    %v1519 = vlaneseq
    %v1520 = vshrl.u32 %v1519, 7
    %v1521 = vsub.s32 1, %v1520
    %v1522 = vrot.slane %v1514, %v1521
    %vm1523 = vcmp.eq.s32.totalorder %v1518, 1
    %vm1524 = vcmp.eq.s32.totalorder %v1522, 1
    %v1525 = vsel %vm1523, %v1511, 0.0
    %v1526 = vsel %vm1524, %v1512, 0.0
    %1527 = vset.pattern.permute.xlu0 23
    %1528 = vperm.xlu0 %1527, %v481
    %v1529 = vpop.permute.xlu0 %1528
    %v1531 = vmul.f32 %v1525, %v1529
    %v1532 = vmul.f32 %v1526, %v1529
    %v1533 = vadd.f32 %v1460, %v1531
    %v1534 = vadd.f32 %v1461, %v1532
    %1535 = vrot.lane.b32.xlu0 %v478, 94
    %v1536 = vpop.permute.xlu0 %1535
    %1537 = vrot.lane.b32.xlu0 %v479, 94
    %v1538 = vpop.permute.xlu0 %1537
    %vm1539 = vcmp.lt.s32.totalorder %v181, 94
    %v1540 = vsel %vm1539, %v1536, %v1538
    %v1541 = vsel %vm1539, %v1538, %v1536
    %vm1542 = vmand %vm1365, %vm577
    %v1543 = vsel %vm1542, 1, 0
    %v1544 = vlaneseq
    %v1545 = vshrl.u32 %v1544, 7
    %v1546 = vsub.s32 0, %v1545
    %v1547 = vrot.slane %v1543, %v1546
    %v1548 = vlaneseq
    %v1549 = vshrl.u32 %v1548, 7
    %v1550 = vsub.s32 1, %v1549
    %v1551 = vrot.slane %v1543, %v1550
    %vm1552 = vcmp.eq.s32.totalorder %v1547, 1
    %vm1553 = vcmp.eq.s32.totalorder %v1551, 1
    %v1554 = vsel %vm1552, %v1540, 0.0
    %v1555 = vsel %vm1553, %v1541, 0.0
    %1556 = vset.pattern.permute.xlu0 24
    %1557 = vperm.xlu0 %1556, %v481
    %v1558 = vpop.permute.xlu0 %1557
    %v1560 = vmul.f32 %v1554, %v1558
    %v1561 = vmul.f32 %v1555, %v1558
    %v1562 = vadd.f32 %v1488, %v1560
    %v1563 = vadd.f32 %v1489, %v1561
    %1564 = vset.pattern.permute.xlu0 8
    %1565 = vperm.xlu0 %1564, %v482
    %v1566 = vpop.permute.xlu0 %1565
    %v1568 = vmul.f32 %v1554, %v1566
    %v1569 = vmul.f32 %v1555, %v1566
    %v1570 = vadd.f32 %v1496, %v1568
    %v1571 = vadd.f32 %v1497, %v1569
    %1572 = vset.pattern.permute.xlu0 18
    %1573 = vperm.xlu0 %1572, %v483
    %v1574 = vpop.permute.xlu0 %1573
    %v1576 = vmul.f32 %v1554, %v1574
    %v1577 = vmul.f32 %v1555, %v1574
    %v1578 = vadd.f32 %v1504, %v1576
    %v1579 = vadd.f32 %v1505, %v1577
    %1580 = vrot.lane.b32.xlu0 %v478, 92
    %v1581 = vpop.permute.xlu0 %1580
    %1582 = vrot.lane.b32.xlu0 %v479, 92
    %v1583 = vpop.permute.xlu0 %1582
    %vm1584 = vcmp.lt.s32.totalorder %v181, 92
    %v1585 = vsel %vm1584, %v1581, %v1583
    %v1586 = vsel %vm1584, %v1583, %v1581
    %vm1587 = vmand %vm1365, %vm607
    %v1588 = vsel %vm1587, 1, 0
    %v1589 = vlaneseq
    %v1590 = vshrl.u32 %v1589, 7
    %v1591 = vsub.s32 0, %v1590
    %v1592 = vrot.slane %v1588, %v1591
    %v1593 = vlaneseq
    %v1594 = vshrl.u32 %v1593, 7
    %v1595 = vsub.s32 1, %v1594
    %v1596 = vrot.slane %v1588, %v1595
    %vm1597 = vcmp.eq.s32.totalorder %v1592, 1
    %vm1598 = vcmp.eq.s32.totalorder %v1596, 1
    %v1599 = vsel %vm1597, %v1585, 0.0
    %v1600 = vsel %vm1598, %v1586, 0.0
    %1601 = vset.pattern.permute.xlu0 19
    %1602 = vperm.xlu0 %1601, %v483
    %v1603 = vpop.permute.xlu0 %1602
    %v1605 = vmul.f32 %v1599, %v1603
    %v1606 = vmul.f32 %v1600, %v1603
    %v1607 = vadd.f32 %v1386, %v1605
    %v1608 = vadd.f32 %v1387, %v1606
    %vm1609 = vcmp.lt.s32.totalorder %v174, 12
    %vm1610 = vmand %vm1609, %vm492
    %v1611 = vsel %vm1610, 1, 0
    %v1612 = vlaneseq
    %v1613 = vshrl.u32 %v1612, 7
    %v1614 = vsub.s32 0, %v1613
    %v1615 = vrot.slane %v1611, %v1614
    %v1616 = vlaneseq
    %v1617 = vshrl.u32 %v1616, 7
    %v1618 = vsub.s32 1, %v1617
    %v1619 = vrot.slane %v1611, %v1618
    %vm1620 = vcmp.eq.s32.totalorder %v1615, 1
    %vm1621 = vcmp.eq.s32.totalorder %v1619, 1
    %v1622 = vsel %vm1620, %v489, 0.0
    %v1623 = vsel %vm1621, %v490, 0.0
    %1624 = vset.pattern.permute.xlu0 20
    %1625 = vperm.xlu0 %1624, %v483
    %v1626 = vpop.permute.xlu0 %1625
    %v1628 = vmul.f32 %v1622, %v1626
    %v1629 = vmul.f32 %v1623, %v1626
    %v1630 = vadd.f32 %v1578, %v1628
    %v1631 = vadd.f32 %v1579, %v1629
    %vm1632 = vmand %vm1609, %vm521
    %v1633 = vsel %vm1632, 1, 0
    %v1634 = vlaneseq
    %v1635 = vshrl.u32 %v1634, 7
    %v1636 = vsub.s32 0, %v1635
    %v1637 = vrot.slane %v1633, %v1636
    %v1638 = vlaneseq
    %v1639 = vshrl.u32 %v1638, 7
    %v1640 = vsub.s32 1, %v1639
    %v1641 = vrot.slane %v1633, %v1640
    %vm1642 = vcmp.eq.s32.totalorder %v1637, 1
    %vm1643 = vcmp.eq.s32.totalorder %v1641, 1
    %v1644 = vsel %vm1642, %v519, 0.0
    %v1645 = vsel %vm1643, %v520, 0.0
    %1646 = vset.pattern.permute.xlu0 21
    %1647 = vperm.xlu0 %1646, %v483
    %v1648 = vpop.permute.xlu0 %1647
    %v1650 = vmul.f32 %v1644, %v1648
    %v1651 = vmul.f32 %v1645, %v1648
    %v1652 = vadd.f32 %v1607, %v1650
    %v1653 = vadd.f32 %v1608, %v1651
    %v1654 = vsel %vm1609, 1, 0
    %v1655 = vlaneseq
    %v1656 = vshrl.u32 %v1655, 7
    %v1657 = vsub.s32 0, %v1656
    %v1658 = vrot.slane %v1654, %v1657
    %v1659 = vlaneseq
    %v1660 = vshrl.u32 %v1659, 7
    %v1661 = vsub.s32 1, %v1660
    %v1662 = vrot.slane %v1654, %v1661
    %vm1663 = vcmp.eq.s32.totalorder %v1658, 1
    %vm1664 = vcmp.eq.s32.totalorder %v1662, 1
    %v1665 = vsel %vm1663, %v547, 0.0
    %v1666 = vsel %vm1664, %v548, 0.0
    %1667 = vset.pattern.permute.xlu0 22
    %1668 = vperm.xlu0 %1667, %v483
    %v1669 = vpop.permute.xlu0 %1668
    %v1671 = vmul.f32 %v1665, %v1669
    %v1672 = vmul.f32 %v1666, %v1669
    %v1673 = vadd.f32 %v1630, %v1671
    %v1674 = vadd.f32 %v1631, %v1672
    %vm1675 = vmand %vm1609, %vm577
    %v1676 = vsel %vm1675, 1, 0
    %v1677 = vlaneseq
    %v1678 = vshrl.u32 %v1677, 7
    %v1679 = vsub.s32 0, %v1678
    %v1680 = vrot.slane %v1676, %v1679
    %v1681 = vlaneseq
    %v1682 = vshrl.u32 %v1681, 7
    %v1683 = vsub.s32 1, %v1682
    %v1684 = vrot.slane %v1676, %v1683
    %vm1685 = vcmp.eq.s32.totalorder %v1680, 1
    %vm1686 = vcmp.eq.s32.totalorder %v1684, 1
    %v1687 = vsel %vm1685, %v575, 0.0
    %v1688 = vsel %vm1686, %v576, 0.0
    %1689 = vset.pattern.permute.xlu0 23
    %1690 = vperm.xlu0 %1689, %v483
    %v1691 = vpop.permute.xlu0 %1690
    %v1693 = vmul.f32 %v1687, %v1691
    %v1694 = vmul.f32 %v1688, %v1691
    %v1695 = vadd.f32 %v1652, %v1693
    %v1696 = vadd.f32 %v1653, %v1694
    %vm1697 = vmand %vm1609, %vm607
    %v1698 = vsel %vm1697, 1, 0
    %v1699 = vlaneseq
    %v1700 = vshrl.u32 %v1699, 7
    %v1701 = vsub.s32 0, %v1700
    %v1702 = vrot.slane %v1698, %v1701
    %v1703 = vlaneseq
    %v1704 = vshrl.u32 %v1703, 7
    %v1705 = vsub.s32 1, %v1704
    %v1706 = vrot.slane %v1698, %v1705
    %vm1707 = vcmp.eq.s32.totalorder %v1702, 1
    %vm1708 = vcmp.eq.s32.totalorder %v1706, 1
    %v1709 = vsel %vm1707, %v605, 0.0
    %v1710 = vsel %vm1708, %v606, 0.0
    %1711 = vset.pattern.permute.xlu0 24
    %1712 = vperm.xlu0 %1711, %v483
    %v1713 = vpop.permute.xlu0 %1712
    %v1715 = vmul.f32 %v1709, %v1713
    %v1716 = vmul.f32 %v1710, %v1713
    %v1717 = vadd.f32 %v1673, %v1715
    %v1718 = vadd.f32 %v1674, %v1716
    %v1719 = vadd.f32 %v1295, %v1319
    %v1720 = vadd.f32 %v1296, %v1320
    %v1721 = vadd.f32 %v1562, %v1533
    %v1722 = vadd.f32 %v1563, %v1534
    %v1723 = vadd.f32 %v1717, %v1695
    %v1724 = vadd.f32 %v1718, %v1696
    %v1725 = vld [vmem:[%s6] sm:$0xff]
    %v1726 = vlaneseq
    %v1727 = vshrl.u32 %v1726, 7
    %v1728 = vsub.s32 0, %v1727
    %v1729 = vrot.slane %v1719, %v1728
    %v1730 = vlaneseq
    %v1731 = vshrl.u32 %v1730, 7
    %v1732 = vsub.s32 0, %v1731
    %v1733 = vrot.slane %v1720, %v1732
    %1735 = vset.pattern.permute.xlu0 0
    %1736 = vperm.xlu0 %1735, %v1725
    %v1737 = vpop.permute.xlu0 %1736
    %v1739 = vmul.f32 %v1729, %v1737
    %v1740 = vmul.f32 %v1733, %v1737
    %v1741 = vlaneseq
    %v1742 = vshrl.u32 %v1741, 7
    %v1743 = vsub.s32 1, %v1742
    %v1744 = vrot.slane %v1719, %v1743
    %v1745 = vlaneseq
    %v1746 = vshrl.u32 %v1745, 7
    %v1747 = vsub.s32 1, %v1746
    %v1748 = vrot.slane %v1720, %v1747
    %1749 = vset.pattern.permute.xlu0 1
    %1750 = vperm.xlu0 %1749, %v1725
    %v1751 = vpop.permute.xlu0 %1750
    %v1753 = vmul.f32 %v1744, %v1751
    %v1754 = vmul.f32 %v1748, %v1751
    %v1755 = vlaneseq
    %v1756 = vshrl.u32 %v1755, 7
    %v1757 = vsub.s32 2, %v1756
    %v1758 = vrot.slane %v1719, %v1757
    %v1759 = vlaneseq
    %v1760 = vshrl.u32 %v1759, 7
    %v1761 = vsub.s32 2, %v1760
    %v1762 = vrot.slane %v1720, %v1761
    %1763 = vset.pattern.permute.xlu0 2
    %1764 = vperm.xlu0 %1763, %v1725
    %v1765 = vpop.permute.xlu0 %1764
    %v1767 = vmul.f32 %v1758, %v1765
    %v1768 = vmul.f32 %v1762, %v1765
    %v1769 = vadd.f32 %v1739, %v1767
    %v1770 = vadd.f32 %v1740, %v1768
    %v1771 = vlaneseq
    %v1772 = vshrl.u32 %v1771, 7
    %v1773 = vsub.s32 3, %v1772
    %v1774 = vrot.slane %v1719, %v1773
    %v1775 = vlaneseq
    %v1776 = vshrl.u32 %v1775, 7
    %v1777 = vsub.s32 3, %v1776
    %v1778 = vrot.slane %v1720, %v1777
    %1779 = vset.pattern.permute.xlu0 3
    %1780 = vperm.xlu0 %1779, %v1725
    %v1781 = vpop.permute.xlu0 %1780
    %v1783 = vmul.f32 %v1774, %v1781
    %v1784 = vmul.f32 %v1778, %v1781
    %v1785 = vadd.f32 %v1753, %v1783
    %v1786 = vadd.f32 %v1754, %v1784
    %v1787 = vlaneseq
    %v1788 = vshrl.u32 %v1787, 7
    %v1789 = vsub.s32 4, %v1788
    %v1790 = vrot.slane %v1719, %v1789
    %v1791 = vlaneseq
    %v1792 = vshrl.u32 %v1791, 7
    %v1793 = vsub.s32 4, %v1792
    %v1794 = vrot.slane %v1720, %v1793
    %1795 = vset.pattern.permute.xlu0 4
    %1796 = vperm.xlu0 %1795, %v1725
    %v1797 = vpop.permute.xlu0 %1796
    %v1799 = vmul.f32 %v1790, %v1797
    %v1800 = vmul.f32 %v1794, %v1797
    %v1801 = vadd.f32 %v1769, %v1799
    %v1802 = vadd.f32 %v1770, %v1800
    %v1803 = vlaneseq
    %v1804 = vshrl.u32 %v1803, 7
    %v1805 = vsub.s32 5, %v1804
    %v1806 = vrot.slane %v1719, %v1805
    %v1807 = vlaneseq
    %v1808 = vshrl.u32 %v1807, 7
    %v1809 = vsub.s32 5, %v1808
    %v1810 = vrot.slane %v1720, %v1809
    %1811 = vset.pattern.permute.xlu0 5
    %1812 = vperm.xlu0 %1811, %v1725
    %v1813 = vpop.permute.xlu0 %1812
    %v1815 = vmul.f32 %v1806, %v1813
    %v1816 = vmul.f32 %v1810, %v1813
    %v1817 = vadd.f32 %v1785, %v1815
    %v1818 = vadd.f32 %v1786, %v1816
    %v1819 = vlaneseq
    %v1820 = vshrl.u32 %v1819, 7
    %v1821 = vsub.s32 6, %v1820
    %v1822 = vrot.slane %v1719, %v1821
    %v1823 = vlaneseq
    %v1824 = vshrl.u32 %v1823, 7
    %v1825 = vsub.s32 6, %v1824
    %v1826 = vrot.slane %v1720, %v1825
    %1827 = vset.pattern.permute.xlu0 6
    %1828 = vperm.xlu0 %1827, %v1725
    %v1829 = vpop.permute.xlu0 %1828
    %v1831 = vmul.f32 %v1822, %v1829
    %v1832 = vmul.f32 %v1826, %v1829
    %v1833 = vadd.f32 %v1801, %v1831
    %v1834 = vadd.f32 %v1802, %v1832
    %v1835 = vlaneseq
    %v1836 = vshrl.u32 %v1835, 7
    %v1837 = vsub.s32 7, %v1836
    %v1838 = vrot.slane %v1719, %v1837
    %v1839 = vlaneseq
    %v1840 = vshrl.u32 %v1839, 7
    %v1841 = vsub.s32 7, %v1840
    %v1842 = vrot.slane %v1720, %v1841
    %1843 = vset.pattern.permute.xlu0 7
    %1844 = vperm.xlu0 %1843, %v1725
    %v1845 = vpop.permute.xlu0 %1844
    %v1847 = vmul.f32 %v1838, %v1845
    %v1848 = vmul.f32 %v1842, %v1845
    %v1849 = vadd.f32 %v1817, %v1847
    %v1850 = vadd.f32 %v1818, %v1848
    %v1851 = vadd.f32 %v1833, %v1849
    %v1852 = vadd.f32 %v1834, %v1850
    %v1853 = vmul.f32 %v1851, %v1851
    %v1854 = vmul.f32 %v1852, %v1852
    %v1855 = vrot.slane %v1851, 4
    %v1856 = vrot.slane %v1852, 4
    %v1857 = vadd.f32 %v1851, %v1855
    %v1858 = vadd.f32 %v1852, %v1856
    %v1859 = vrot.slane %v1853, 4
    %v1860 = vrot.slane %v1854, 4
    %v1861 = vadd.f32 %v1853, %v1859
    %v1862 = vadd.f32 %v1854, %v1860
    %v1863 = vadd.f32 %v1857, %v1858
    %1864 = vadd.xlane.f32.xlu0 %v1863
    %v1865 = vpop.xlane.xlu0 %1864
    %v1866 = vmul.f32 %v1865, 0.001953125
    %v1867 = vadd.f32 %v1861, %v1862
    %1868 = vadd.xlane.f32.xlu0 %v1867
    %v1869 = vpop.xlane.xlu0 %1868
    %v1870 = vmul.f32 %v1869, 0.001953125
    %v1871 = vmul.f32 %v1866, %v1866
    %v1872 = vsub.f32 %v1870, %v1871
    %v1873 = vmax.f32 %v1872, 0.0
    %v1874 = vsub.f32 %v1851, %v1866
    %v1875 = vsub.f32 %v1852, %v1866
    %v1876 = vadd.f32 %v1873, 1e-05
    %v1877 = vrsqrt.pop %v1876
    %v1878 = vmul.f32 %v1874, %v1877
    %v1879 = vmul.f32 %v1875, %v1877
    %v1880 = vmax.f32 %v1878, 0.0
    %v1881 = vmax.f32 %v1879, 0.0
    %s1882 = sld [smem:[#allocation2 + $0x4]]
    %v1883 = vld [vmem:[%s7] sm:$0xff]
    %1884 = vrot.lane.b32.xlu0 %v1880, 17
    %v1885 = vpop.permute.xlu0 %1884
    %1886 = vrot.lane.b32.xlu0 %v1881, 17
    %v1887 = vpop.permute.xlu0 %1886
    %v1888 = vsel %vm182, %v1885, %v1887
    %v1889 = vsel %vm182, %v1887, %v1885
    %v1890 = vsel %vm197, %v1889, 0.0
    %v1891 = vsel %vm198, %v1888, 0.0
    %1893 = vset.pattern.permute.xlu0 0
    %1894 = vperm.xlu0 %1893, %v1883
    %v1895 = vpop.permute.xlu0 %1894
    %v1897 = vmul.f32 %v1890, %v1895
    %v1898 = vmul.f32 %v1891, %v1895
    %1899 = vrot.lane.b32.xlu0 %v1880, 16
    %v1900 = vpop.permute.xlu0 %1899
    %1901 = vrot.lane.b32.xlu0 %v1881, 16
    %v1902 = vpop.permute.xlu0 %1901
    %v1903 = vsel %vm211, %v1900, %v1902
    %v1904 = vsel %vm211, %v1902, %v1900
    %v1905 = vsel %vm223, %v1904, 0.0
    %v1906 = vsel %vm224, %v1903, 0.0
    %1907 = vset.pattern.permute.xlu0 1
    %1908 = vperm.xlu0 %1907, %v1883
    %v1909 = vpop.permute.xlu0 %1908
    %v1911 = vmul.f32 %v1905, %v1909
    %v1912 = vmul.f32 %v1906, %v1909
    %1913 = vrot.lane.b32.xlu0 %v1880, 15
    %v1914 = vpop.permute.xlu0 %1913
    %1915 = vrot.lane.b32.xlu0 %v1881, 15
    %v1916 = vpop.permute.xlu0 %1915
    %v1917 = vsel %vm237, %v1914, %v1916
    %v1918 = vsel %vm237, %v1916, %v1914
    %v1919 = vsel %vm251, %v1918, 0.0
    %v1920 = vsel %vm252, %v1917, 0.0
    %1921 = vset.pattern.permute.xlu0 2
    %1922 = vperm.xlu0 %1921, %v1883
    %v1923 = vpop.permute.xlu0 %1922
    %v1925 = vmul.f32 %v1919, %v1923
    %v1926 = vmul.f32 %v1920, %v1923
    %v1927 = vadd.f32 %v1897, %v1925
    %v1928 = vadd.f32 %v1898, %v1926
    %1929 = vrot.lane.b32.xlu0 %v1880, 1
    %v1930 = vpop.permute.xlu0 %1929
    %1931 = vrot.lane.b32.xlu0 %v1881, 1
    %v1932 = vpop.permute.xlu0 %1931
    %v1933 = vsel %vm265, %v1930, %v1932
    %v1934 = vsel %vm265, %v1932, %v1930
    %v1935 = vsel %vm277, %v1934, 0.0
    %v1936 = vsel %vm278, %v1933, 0.0
    %1937 = vset.pattern.permute.xlu0 3
    %1938 = vperm.xlu0 %1937, %v1883
    %v1939 = vpop.permute.xlu0 %1938
    %v1941 = vmul.f32 %v1935, %v1939
    %v1942 = vmul.f32 %v1936, %v1939
    %v1943 = vadd.f32 %v1911, %v1941
    %v1944 = vadd.f32 %v1912, %v1942
    %1945 = vset.pattern.permute.xlu0 4
    %1946 = vperm.xlu0 %1945, %v1883
    %v1947 = vpop.permute.xlu0 %1946
    %v1949 = vmul.f32 %v1880, %v1947
    %v1950 = vmul.f32 %v1881, %v1947
    %v1951 = vadd.f32 %v1927, %v1949
    %v1952 = vadd.f32 %v1928, %v1950
    %1953 = vrot.lane.b32.xlu0 %v1880, 127
    %v1954 = vpop.permute.xlu0 %1953
    %1955 = vrot.lane.b32.xlu0 %v1881, 127
    %v1956 = vpop.permute.xlu0 %1955
    %v1957 = vsel %vm291, %v1954, %v1956
    %v1958 = vsel %vm291, %v1956, %v1954
    %v1959 = vsel %vm303, %v1957, 0.0
    %v1960 = vsel %vm304, %v1958, 0.0
    %1961 = vset.pattern.permute.xlu0 5
    %1962 = vperm.xlu0 %1961, %v1883
    %v1963 = vpop.permute.xlu0 %1962
    %v1965 = vmul.f32 %v1959, %v1963
    %v1966 = vmul.f32 %v1960, %v1963
    %v1967 = vadd.f32 %v1943, %v1965
    %v1968 = vadd.f32 %v1944, %v1966
    %1969 = vrot.lane.b32.xlu0 %v1880, 113
    %v1970 = vpop.permute.xlu0 %1969
    %1971 = vrot.lane.b32.xlu0 %v1881, 113
    %v1972 = vpop.permute.xlu0 %1971
    %v1973 = vsel %vm317, %v1970, %v1972
    %v1974 = vsel %vm317, %v1972, %v1970
    %v1975 = vsel %vm331, %v1973, 0.0
    %v1976 = vsel %vm332, %v1974, 0.0
    %1977 = vset.pattern.permute.xlu0 6
    %1978 = vperm.xlu0 %1977, %v1883
    %v1979 = vpop.permute.xlu0 %1978
    %v1981 = vmul.f32 %v1975, %v1979
    %v1982 = vmul.f32 %v1976, %v1979
    %v1983 = vadd.f32 %v1951, %v1981
    %v1984 = vadd.f32 %v1952, %v1982
    %1985 = vrot.lane.b32.xlu0 %v1880, 112
    %v1986 = vpop.permute.xlu0 %1985
    %1987 = vrot.lane.b32.xlu0 %v1881, 112
    %v1988 = vpop.permute.xlu0 %1987
    %v1989 = vsel %vm345, %v1986, %v1988
    %v1990 = vsel %vm345, %v1988, %v1986
    %v1991 = vsel %vm357, %v1989, 0.0
    %v1992 = vsel %vm358, %v1990, 0.0
    %1993 = vset.pattern.permute.xlu0 7
    %1994 = vperm.xlu0 %1993, %v1883
    %v1995 = vpop.permute.xlu0 %1994
    %v1997 = vmul.f32 %v1991, %v1995
    %v1998 = vmul.f32 %v1992, %v1995
    %v1999 = vadd.f32 %v1967, %v1997
    %v2000 = vadd.f32 %v1968, %v1998
    %2001 = vrot.lane.b32.xlu0 %v1880, 111
    %v2002 = vpop.permute.xlu0 %2001
    %2003 = vrot.lane.b32.xlu0 %v1881, 111
    %v2004 = vpop.permute.xlu0 %2003
    %v2005 = vsel %vm371, %v2002, %v2004
    %v2006 = vsel %vm371, %v2004, %v2002
    %v2007 = vsel %vm384, %v2005, 0.0
    %v2008 = vsel %vm385, %v2006, 0.0
    %2009 = vset.pattern.permute.xlu0 8
    %2010 = vperm.xlu0 %2009, %v1883
    %v2011 = vpop.permute.xlu0 %2010
    %v2013 = vmul.f32 %v2007, %v2011
    %v2014 = vmul.f32 %v2008, %v2011
    %v2015 = vadd.f32 %v1983, %v2013
    %v2016 = vadd.f32 %v1984, %v2014
    %v2017 = vadd.f32 %v2015, %v1999
    %v2018 = vadd.f32 %v2016, %v2000
    %v2019 = vld [vmem:[#allocation12] sm:$0xff]
    %v2020 = vlaneseq
    %v2021 = vshrl.u32 %v2020, 7
    %v2022 = vsub.s32 0, %v2021
    %v2023 = vrot.slane %v2017, %v2022
    %v2024 = vlaneseq
    %v2025 = vshrl.u32 %v2024, 7
    %v2026 = vsub.s32 0, %v2025
    %v2027 = vrot.slane %v2018, %v2026
    %2029 = vset.pattern.permute.xlu0 0
    %2030 = vperm.xlu0 %2029, %v2019
    %v2031 = vpop.permute.xlu0 %2030
    %v2033 = vmul.f32 %v2023, %v2031
    %v2034 = vmul.f32 %v2027, %v2031
    %v2035 = vlaneseq
    %v2036 = vshrl.u32 %v2035, 7
    %v2037 = vsub.s32 1, %v2036
    %v2038 = vrot.slane %v2017, %v2037
    %v2039 = vlaneseq
    %v2040 = vshrl.u32 %v2039, 7
    %v2041 = vsub.s32 1, %v2040
    %v2042 = vrot.slane %v2018, %v2041
    %2043 = vset.pattern.permute.xlu0 1
    %2044 = vperm.xlu0 %2043, %v2019
    %v2045 = vpop.permute.xlu0 %2044
    %v2047 = vmul.f32 %v2038, %v2045
    %v2048 = vmul.f32 %v2042, %v2045
    %v2049 = vlaneseq
    %v2050 = vshrl.u32 %v2049, 7
    %v2051 = vsub.s32 2, %v2050
    %v2052 = vrot.slane %v2017, %v2051
    %v2053 = vlaneseq
    %v2054 = vshrl.u32 %v2053, 7
    %v2055 = vsub.s32 2, %v2054
    %v2056 = vrot.slane %v2018, %v2055
    %2057 = vset.pattern.permute.xlu0 2
    %2058 = vperm.xlu0 %2057, %v2019
    %v2059 = vpop.permute.xlu0 %2058
    %v2061 = vmul.f32 %v2052, %v2059
    %v2062 = vmul.f32 %v2056, %v2059
    %v2063 = vadd.f32 %v2033, %v2061
    %v2064 = vadd.f32 %v2034, %v2062
    %v2065 = vlaneseq
    %v2066 = vshrl.u32 %v2065, 7
    %v2067 = vsub.s32 3, %v2066
    %v2068 = vrot.slane %v2017, %v2067
    %v2069 = vlaneseq
    %v2070 = vshrl.u32 %v2069, 7
    %v2071 = vsub.s32 3, %v2070
    %v2072 = vrot.slane %v2018, %v2071
    %2073 = vset.pattern.permute.xlu0 3
    %2074 = vperm.xlu0 %2073, %v2019
    %v2075 = vpop.permute.xlu0 %2074
    %v2077 = vmul.f32 %v2068, %v2075
    %v2078 = vmul.f32 %v2072, %v2075
    %v2079 = vadd.f32 %v2047, %v2077
    %v2080 = vadd.f32 %v2048, %v2078
    %v2081 = vlaneseq
    %v2082 = vshrl.u32 %v2081, 7
    %v2083 = vsub.s32 4, %v2082
    %v2084 = vrot.slane %v2017, %v2083
    %v2085 = vlaneseq
    %v2086 = vshrl.u32 %v2085, 7
    %v2087 = vsub.s32 4, %v2086
    %v2088 = vrot.slane %v2018, %v2087
    %2089 = vset.pattern.permute.xlu0 4
    %2090 = vperm.xlu0 %2089, %v2019
    %v2091 = vpop.permute.xlu0 %2090
    %v2093 = vmul.f32 %v2084, %v2091
    %v2094 = vmul.f32 %v2088, %v2091
    %v2095 = vadd.f32 %v2063, %v2093
    %v2096 = vadd.f32 %v2064, %v2094
    %v2097 = vlaneseq
    %v2098 = vshrl.u32 %v2097, 7
    %v2099 = vsub.s32 5, %v2098
    %v2100 = vrot.slane %v2017, %v2099
    %v2101 = vlaneseq
    %v2102 = vshrl.u32 %v2101, 7
    %v2103 = vsub.s32 5, %v2102
    %v2104 = vrot.slane %v2018, %v2103
    %2105 = vset.pattern.permute.xlu0 5
    %2106 = vperm.xlu0 %2105, %v2019
    %v2107 = vpop.permute.xlu0 %2106
    %v2109 = vmul.f32 %v2100, %v2107
    %v2110 = vmul.f32 %v2104, %v2107
    %v2111 = vadd.f32 %v2079, %v2109
    %v2112 = vadd.f32 %v2080, %v2110
    %v2113 = vlaneseq
    %v2114 = vshrl.u32 %v2113, 7
    %v2115 = vsub.s32 6, %v2114
    %v2116 = vrot.slane %v2017, %v2115
    %v2117 = vlaneseq
    %v2118 = vshrl.u32 %v2117, 7
    %v2119 = vsub.s32 6, %v2118
    %v2120 = vrot.slane %v2018, %v2119
    %2121 = vset.pattern.permute.xlu0 6
    %2122 = vperm.xlu0 %2121, %v2019
    %v2123 = vpop.permute.xlu0 %2122
    %v2125 = vmul.f32 %v2116, %v2123
    %v2126 = vmul.f32 %v2120, %v2123
    %v2127 = vadd.f32 %v2095, %v2125
    %v2128 = vadd.f32 %v2096, %v2126
    %v2129 = vlaneseq
    %v2130 = vshrl.u32 %v2129, 7
    %v2131 = vsub.s32 7, %v2130
    %v2132 = vrot.slane %v2017, %v2131
    %v2133 = vlaneseq
    %v2134 = vshrl.u32 %v2133, 7
    %v2135 = vsub.s32 7, %v2134
    %v2136 = vrot.slane %v2018, %v2135
    %2137 = vset.pattern.permute.xlu0 7
    %2138 = vperm.xlu0 %2137, %v2019
    %v2139 = vpop.permute.xlu0 %2138
    %v2141 = vmul.f32 %v2132, %v2139
    %v2142 = vmul.f32 %v2136, %v2139
    %v2143 = vadd.f32 %v2111, %v2141
    %v2144 = vadd.f32 %v2112, %v2142
    %v2145 = vadd.f32 %v2127, %v2143
    %v2146 = vadd.f32 %v2128, %v2144
    %v2147 = vmul.f32 %v2145, %v2145
    %v2148 = vmul.f32 %v2146, %v2146
    %v2149 = vrot.slane %v2145, 4
    %v2150 = vrot.slane %v2146, 4
    %v2151 = vadd.f32 %v2145, %v2149
    %v2152 = vadd.f32 %v2146, %v2150
    %v2153 = vrot.slane %v2147, 4
    %v2154 = vrot.slane %v2148, 4
    %v2155 = vadd.f32 %v2147, %v2153
    %v2156 = vadd.f32 %v2148, %v2154
    %v2157 = vadd.f32 %v2151, %v2152
    %2158 = vadd.xlane.f32.xlu0 %v2157
    %v2159 = vpop.xlane.xlu0 %2158
    %v2160 = vmul.f32 %v2159, 0.001953125
    %v2161 = vadd.f32 %v2155, %v2156
    %2162 = vadd.xlane.f32.xlu0 %v2161
    %v2163 = vpop.xlane.xlu0 %2162
    %v2164 = vmul.f32 %v2163, 0.001953125
    %v2165 = vmul.f32 %v2160, %v2160
    %v2166 = vsub.f32 %v2164, %v2165
    %v2167 = vmax.f32 %v2166, 0.0
    %v2168 = vsub.f32 %v2145, %v2160
    %v2169 = vsub.f32 %v2146, %v2160
    %v2170 = vadd.f32 %v2167, 1e-05
    %v2171 = vrsqrt.pop %v2170
    %v2172 = vmul.f32 %v2168, %v2171
    %v2173 = vmul.f32 %v2169, %v2171
    %v2174 = vstv %s1882
    %v2175 = vmul.f32 %v2174, %v2172
    %v2176 = vmul.f32 %v2174, %v2173
    %v2177 = vadd.f32 %v476, %v2175
    %v2178 = vadd.f32 %v477, %v2176
    %v2179 = vld [vmem:[#allocation13] sm:$0xff]
    %v2180 = vlaneseq
    %v2181 = vshrl.u32 %v2180, 7
    %v2182 = vsub.s32 0, %v2181
    %v2183 = vrot.slane %v1721, %v2182
    %v2184 = vlaneseq
    %v2185 = vshrl.u32 %v2184, 7
    %v2186 = vsub.s32 0, %v2185
    %v2187 = vrot.slane %v1722, %v2186
    %2189 = vset.pattern.permute.xlu0 0
    %2190 = vperm.xlu0 %2189, %v2179
    %v2191 = vpop.permute.xlu0 %2190
    %v2193 = vmul.f32 %v2183, %v2191
    %v2194 = vmul.f32 %v2187, %v2191
    %v2195 = vlaneseq
    %v2196 = vshrl.u32 %v2195, 7
    %v2197 = vsub.s32 1, %v2196
    %v2198 = vrot.slane %v1721, %v2197
    %v2199 = vlaneseq
    %v2200 = vshrl.u32 %v2199, 7
    %v2201 = vsub.s32 1, %v2200
    %v2202 = vrot.slane %v1722, %v2201
    %2203 = vset.pattern.permute.xlu0 1
    %2204 = vperm.xlu0 %2203, %v2179
    %v2205 = vpop.permute.xlu0 %2204
    %v2207 = vmul.f32 %v2198, %v2205
    %v2208 = vmul.f32 %v2202, %v2205
    %v2209 = vlaneseq
    %v2210 = vshrl.u32 %v2209, 7
    %v2211 = vsub.s32 2, %v2210
    %v2212 = vrot.slane %v1721, %v2211
    %v2213 = vlaneseq
    %v2214 = vshrl.u32 %v2213, 7
    %v2215 = vsub.s32 2, %v2214
    %v2216 = vrot.slane %v1722, %v2215
    %2217 = vset.pattern.permute.xlu0 2
    %2218 = vperm.xlu0 %2217, %v2179
    %v2219 = vpop.permute.xlu0 %2218
    %v2221 = vmul.f32 %v2212, %v2219
    %v2222 = vmul.f32 %v2216, %v2219
    %v2223 = vadd.f32 %v2193, %v2221
    %v2224 = vadd.f32 %v2194, %v2222
    %v2225 = vlaneseq
    %v2226 = vshrl.u32 %v2225, 7
    %v2227 = vsub.s32 3, %v2226
    %v2228 = vrot.slane %v1721, %v2227
    %v2229 = vlaneseq
    %v2230 = vshrl.u32 %v2229, 7
    %v2231 = vsub.s32 3, %v2230
    %v2232 = vrot.slane %v1722, %v2231
    %2233 = vset.pattern.permute.xlu0 3
    %2234 = vperm.xlu0 %2233, %v2179
    %v2235 = vpop.permute.xlu0 %2234
    %v2237 = vmul.f32 %v2228, %v2235
    %v2238 = vmul.f32 %v2232, %v2235
    %v2239 = vadd.f32 %v2207, %v2237
    %v2240 = vadd.f32 %v2208, %v2238
    %v2241 = vlaneseq
    %v2242 = vshrl.u32 %v2241, 7
    %v2243 = vsub.s32 4, %v2242
    %v2244 = vrot.slane %v1721, %v2243
    %v2245 = vlaneseq
    %v2246 = vshrl.u32 %v2245, 7
    %v2247 = vsub.s32 4, %v2246
    %v2248 = vrot.slane %v1722, %v2247
    %2249 = vset.pattern.permute.xlu0 4
    %2250 = vperm.xlu0 %2249, %v2179
    %v2251 = vpop.permute.xlu0 %2250
    %v2253 = vmul.f32 %v2244, %v2251
    %v2254 = vmul.f32 %v2248, %v2251
    %v2255 = vadd.f32 %v2223, %v2253
    %v2256 = vadd.f32 %v2224, %v2254
    %v2257 = vlaneseq
    %v2258 = vshrl.u32 %v2257, 7
    %v2259 = vsub.s32 5, %v2258
    %v2260 = vrot.slane %v1721, %v2259
    %v2261 = vlaneseq
    %v2262 = vshrl.u32 %v2261, 7
    %v2263 = vsub.s32 5, %v2262
    %v2264 = vrot.slane %v1722, %v2263
    %2265 = vset.pattern.permute.xlu0 5
    %2266 = vperm.xlu0 %2265, %v2179
    %v2267 = vpop.permute.xlu0 %2266
    %v2269 = vmul.f32 %v2260, %v2267
    %v2270 = vmul.f32 %v2264, %v2267
    %v2271 = vadd.f32 %v2239, %v2269
    %v2272 = vadd.f32 %v2240, %v2270
    %v2273 = vlaneseq
    %v2274 = vshrl.u32 %v2273, 7
    %v2275 = vsub.s32 6, %v2274
    %v2276 = vrot.slane %v1721, %v2275
    %v2277 = vlaneseq
    %v2278 = vshrl.u32 %v2277, 7
    %v2279 = vsub.s32 6, %v2278
    %v2280 = vrot.slane %v1722, %v2279
    %2281 = vset.pattern.permute.xlu0 6
    %2282 = vperm.xlu0 %2281, %v2179
    %v2283 = vpop.permute.xlu0 %2282
    %v2285 = vmul.f32 %v2276, %v2283
    %v2286 = vmul.f32 %v2280, %v2283
    %v2287 = vadd.f32 %v2255, %v2285
    %v2288 = vadd.f32 %v2256, %v2286
    %v2289 = vlaneseq
    %v2290 = vshrl.u32 %v2289, 7
    %v2291 = vsub.s32 7, %v2290
    %v2292 = vrot.slane %v1721, %v2291
    %v2293 = vlaneseq
    %v2294 = vshrl.u32 %v2293, 7
    %v2295 = vsub.s32 7, %v2294
    %v2296 = vrot.slane %v1722, %v2295
    %2297 = vset.pattern.permute.xlu0 7
    %2298 = vperm.xlu0 %2297, %v2179
    %v2299 = vpop.permute.xlu0 %2298
    %v2301 = vmul.f32 %v2292, %v2299
    %v2302 = vmul.f32 %v2296, %v2299
    %v2303 = vadd.f32 %v2271, %v2301
    %v2304 = vadd.f32 %v2272, %v2302
    %v2305 = vadd.f32 %v2287, %v2303
    %v2306 = vadd.f32 %v2288, %v2304
    %v2307 = vmul.f32 %v2305, %v2305
    %v2308 = vmul.f32 %v2306, %v2306
    %v2309 = vrot.slane %v2305, 4
    %v2310 = vrot.slane %v2306, 4
    %v2311 = vadd.f32 %v2305, %v2309
    %v2312 = vadd.f32 %v2306, %v2310
    %v2313 = vrot.slane %v2307, 4
    %v2314 = vrot.slane %v2308, 4
    %v2315 = vadd.f32 %v2307, %v2313
    %v2316 = vadd.f32 %v2308, %v2314
    %v2317 = vadd.f32 %v2311, %v2312
    %2318 = vadd.xlane.f32.xlu0 %v2317
    %v2319 = vpop.xlane.xlu0 %2318
    %v2320 = vmul.f32 %v2319, 0.001953125
    %v2321 = vadd.f32 %v2315, %v2316
    %2322 = vadd.xlane.f32.xlu0 %v2321
    %v2323 = vpop.xlane.xlu0 %2322
    %v2324 = vmul.f32 %v2323, 0.001953125
    %v2325 = vmul.f32 %v2320, %v2320
    %v2326 = vsub.f32 %v2324, %v2325
    %v2327 = vmax.f32 %v2326, 0.0
    %v2328 = vsub.f32 %v2305, %v2320
    %v2329 = vsub.f32 %v2306, %v2320
    %v2330 = vadd.f32 %v2327, 1e-05
    %v2331 = vrsqrt.pop %v2330
    %v2332 = vmul.f32 %v2328, %v2331
    %v2333 = vmul.f32 %v2329, %v2331
    %v2334 = vmax.f32 %v2332, 0.0
    %v2335 = vmax.f32 %v2333, 0.0
    %s2336 = sld [smem:[#allocation2 + $0x5]]
    %v2337 = vld [vmem:[%s11] sm:$0xff]
    %2338 = vrot.lane.b32.xlu0 %v2334, 34
    %v2339 = vpop.permute.xlu0 %2338
    %2340 = vrot.lane.b32.xlu0 %v2335, 34
    %v2341 = vpop.permute.xlu0 %2340
    %v2342 = vsel %vm664, %v2339, %v2341
    %v2343 = vsel %vm664, %v2341, %v2339
    %v2344 = vsel %vm677, %v2343, 0.0
    %v2345 = vsel %vm678, %v2342, 0.0
    %2347 = vset.pattern.permute.xlu0 0
    %2348 = vperm.xlu0 %2347, %v2337
    %v2349 = vpop.permute.xlu0 %2348
    %v2351 = vmul.f32 %v2344, %v2349
    %v2352 = vmul.f32 %v2345, %v2349
    %2353 = vrot.lane.b32.xlu0 %v2334, 33
    %v2354 = vpop.permute.xlu0 %2353
    %2355 = vrot.lane.b32.xlu0 %v2335, 33
    %v2356 = vpop.permute.xlu0 %2355
    %v2357 = vsel %vm707, %v2354, %v2356
    %v2358 = vsel %vm707, %v2356, %v2354
    %v2359 = vsel %vm720, %v2358, 0.0
    %v2360 = vsel %vm721, %v2357, 0.0
    %2361 = vset.pattern.permute.xlu0 1
    %2362 = vperm.xlu0 %2361, %v2337
    %v2363 = vpop.permute.xlu0 %2362
    %v2365 = vmul.f32 %v2359, %v2363
    %v2366 = vmul.f32 %v2360, %v2363
    %2367 = vrot.lane.b32.xlu0 %v2334, 32
    %v2368 = vpop.permute.xlu0 %2367
    %2369 = vrot.lane.b32.xlu0 %v2335, 32
    %v2370 = vpop.permute.xlu0 %2369
    %v2371 = vsel %vm734, %v2368, %v2370
    %v2372 = vsel %vm734, %v2370, %v2368
    %v2373 = vsel %vm746, %v2372, 0.0
    %v2374 = vsel %vm747, %v2371, 0.0
    %2375 = vset.pattern.permute.xlu0 2
    %2376 = vperm.xlu0 %2375, %v2337
    %v2377 = vpop.permute.xlu0 %2376
    %v2379 = vmul.f32 %v2373, %v2377
    %v2380 = vmul.f32 %v2374, %v2377
    %v2381 = vadd.f32 %v2351, %v2379
    %v2382 = vadd.f32 %v2352, %v2380
    %2383 = vrot.lane.b32.xlu0 %v2334, 31
    %v2384 = vpop.permute.xlu0 %2383
    %2385 = vrot.lane.b32.xlu0 %v2335, 31
    %v2386 = vpop.permute.xlu0 %2385
    %v2387 = vsel %vm778, %v2384, %v2386
    %v2388 = vsel %vm778, %v2386, %v2384
    %v2389 = vsel %vm791, %v2388, 0.0
    %v2390 = vsel %vm792, %v2387, 0.0
    %2391 = vset.pattern.permute.xlu0 3
    %2392 = vperm.xlu0 %2391, %v2337
    %v2393 = vpop.permute.xlu0 %2392
    %v2395 = vmul.f32 %v2389, %v2393
    %v2396 = vmul.f32 %v2390, %v2393
    %v2397 = vadd.f32 %v2365, %v2395
    %v2398 = vadd.f32 %v2366, %v2396
    %2399 = vrot.lane.b32.xlu0 %v2334, 30
    %v2400 = vpop.permute.xlu0 %2399
    %2401 = vrot.lane.b32.xlu0 %v2335, 30
    %v2402 = vpop.permute.xlu0 %2401
    %v2403 = vsel %vm807, %v2400, %v2402
    %v2404 = vsel %vm807, %v2402, %v2400
    %v2405 = vsel %vm820, %v2404, 0.0
    %v2406 = vsel %vm821, %v2403, 0.0
    %2407 = vset.pattern.permute.xlu0 4
    %2408 = vperm.xlu0 %2407, %v2337
    %v2409 = vpop.permute.xlu0 %2408
    %v2411 = vmul.f32 %v2405, %v2409
    %v2412 = vmul.f32 %v2406, %v2409
    %v2413 = vadd.f32 %v2381, %v2411
    %v2414 = vadd.f32 %v2382, %v2412
    %2415 = vrot.lane.b32.xlu0 %v2334, 18
    %v2416 = vpop.permute.xlu0 %2415
    %2417 = vrot.lane.b32.xlu0 %v2335, 18
    %v2418 = vpop.permute.xlu0 %2417
    %v2419 = vsel %vm881, %v2416, %v2418
    %v2420 = vsel %vm881, %v2418, %v2416
    %v2421 = vsel %vm894, %v2420, 0.0
    %v2422 = vsel %vm895, %v2419, 0.0
    %2423 = vset.pattern.permute.xlu0 5
    %2424 = vperm.xlu0 %2423, %v2337
    %v2425 = vpop.permute.xlu0 %2424
    %v2427 = vmul.f32 %v2421, %v2425
    %v2428 = vmul.f32 %v2422, %v2425
    %v2429 = vadd.f32 %v2397, %v2427
    %v2430 = vadd.f32 %v2398, %v2428
    %2431 = vrot.lane.b32.xlu0 %v2334, 17
    %v2432 = vpop.permute.xlu0 %2431
    %2433 = vrot.lane.b32.xlu0 %v2335, 17
    %v2434 = vpop.permute.xlu0 %2433
    %v2435 = vsel %vm182, %v2432, %v2434
    %v2436 = vsel %vm182, %v2434, %v2432
    %v2437 = vsel %vm197, %v2436, 0.0
    %v2438 = vsel %vm198, %v2435, 0.0
    %2439 = vset.pattern.permute.xlu0 6
    %2440 = vperm.xlu0 %2439, %v2337
    %v2441 = vpop.permute.xlu0 %2440
    %v2443 = vmul.f32 %v2437, %v2441
    %v2444 = vmul.f32 %v2438, %v2441
    %v2445 = vadd.f32 %v2413, %v2443
    %v2446 = vadd.f32 %v2414, %v2444
    %2447 = vrot.lane.b32.xlu0 %v2334, 16
    %v2448 = vpop.permute.xlu0 %2447
    %2449 = vrot.lane.b32.xlu0 %v2335, 16
    %v2450 = vpop.permute.xlu0 %2449
    %v2451 = vsel %vm211, %v2448, %v2450
    %v2452 = vsel %vm211, %v2450, %v2448
    %v2453 = vsel %vm223, %v2452, 0.0
    %v2454 = vsel %vm224, %v2451, 0.0
    %2455 = vset.pattern.permute.xlu0 7
    %2456 = vperm.xlu0 %2455, %v2337
    %v2457 = vpop.permute.xlu0 %2456
    %v2459 = vmul.f32 %v2453, %v2457
    %v2460 = vmul.f32 %v2454, %v2457
    %v2461 = vadd.f32 %v2429, %v2459
    %v2462 = vadd.f32 %v2430, %v2460
    %2463 = vrot.lane.b32.xlu0 %v2334, 15
    %v2464 = vpop.permute.xlu0 %2463
    %2465 = vrot.lane.b32.xlu0 %v2335, 15
    %v2466 = vpop.permute.xlu0 %2465
    %v2467 = vsel %vm237, %v2464, %v2466
    %v2468 = vsel %vm237, %v2466, %v2464
    %v2469 = vsel %vm251, %v2468, 0.0
    %v2470 = vsel %vm252, %v2467, 0.0
    %2471 = vset.pattern.permute.xlu0 8
    %2472 = vperm.xlu0 %2471, %v2337
    %v2473 = vpop.permute.xlu0 %2472
    %v2475 = vmul.f32 %v2469, %v2473
    %v2476 = vmul.f32 %v2470, %v2473
    %v2477 = vadd.f32 %v2445, %v2475
    %v2478 = vadd.f32 %v2446, %v2476
    %2479 = vrot.lane.b32.xlu0 %v2334, 14
    %v2480 = vpop.permute.xlu0 %2479
    %2481 = vrot.lane.b32.xlu0 %v2335, 14
    %v2482 = vpop.permute.xlu0 %2481
    %v2483 = vsel %vm979, %v2480, %v2482
    %v2484 = vsel %vm979, %v2482, %v2480
    %v2485 = vsel %vm992, %v2484, 0.0
    %v2486 = vsel %vm993, %v2483, 0.0
    %2487 = vset.pattern.permute.xlu0 9
    %2488 = vperm.xlu0 %2487, %v2337
    %v2489 = vpop.permute.xlu0 %2488
    %v2491 = vmul.f32 %v2485, %v2489
    %v2492 = vmul.f32 %v2486, %v2489
    %v2493 = vadd.f32 %v2461, %v2491
    %v2494 = vadd.f32 %v2462, %v2492
    %2495 = vrot.lane.b32.xlu0 %v2334, 2
    %v2496 = vpop.permute.xlu0 %2495
    %2497 = vrot.lane.b32.xlu0 %v2335, 2
    %v2498 = vpop.permute.xlu0 %2497
    %v2499 = vsel %vm1036, %v2496, %v2498
    %v2500 = vsel %vm1036, %v2498, %v2496
    %v2501 = vsel %vm1048, %v2500, 0.0
    %v2502 = vsel %vm1049, %v2499, 0.0
    %2503 = vset.pattern.permute.xlu0 10
    %2504 = vperm.xlu0 %2503, %v2337
    %v2505 = vpop.permute.xlu0 %2504
    %v2507 = vmul.f32 %v2501, %v2505
    %v2508 = vmul.f32 %v2502, %v2505
    %v2509 = vadd.f32 %v2477, %v2507
    %v2510 = vadd.f32 %v2478, %v2508
    %2511 = vrot.lane.b32.xlu0 %v2334, 1
    %v2512 = vpop.permute.xlu0 %2511
    %2513 = vrot.lane.b32.xlu0 %v2335, 1
    %v2514 = vpop.permute.xlu0 %2513
    %v2515 = vsel %vm265, %v2512, %v2514
    %v2516 = vsel %vm265, %v2514, %v2512
    %v2517 = vsel %vm277, %v2516, 0.0
    %v2518 = vsel %vm278, %v2515, 0.0
    %2519 = vset.pattern.permute.xlu0 11
    %2520 = vperm.xlu0 %2519, %v2337
    %v2521 = vpop.permute.xlu0 %2520
    %v2523 = vmul.f32 %v2517, %v2521
    %v2524 = vmul.f32 %v2518, %v2521
    %v2525 = vadd.f32 %v2493, %v2523
    %v2526 = vadd.f32 %v2494, %v2524
    %2527 = vset.pattern.permute.xlu0 12
    %2528 = vperm.xlu0 %2527, %v2337
    %v2529 = vpop.permute.xlu0 %2528
    %v2531 = vmul.f32 %v2334, %v2529
    %v2532 = vmul.f32 %v2335, %v2529
    %v2533 = vadd.f32 %v2509, %v2531
    %v2534 = vadd.f32 %v2510, %v2532
    %2535 = vrot.lane.b32.xlu0 %v2334, 127
    %v2536 = vpop.permute.xlu0 %2535
    %2537 = vrot.lane.b32.xlu0 %v2335, 127
    %v2538 = vpop.permute.xlu0 %2537
    %v2539 = vsel %vm291, %v2536, %v2538
    %v2540 = vsel %vm291, %v2538, %v2536
    %v2541 = vsel %vm303, %v2539, 0.0
    %v2542 = vsel %vm304, %v2540, 0.0
    %2543 = vset.pattern.permute.xlu0 13
    %2544 = vperm.xlu0 %2543, %v2337
    %v2545 = vpop.permute.xlu0 %2544
    %v2547 = vmul.f32 %v2541, %v2545
    %v2548 = vmul.f32 %v2542, %v2545
    %v2549 = vadd.f32 %v2525, %v2547
    %v2550 = vadd.f32 %v2526, %v2548
    %2551 = vrot.lane.b32.xlu0 %v2334, 126
    %v2552 = vpop.permute.xlu0 %2551
    %2553 = vrot.lane.b32.xlu0 %v2335, 126
    %v2554 = vpop.permute.xlu0 %2553
    %v2555 = vsel %vm1160, %v2552, %v2554
    %v2556 = vsel %vm1160, %v2554, %v2552
    %v2557 = vsel %vm1172, %v2555, 0.0
    %v2558 = vsel %vm1173, %v2556, 0.0
    %2559 = vset.pattern.permute.xlu0 14
    %2560 = vperm.xlu0 %2559, %v2337
    %v2561 = vpop.permute.xlu0 %2560
    %v2563 = vmul.f32 %v2557, %v2561
    %v2564 = vmul.f32 %v2558, %v2561
    %v2565 = vadd.f32 %v2533, %v2563
    %v2566 = vadd.f32 %v2534, %v2564
    %2567 = vrot.lane.b32.xlu0 %v2334, 114
    %v2568 = vpop.permute.xlu0 %2567
    %2569 = vrot.lane.b32.xlu0 %v2335, 114
    %v2570 = vpop.permute.xlu0 %2569
    %v2571 = vsel %vm1232, %v2568, %v2570
    %v2572 = vsel %vm1232, %v2570, %v2568
    %v2573 = vsel %vm1245, %v2571, 0.0
    %v2574 = vsel %vm1246, %v2572, 0.0
    %2575 = vset.pattern.permute.xlu0 15
    %2576 = vperm.xlu0 %2575, %v2337
    %v2577 = vpop.permute.xlu0 %2576
    %v2579 = vmul.f32 %v2573, %v2577
    %v2580 = vmul.f32 %v2574, %v2577
    %v2581 = vadd.f32 %v2549, %v2579
    %v2582 = vadd.f32 %v2550, %v2580
    %2583 = vrot.lane.b32.xlu0 %v2334, 113
    %v2584 = vpop.permute.xlu0 %2583
    %2585 = vrot.lane.b32.xlu0 %v2335, 113
    %v2586 = vpop.permute.xlu0 %2585
    %v2587 = vsel %vm317, %v2584, %v2586
    %v2588 = vsel %vm317, %v2586, %v2584
    %v2589 = vsel %vm331, %v2587, 0.0
    %v2590 = vsel %vm332, %v2588, 0.0
    %2591 = vset.pattern.permute.xlu0 16
    %2592 = vperm.xlu0 %2591, %v2337
    %v2593 = vpop.permute.xlu0 %2592
    %v2595 = vmul.f32 %v2589, %v2593
    %v2596 = vmul.f32 %v2590, %v2593
    %v2597 = vadd.f32 %v2565, %v2595
    %v2598 = vadd.f32 %v2566, %v2596
    %2599 = vrot.lane.b32.xlu0 %v2334, 112
    %v2600 = vpop.permute.xlu0 %2599
    %2601 = vrot.lane.b32.xlu0 %v2335, 112
    %v2602 = vpop.permute.xlu0 %2601
    %v2603 = vsel %vm345, %v2600, %v2602
    %v2604 = vsel %vm345, %v2602, %v2600
    %v2605 = vsel %vm357, %v2603, 0.0
    %v2606 = vsel %vm358, %v2604, 0.0
    %2607 = vset.pattern.permute.xlu0 17
    %2608 = vperm.xlu0 %2607, %v2337
    %v2609 = vpop.permute.xlu0 %2608
    %v2611 = vmul.f32 %v2605, %v2609
    %v2612 = vmul.f32 %v2606, %v2609
    %v2613 = vadd.f32 %v2581, %v2611
    %v2614 = vadd.f32 %v2582, %v2612
    %2615 = vrot.lane.b32.xlu0 %v2334, 111
    %v2616 = vpop.permute.xlu0 %2615
    %2617 = vrot.lane.b32.xlu0 %v2335, 111
    %v2618 = vpop.permute.xlu0 %2617
    %v2619 = vsel %vm371, %v2616, %v2618
    %v2620 = vsel %vm371, %v2618, %v2616
    %v2621 = vsel %vm384, %v2619, 0.0
    %v2622 = vsel %vm385, %v2620, 0.0
    %2623 = vset.pattern.permute.xlu0 18
    %2624 = vperm.xlu0 %2623, %v2337
    %v2625 = vpop.permute.xlu0 %2624
    %v2627 = vmul.f32 %v2621, %v2625
    %v2628 = vmul.f32 %v2622, %v2625
    %v2629 = vadd.f32 %v2597, %v2627
    %v2630 = vadd.f32 %v2598, %v2628
    %2631 = vrot.lane.b32.xlu0 %v2334, 110
    %v2632 = vpop.permute.xlu0 %2631
    %2633 = vrot.lane.b32.xlu0 %v2335, 110
    %v2634 = vpop.permute.xlu0 %2633
    %v2635 = vsel %vm1333, %v2632, %v2634
    %v2636 = vsel %vm1333, %v2634, %v2632
    %v2637 = vsel %vm1346, %v2635, 0.0
    %v2638 = vsel %vm1347, %v2636, 0.0
    %2639 = vset.pattern.permute.xlu0 19
    %2640 = vperm.xlu0 %2639, %v2337
    %v2641 = vpop.permute.xlu0 %2640
    %v2643 = vmul.f32 %v2637, %v2641
    %v2644 = vmul.f32 %v2638, %v2641
    %v2645 = vadd.f32 %v2613, %v2643
    %v2646 = vadd.f32 %v2614, %v2644
    %2647 = vrot.lane.b32.xlu0 %v2334, 98
    %v2648 = vpop.permute.xlu0 %2647
    %2649 = vrot.lane.b32.xlu0 %v2335, 98
    %v2650 = vpop.permute.xlu0 %2649
    %v2651 = vsel %vm1392, %v2648, %v2650
    %v2652 = vsel %vm1392, %v2650, %v2648
    %v2653 = vsel %vm1405, %v2651, 0.0
    %v2654 = vsel %vm1406, %v2652, 0.0
    %2655 = vset.pattern.permute.xlu0 20
    %2656 = vperm.xlu0 %2655, %v2337
    %v2657 = vpop.permute.xlu0 %2656
    %v2659 = vmul.f32 %v2653, %v2657
    %v2660 = vmul.f32 %v2654, %v2657
    %v2661 = vadd.f32 %v2629, %v2659
    %v2662 = vadd.f32 %v2630, %v2660
    %2663 = vrot.lane.b32.xlu0 %v2334, 97
    %v2664 = vpop.permute.xlu0 %2663
    %2665 = vrot.lane.b32.xlu0 %v2335, 97
    %v2666 = vpop.permute.xlu0 %2665
    %v2667 = vsel %vm1437, %v2664, %v2666
    %v2668 = vsel %vm1437, %v2666, %v2664
    %v2669 = vsel %vm1450, %v2667, 0.0
    %v2670 = vsel %vm1451, %v2668, 0.0
    %2671 = vset.pattern.permute.xlu0 21
    %2672 = vperm.xlu0 %2671, %v2337
    %v2673 = vpop.permute.xlu0 %2672
    %v2675 = vmul.f32 %v2669, %v2673
    %v2676 = vmul.f32 %v2670, %v2673
    %v2677 = vadd.f32 %v2645, %v2675
    %v2678 = vadd.f32 %v2646, %v2676
    %2679 = vrot.lane.b32.xlu0 %v2334, 96
    %v2680 = vpop.permute.xlu0 %2679
    %2681 = vrot.lane.b32.xlu0 %v2335, 96
    %v2682 = vpop.permute.xlu0 %2681
    %v2683 = vsel %vm1466, %v2680, %v2682
    %v2684 = vsel %vm1466, %v2682, %v2680
    %v2685 = vsel %vm1478, %v2683, 0.0
    %v2686 = vsel %vm1479, %v2684, 0.0
    %2687 = vset.pattern.permute.xlu0 22
    %2688 = vperm.xlu0 %2687, %v2337
    %v2689 = vpop.permute.xlu0 %2688
    %v2691 = vmul.f32 %v2685, %v2689
    %v2692 = vmul.f32 %v2686, %v2689
    %v2693 = vadd.f32 %v2661, %v2691
    %v2694 = vadd.f32 %v2662, %v2692
    %2695 = vrot.lane.b32.xlu0 %v2334, 95
    %v2696 = vpop.permute.xlu0 %2695
    %2697 = vrot.lane.b32.xlu0 %v2335, 95
    %v2698 = vpop.permute.xlu0 %2697
    %v2699 = vsel %vm1510, %v2696, %v2698
    %v2700 = vsel %vm1510, %v2698, %v2696
    %v2701 = vsel %vm1523, %v2699, 0.0
    %v2702 = vsel %vm1524, %v2700, 0.0
    %2703 = vset.pattern.permute.xlu0 23
    %2704 = vperm.xlu0 %2703, %v2337
    %v2705 = vpop.permute.xlu0 %2704
    %v2707 = vmul.f32 %v2701, %v2705
    %v2708 = vmul.f32 %v2702, %v2705
    %v2709 = vadd.f32 %v2677, %v2707
    %v2710 = vadd.f32 %v2678, %v2708
    %2711 = vrot.lane.b32.xlu0 %v2334, 94
    %v2712 = vpop.permute.xlu0 %2711
    %2713 = vrot.lane.b32.xlu0 %v2335, 94
    %v2714 = vpop.permute.xlu0 %2713
    %v2715 = vsel %vm1539, %v2712, %v2714
    %v2716 = vsel %vm1539, %v2714, %v2712
    %v2717 = vsel %vm1552, %v2715, 0.0
    %v2718 = vsel %vm1553, %v2716, 0.0
    %2719 = vset.pattern.permute.xlu0 24
    %2720 = vperm.xlu0 %2719, %v2337
    %v2721 = vpop.permute.xlu0 %2720
    %v2723 = vmul.f32 %v2717, %v2721
    %v2724 = vmul.f32 %v2718, %v2721
    %v2725 = vadd.f32 %v2693, %v2723
    %v2726 = vadd.f32 %v2694, %v2724
    %v2727 = vadd.f32 %v2725, %v2709
    %v2728 = vadd.f32 %v2726, %v2710
    %v2729 = vld [vmem:[#allocation15] sm:$0xff]
    %v2730 = vlaneseq
    %v2731 = vshrl.u32 %v2730, 7
    %v2732 = vsub.s32 0, %v2731
    %v2733 = vrot.slane %v2727, %v2732
    %v2734 = vlaneseq
    %v2735 = vshrl.u32 %v2734, 7
    %v2736 = vsub.s32 0, %v2735
    %v2737 = vrot.slane %v2728, %v2736
    %2739 = vset.pattern.permute.xlu0 0
    %2740 = vperm.xlu0 %2739, %v2729
    %v2741 = vpop.permute.xlu0 %2740
    %v2743 = vmul.f32 %v2733, %v2741
    %v2744 = vmul.f32 %v2737, %v2741
    %v2745 = vlaneseq
    %v2746 = vshrl.u32 %v2745, 7
    %v2747 = vsub.s32 1, %v2746
    %v2748 = vrot.slane %v2727, %v2747
    %v2749 = vlaneseq
    %v2750 = vshrl.u32 %v2749, 7
    %v2751 = vsub.s32 1, %v2750
    %v2752 = vrot.slane %v2728, %v2751
    %2753 = vset.pattern.permute.xlu0 1
    %2754 = vperm.xlu0 %2753, %v2729
    %v2755 = vpop.permute.xlu0 %2754
    %v2757 = vmul.f32 %v2748, %v2755
    %v2758 = vmul.f32 %v2752, %v2755
    %v2759 = vlaneseq
    %v2760 = vshrl.u32 %v2759, 7
    %v2761 = vsub.s32 2, %v2760
    %v2762 = vrot.slane %v2727, %v2761
    %v2763 = vlaneseq
    %v2764 = vshrl.u32 %v2763, 7
    %v2765 = vsub.s32 2, %v2764
    %v2766 = vrot.slane %v2728, %v2765
    %2767 = vset.pattern.permute.xlu0 2
    %2768 = vperm.xlu0 %2767, %v2729
    %v2769 = vpop.permute.xlu0 %2768
    %v2771 = vmul.f32 %v2762, %v2769
    %v2772 = vmul.f32 %v2766, %v2769
    %v2773 = vadd.f32 %v2743, %v2771
    %v2774 = vadd.f32 %v2744, %v2772
    %v2775 = vlaneseq
    %v2776 = vshrl.u32 %v2775, 7
    %v2777 = vsub.s32 3, %v2776
    %v2778 = vrot.slane %v2727, %v2777
    %v2779 = vlaneseq
    %v2780 = vshrl.u32 %v2779, 7
    %v2781 = vsub.s32 3, %v2780
    %v2782 = vrot.slane %v2728, %v2781
    %2783 = vset.pattern.permute.xlu0 3
    %2784 = vperm.xlu0 %2783, %v2729
    %v2785 = vpop.permute.xlu0 %2784
    %v2787 = vmul.f32 %v2778, %v2785
    %v2788 = vmul.f32 %v2782, %v2785
    %v2789 = vadd.f32 %v2757, %v2787
    %v2790 = vadd.f32 %v2758, %v2788
    %v2791 = vlaneseq
    %v2792 = vshrl.u32 %v2791, 7
    %v2793 = vsub.s32 4, %v2792
    %v2794 = vrot.slane %v2727, %v2793
    %v2795 = vlaneseq
    %v2796 = vshrl.u32 %v2795, 7
    %v2797 = vsub.s32 4, %v2796
    %v2798 = vrot.slane %v2728, %v2797
    %2799 = vset.pattern.permute.xlu0 4
    %2800 = vperm.xlu0 %2799, %v2729
    %v2801 = vpop.permute.xlu0 %2800
    %v2803 = vmul.f32 %v2794, %v2801
    %v2804 = vmul.f32 %v2798, %v2801
    %v2805 = vadd.f32 %v2773, %v2803
    %v2806 = vadd.f32 %v2774, %v2804
    %v2807 = vlaneseq
    %v2808 = vshrl.u32 %v2807, 7
    %v2809 = vsub.s32 5, %v2808
    %v2810 = vrot.slane %v2727, %v2809
    %v2811 = vlaneseq
    %v2812 = vshrl.u32 %v2811, 7
    %v2813 = vsub.s32 5, %v2812
    %v2814 = vrot.slane %v2728, %v2813
    %2815 = vset.pattern.permute.xlu0 5
    %2816 = vperm.xlu0 %2815, %v2729
    %v2817 = vpop.permute.xlu0 %2816
    %v2819 = vmul.f32 %v2810, %v2817
    %v2820 = vmul.f32 %v2814, %v2817
    %v2821 = vadd.f32 %v2789, %v2819
    %v2822 = vadd.f32 %v2790, %v2820
    %v2823 = vlaneseq
    %v2824 = vshrl.u32 %v2823, 7
    %v2825 = vsub.s32 6, %v2824
    %v2826 = vrot.slane %v2727, %v2825
    %v2827 = vlaneseq
    %v2828 = vshrl.u32 %v2827, 7
    %v2829 = vsub.s32 6, %v2828
    %v2830 = vrot.slane %v2728, %v2829
    %2831 = vset.pattern.permute.xlu0 6
    %2832 = vperm.xlu0 %2831, %v2729
    %v2833 = vpop.permute.xlu0 %2832
    %v2835 = vmul.f32 %v2826, %v2833
    %v2836 = vmul.f32 %v2830, %v2833
    %v2837 = vadd.f32 %v2805, %v2835
    %v2838 = vadd.f32 %v2806, %v2836
    %v2839 = vlaneseq
    %v2840 = vshrl.u32 %v2839, 7
    %v2841 = vsub.s32 7, %v2840
    %v2842 = vrot.slane %v2727, %v2841
    %v2843 = vlaneseq
    %v2844 = vshrl.u32 %v2843, 7
    %v2845 = vsub.s32 7, %v2844
    %v2846 = vrot.slane %v2728, %v2845
    %2847 = vset.pattern.permute.xlu0 7
    %2848 = vperm.xlu0 %2847, %v2729
    %v2849 = vpop.permute.xlu0 %2848
    %v2851 = vmul.f32 %v2842, %v2849
    %v2852 = vmul.f32 %v2846, %v2849
    %v2853 = vadd.f32 %v2821, %v2851
    %v2854 = vadd.f32 %v2822, %v2852
    %v2855 = vadd.f32 %v2837, %v2853
    %v2856 = vadd.f32 %v2838, %v2854
    %v2857 = vmul.f32 %v2855, %v2855
    %v2858 = vmul.f32 %v2856, %v2856
    %v2859 = vrot.slane %v2855, 4
    %v2860 = vrot.slane %v2856, 4
    %v2861 = vadd.f32 %v2855, %v2859
    %v2862 = vadd.f32 %v2856, %v2860
    %v2863 = vrot.slane %v2857, 4
    %v2864 = vrot.slane %v2858, 4
    %v2865 = vadd.f32 %v2857, %v2863
    %v2866 = vadd.f32 %v2858, %v2864
    %v2867 = vadd.f32 %v2861, %v2862
    %2868 = vadd.xlane.f32.xlu0 %v2867
    %v2869 = vpop.xlane.xlu0 %2868
    %v2870 = vmul.f32 %v2869, 0.001953125
    %v2871 = vadd.f32 %v2865, %v2866
    %2872 = vadd.xlane.f32.xlu0 %v2871
    %v2873 = vpop.xlane.xlu0 %2872
    %v2874 = vmul.f32 %v2873, 0.001953125
    %v2875 = vmul.f32 %v2870, %v2870
    %v2876 = vsub.f32 %v2874, %v2875
    %v2877 = vmax.f32 %v2876, 0.0
    %v2878 = vsub.f32 %v2855, %v2870
    %v2879 = vsub.f32 %v2856, %v2870
    %v2880 = vadd.f32 %v2877, 1e-05
    %v2881 = vrsqrt.pop %v2880
    %v2882 = vmul.f32 %v2878, %v2881
    %v2883 = vmul.f32 %v2879, %v2881
    %v2884 = vstv %s2336
    %v2885 = vmul.f32 %v2884, %v2882
    %v2886 = vmul.f32 %v2884, %v2883
    %v2887 = vadd.f32 %v2177, %v2885
    %v2888 = vadd.f32 %v2178, %v2886
    %s2889 = sld [smem:[#allocation2 + $0x6]]
    %v2890 = vld [vmem:[#allocation16] sm:$0xff]
    %v2891 = vlaneseq
    %v2892 = vshrl.u32 %v2891, 7
    %v2893 = vsub.s32 0, %v2892
    %v2894 = vrot.slane %v1570, %v2893
    %v2895 = vlaneseq
    %v2896 = vshrl.u32 %v2895, 7
    %v2897 = vsub.s32 0, %v2896
    %v2898 = vrot.slane %v1571, %v2897
    %2900 = vset.pattern.permute.xlu0 0
    %2901 = vperm.xlu0 %2900, %v2890
    %v2902 = vpop.permute.xlu0 %2901
    %v2904 = vmul.f32 %v2894, %v2902
    %v2905 = vmul.f32 %v2898, %v2902
    %v2906 = vlaneseq
    %v2907 = vshrl.u32 %v2906, 7
    %v2908 = vsub.s32 1, %v2907
    %v2909 = vrot.slane %v1570, %v2908
    %v2910 = vlaneseq
    %v2911 = vshrl.u32 %v2910, 7
    %v2912 = vsub.s32 1, %v2911
    %v2913 = vrot.slane %v1571, %v2912
    %2914 = vset.pattern.permute.xlu0 1
    %2915 = vperm.xlu0 %2914, %v2890
    %v2916 = vpop.permute.xlu0 %2915
    %v2918 = vmul.f32 %v2909, %v2916
    %v2919 = vmul.f32 %v2913, %v2916
    %v2920 = vlaneseq
    %v2921 = vshrl.u32 %v2920, 7
    %v2922 = vsub.s32 2, %v2921
    %v2923 = vrot.slane %v1570, %v2922
    %v2924 = vlaneseq
    %v2925 = vshrl.u32 %v2924, 7
    %v2926 = vsub.s32 2, %v2925
    %v2927 = vrot.slane %v1571, %v2926
    %2928 = vset.pattern.permute.xlu0 2
    %2929 = vperm.xlu0 %2928, %v2890
    %v2930 = vpop.permute.xlu0 %2929
    %v2932 = vmul.f32 %v2923, %v2930
    %v2933 = vmul.f32 %v2927, %v2930
    %v2934 = vadd.f32 %v2904, %v2932
    %v2935 = vadd.f32 %v2905, %v2933
    %v2936 = vlaneseq
    %v2937 = vshrl.u32 %v2936, 7
    %v2938 = vsub.s32 3, %v2937
    %v2939 = vrot.slane %v1570, %v2938
    %v2940 = vlaneseq
    %v2941 = vshrl.u32 %v2940, 7
    %v2942 = vsub.s32 3, %v2941
    %v2943 = vrot.slane %v1571, %v2942
    %2944 = vset.pattern.permute.xlu0 3
    %2945 = vperm.xlu0 %2944, %v2890
    %v2946 = vpop.permute.xlu0 %2945
    %v2948 = vmul.f32 %v2939, %v2946
    %v2949 = vmul.f32 %v2943, %v2946
    %v2950 = vadd.f32 %v2918, %v2948
    %v2951 = vadd.f32 %v2919, %v2949
    %v2952 = vlaneseq
    %v2953 = vshrl.u32 %v2952, 7
    %v2954 = vsub.s32 4, %v2953
    %v2955 = vrot.slane %v1570, %v2954
    %v2956 = vlaneseq
    %v2957 = vshrl.u32 %v2956, 7
    %v2958 = vsub.s32 4, %v2957
    %v2959 = vrot.slane %v1571, %v2958
    %2960 = vset.pattern.permute.xlu0 4
    %2961 = vperm.xlu0 %2960, %v2890
    %v2962 = vpop.permute.xlu0 %2961
    %v2964 = vmul.f32 %v2955, %v2962
    %v2965 = vmul.f32 %v2959, %v2962
    %v2966 = vadd.f32 %v2934, %v2964
    %v2967 = vadd.f32 %v2935, %v2965
    %v2968 = vlaneseq
    %v2969 = vshrl.u32 %v2968, 7
    %v2970 = vsub.s32 5, %v2969
    %v2971 = vrot.slane %v1570, %v2970
    %v2972 = vlaneseq
    %v2973 = vshrl.u32 %v2972, 7
    %v2974 = vsub.s32 5, %v2973
    %v2975 = vrot.slane %v1571, %v2974
    %2976 = vset.pattern.permute.xlu0 5
    %2977 = vperm.xlu0 %2976, %v2890
    %v2978 = vpop.permute.xlu0 %2977
    %v2980 = vmul.f32 %v2971, %v2978
    %v2981 = vmul.f32 %v2975, %v2978
    %v2982 = vadd.f32 %v2950, %v2980
    %v2983 = vadd.f32 %v2951, %v2981
    %v2984 = vlaneseq
    %v2985 = vshrl.u32 %v2984, 7
    %v2986 = vsub.s32 6, %v2985
    %v2987 = vrot.slane %v1570, %v2986
    %v2988 = vlaneseq
    %v2989 = vshrl.u32 %v2988, 7
    %v2990 = vsub.s32 6, %v2989
    %v2991 = vrot.slane %v1571, %v2990
    %2992 = vset.pattern.permute.xlu0 6
    %2993 = vperm.xlu0 %2992, %v2890
    %v2994 = vpop.permute.xlu0 %2993
    %v2996 = vmul.f32 %v2987, %v2994
    %v2997 = vmul.f32 %v2991, %v2994
    %v2998 = vadd.f32 %v2966, %v2996
    %v2999 = vadd.f32 %v2967, %v2997
    %v3000 = vlaneseq
    %v3001 = vshrl.u32 %v3000, 7
    %v3002 = vsub.s32 7, %v3001
    %v3003 = vrot.slane %v1570, %v3002
    %v3004 = vlaneseq
    %v3005 = vshrl.u32 %v3004, 7
    %v3006 = vsub.s32 7, %v3005
    %v3007 = vrot.slane %v1571, %v3006
    %3008 = vset.pattern.permute.xlu0 7
    %3009 = vperm.xlu0 %3008, %v2890
    %v3010 = vpop.permute.xlu0 %3009
    %v3012 = vmul.f32 %v3003, %v3010
    %v3013 = vmul.f32 %v3007, %v3010
    %v3014 = vadd.f32 %v2982, %v3012
    %v3015 = vadd.f32 %v2983, %v3013
    %v3016 = vadd.f32 %v2998, %v3014
    %v3017 = vadd.f32 %v2999, %v3015
    %v3018 = vmul.f32 %v3016, %v3016
    %v3019 = vmul.f32 %v3017, %v3017
    %v3020 = vrot.slane %v3016, 4
    %v3021 = vrot.slane %v3017, 4
    %v3022 = vadd.f32 %v3016, %v3020
    %v3023 = vadd.f32 %v3017, %v3021
    %v3024 = vrot.slane %v3018, 4
    %v3025 = vrot.slane %v3019, 4
    %v3026 = vadd.f32 %v3018, %v3024
    %v3027 = vadd.f32 %v3019, %v3025
    %v3028 = vadd.f32 %v3022, %v3023
    %3029 = vadd.xlane.f32.xlu0 %v3028
    %v3030 = vpop.xlane.xlu0 %3029
    %v3031 = vmul.f32 %v3030, 0.001953125
    %v3032 = vadd.f32 %v3026, %v3027
    %3033 = vadd.xlane.f32.xlu0 %v3032
    %v3034 = vpop.xlane.xlu0 %3033
    %v3035 = vmul.f32 %v3034, 0.001953125
    %v3036 = vmul.f32 %v3031, %v3031
    %v3037 = vsub.f32 %v3035, %v3036
    %v3038 = vmax.f32 %v3037, 0.0
    %v3039 = vsub.f32 %v3016, %v3031
    %v3040 = vsub.f32 %v3017, %v3031
    %v3041 = vadd.f32 %v3038, 1e-05
    %v3042 = vrsqrt.pop %v3041
    %v3043 = vmul.f32 %v3039, %v3042
    %v3044 = vmul.f32 %v3040, %v3042
    %v3045 = vstv %s2889
    %v3046 = vmul.f32 %v3045, %v3043
    %v3047 = vmul.f32 %v3045, %v3044
    %v3048 = vadd.f32 %v2887, %v3046
    %v3049 = vadd.f32 %v2888, %v3047
    %s3050 = sld [smem:[#allocation2 + $0x7]]
    %v3051 = vld [vmem:[#allocation18] sm:$0xff]
    %v3052 = vlaneseq
    %v3053 = vshrl.u32 %v3052, 7
    %v3054 = vsub.s32 0, %v3053
    %v3055 = vrot.slane %v1723, %v3054
    %v3056 = vlaneseq
    %v3057 = vshrl.u32 %v3056, 7
    %v3058 = vsub.s32 0, %v3057
    %v3059 = vrot.slane %v1724, %v3058
    %3061 = vset.pattern.permute.xlu0 0
    %3062 = vperm.xlu0 %3061, %v3051
    %v3063 = vpop.permute.xlu0 %3062
    %v3065 = vmul.f32 %v3055, %v3063
    %v3066 = vmul.f32 %v3059, %v3063
    %v3067 = vlaneseq
    %v3068 = vshrl.u32 %v3067, 7
    %v3069 = vsub.s32 1, %v3068
    %v3070 = vrot.slane %v1723, %v3069
    %v3071 = vlaneseq
    %v3072 = vshrl.u32 %v3071, 7
    %v3073 = vsub.s32 1, %v3072
    %v3074 = vrot.slane %v1724, %v3073
    %3075 = vset.pattern.permute.xlu0 1
    %3076 = vperm.xlu0 %3075, %v3051
    %v3077 = vpop.permute.xlu0 %3076
    %v3079 = vmul.f32 %v3070, %v3077
    %v3080 = vmul.f32 %v3074, %v3077
    %v3081 = vlaneseq
    %v3082 = vshrl.u32 %v3081, 7
    %v3083 = vsub.s32 2, %v3082
    %v3084 = vrot.slane %v1723, %v3083
    %v3085 = vlaneseq
    %v3086 = vshrl.u32 %v3085, 7
    %v3087 = vsub.s32 2, %v3086
    %v3088 = vrot.slane %v1724, %v3087
    %3089 = vset.pattern.permute.xlu0 2
    %3090 = vperm.xlu0 %3089, %v3051
    %v3091 = vpop.permute.xlu0 %3090
    %v3093 = vmul.f32 %v3084, %v3091
    %v3094 = vmul.f32 %v3088, %v3091
    %v3095 = vadd.f32 %v3065, %v3093
    %v3096 = vadd.f32 %v3066, %v3094
    %v3097 = vlaneseq
    %v3098 = vshrl.u32 %v3097, 7
    %v3099 = vsub.s32 3, %v3098
    %v3100 = vrot.slane %v1723, %v3099
    %v3101 = vlaneseq
    %v3102 = vshrl.u32 %v3101, 7
    %v3103 = vsub.s32 3, %v3102
    %v3104 = vrot.slane %v1724, %v3103
    %3105 = vset.pattern.permute.xlu0 3
    %3106 = vperm.xlu0 %3105, %v3051
    %v3107 = vpop.permute.xlu0 %3106
    %v3109 = vmul.f32 %v3100, %v3107
    %v3110 = vmul.f32 %v3104, %v3107
    %v3111 = vadd.f32 %v3079, %v3109
    %v3112 = vadd.f32 %v3080, %v3110
    %v3113 = vlaneseq
    %v3114 = vshrl.u32 %v3113, 7
    %v3115 = vsub.s32 4, %v3114
    %v3116 = vrot.slane %v1723, %v3115
    %v3117 = vlaneseq
    %v3118 = vshrl.u32 %v3117, 7
    %v3119 = vsub.s32 4, %v3118
    %v3120 = vrot.slane %v1724, %v3119
    %3121 = vset.pattern.permute.xlu0 4
    %3122 = vperm.xlu0 %3121, %v3051
    %v3123 = vpop.permute.xlu0 %3122
    %v3125 = vmul.f32 %v3116, %v3123
    %v3126 = vmul.f32 %v3120, %v3123
    %v3127 = vadd.f32 %v3095, %v3125
    %v3128 = vadd.f32 %v3096, %v3126
    %v3129 = vlaneseq
    %v3130 = vshrl.u32 %v3129, 7
    %v3131 = vsub.s32 5, %v3130
    %v3132 = vrot.slane %v1723, %v3131
    %v3133 = vlaneseq
    %v3134 = vshrl.u32 %v3133, 7
    %v3135 = vsub.s32 5, %v3134
    %v3136 = vrot.slane %v1724, %v3135
    %3137 = vset.pattern.permute.xlu0 5
    %3138 = vperm.xlu0 %3137, %v3051
    %v3139 = vpop.permute.xlu0 %3138
    %v3141 = vmul.f32 %v3132, %v3139
    %v3142 = vmul.f32 %v3136, %v3139
    %v3143 = vadd.f32 %v3111, %v3141
    %v3144 = vadd.f32 %v3112, %v3142
    %v3145 = vlaneseq
    %v3146 = vshrl.u32 %v3145, 7
    %v3147 = vsub.s32 6, %v3146
    %v3148 = vrot.slane %v1723, %v3147
    %v3149 = vlaneseq
    %v3150 = vshrl.u32 %v3149, 7
    %v3151 = vsub.s32 6, %v3150
    %v3152 = vrot.slane %v1724, %v3151
    %3153 = vset.pattern.permute.xlu0 6
    %3154 = vperm.xlu0 %3153, %v3051
    %v3155 = vpop.permute.xlu0 %3154
    %v3157 = vmul.f32 %v3148, %v3155
    %v3158 = vmul.f32 %v3152, %v3155
    %v3159 = vadd.f32 %v3127, %v3157
    %v3160 = vadd.f32 %v3128, %v3158
    %v3161 = vlaneseq
    %v3162 = vshrl.u32 %v3161, 7
    %v3163 = vsub.s32 7, %v3162
    %v3164 = vrot.slane %v1723, %v3163
    %v3165 = vlaneseq
    %v3166 = vshrl.u32 %v3165, 7
    %v3167 = vsub.s32 7, %v3166
    %v3168 = vrot.slane %v1724, %v3167
    %3169 = vset.pattern.permute.xlu0 7
    %3170 = vperm.xlu0 %3169, %v3051
    %v3171 = vpop.permute.xlu0 %3170
    %v3173 = vmul.f32 %v3164, %v3171
    %v3174 = vmul.f32 %v3168, %v3171
    %v3175 = vadd.f32 %v3143, %v3173
    %v3176 = vadd.f32 %v3144, %v3174
    %v3177 = vadd.f32 %v3159, %v3175
    %v3178 = vadd.f32 %v3160, %v3176
    %v3179 = vmul.f32 %v3177, %v3177
    %v3180 = vmul.f32 %v3178, %v3178
    %v3181 = vrot.slane %v3177, 4
    %v3182 = vrot.slane %v3178, 4
    %v3183 = vadd.f32 %v3177, %v3181
    %v3184 = vadd.f32 %v3178, %v3182
    %v3185 = vrot.slane %v3179, 4
    %v3186 = vrot.slane %v3180, 4
    %v3187 = vadd.f32 %v3179, %v3185
    %v3188 = vadd.f32 %v3180, %v3186
    %v3189 = vadd.f32 %v3183, %v3184
    %3190 = vadd.xlane.f32.xlu0 %v3189
    %v3191 = vpop.xlane.xlu0 %3190
    %v3192 = vmul.f32 %v3191, 0.001953125
    %v3193 = vadd.f32 %v3187, %v3188
    %3194 = vadd.xlane.f32.xlu0 %v3193
    %v3195 = vpop.xlane.xlu0 %3194
    %v3196 = vmul.f32 %v3195, 0.001953125
    %v3197 = vmul.f32 %v3192, %v3192
    %v3198 = vsub.f32 %v3196, %v3197
    %v3199 = vmax.f32 %v3198, 0.0
    %v3200 = vsub.f32 %v3177, %v3192
    %v3201 = vsub.f32 %v3178, %v3192
    %v3202 = vadd.f32 %v3199, 1e-05
    %v3203 = vrsqrt.pop %v3202
    %v3204 = vmul.f32 %v3200, %v3203
    %v3205 = vmul.f32 %v3201, %v3203
    %v3206 = vstv %s3050
    %v3207 = vmul.f32 %v3206, %v3204
    %v3208 = vmul.f32 %v3206, %v3205
    %v3209 = vadd.f32 %v3048, %v3207
    %v3210 = vadd.f32 %v3049, %v3208
    %3211 = vst [vmem:[#allocation19] sm:$0xff] %v3209
    %3212 = vst [vmem:[#allocation19 + $0x8] sm:$0xff] %v3210
    // Predicated region
    $region110: #{tpu_custom_call.1} parent=1 // pred_check
      _
    $region111: #{tpu_custom_call.1} parent=1 // pred_check_branch
      %3214 = sbr.rel (0) target = $region113
    $region112: #{tpu_custom_call.1} parent=1 // pred_region
      %s3216 = ssub.s32 256, 256
      %3217 = vsyncadd [#allocation4], %s3216
      %s3219 = sshll.u32 [#allocation19], 4
      %s3220 = int_to_ptr.vmem [resolvable:$true] %s3219
      %3222 = dma.vmem_to_hbm [thread:$0]  %s3220, 256, %s17, [#allocation4]
    $region113: #{tpu_custom_call.1} parent=1 // pred_fallthru
      _
    // Predicated region
    $region114: #{tpu_custom_call.1} parent=1 // pred_check
      _
    $region115: #{tpu_custom_call.1} parent=1 // pred_check_branch
      %3224 = sbr.rel (0) target = $region117
    $region116: #{tpu_custom_call.1} parent=1 // pred_region
      %3225 = dma.done [#allocation4], 256
    $region117: #{tpu_custom_call.1} parent=1 // pred_fallthru
      _
    %3226 = vsyncpa [#allocation3], 1
    %3227 = vsyncpa [#allocation8], 1
    %3228 = vsyncpa [#allocation11], 1
    %3229 = vsyncpa [#allocation14], 1
    %3230 = vsyncpa [#allocation17], 1
    %3231 = vsyncpa [#allocation4], 1
    %3232 = vsyncpa [#allocation5], 1

</llo_original>
